<compile_context>
chip_gen: v6e
topology: v6e:2x2x1
jax: 0.10.0
libtpu: 0.0.40
codegen_flags: <defaults>
</compile_context>

<pallas_src>
import numpy as np

import jax
import jax.numpy as jnp
from jax.experimental import pallas as pl
from jax.experimental.pallas import tpu as pltpu


# ----------------------------- in-kernel helpers ----------------------------

def _shift_rows(x, s):
    """result[r] = x[(r + s) % R] for a static python int s (XLU sublane roll)."""
    if s == 0:
        return x
    R = x.shape[0]
    return pltpu.roll(x, shift=(-s) % R, axis=0)


def _conv3x3_bn_relu(x, w_ref, scale_ref, shift_ref, B, H, W, cin, cout):
    """3x3 stride-1 same-pad conv + folded BN affine + ReLU on merged rows.

    x:      (B*H*W, cin) f32, rows = b*H*W + h*W + w, lanes = input channels.
    w_ref:  (9*cin, cout) bf16 weight ref, rows ordered (kh, kw, cin).
    Single MXU matmul: taps concatenated along lanes -> (R, 9*cin) @ (9*cin, cout).
    """
    assert W & (W - 1) == 0 and (H * W) & (H * W - 1) == 0   # powers of two
    HW = H * W
    R = B * HW
    r_idx = jax.lax.broadcasted_iota(jnp.int32, (R, cin), 0)
    p_idx = r_idx & (HW - 1)                 # per-sample pixel index
    w_idx = p_idx & (W - 1)                  # per-sample column index
    h_ok = {-1: p_idx >= W, 0: None, 1: p_idx < (H - 1) * W}
    w_ok = {-1: w_idx >= 1, 0: None, 1: w_idx < (W - 1)}

    taps = []
    for di in (-1, 0, 1):
        for dj in (-1, 0, 1):
            xs = _shift_rows(x, di * W + dj)
            mask = None
            for cond in (h_ok[di], w_ok[dj]):
                if cond is not None:
                    mask = cond if mask is None else (mask & cond)
            if mask is not None:
                # zero padding at image borders; also kills every row that the
                # circular shift pulled across a sample boundary / array wrap.
                xs = jnp.where(mask, xs, 0.0)
            taps.append(xs.astype(jnp.bfloat16))
    tap_mat = jnp.concatenate(taps, axis=1)                    # (R, 9*cin)
    y = jnp.dot(tap_mat, w_ref[...], preferred_element_type=jnp.float32)
    return jnp.maximum(y * scale_ref[...] + shift_ref[...], 0.0)


def _maxpool2x2(y, sel_ref, B, H, W, cout):
    """MaxPool2d(2,2): shift-max of 4 neighbours + batch-shared 0/1 row select."""
    HW = H * W
    m = jnp.maximum(y, _shift_rows(y, 1))
    m = jnp.maximum(m, _shift_rows(m, W))
    m3 = m.reshape(B, HW, cout).astype(jnp.bfloat16)           # trivial split
    sel = jnp.broadcast_to(sel_ref[...], (B,) + sel_ref.shape)  # (B, HW//4, HW)
    pooled = jnp.einsum('brp,bpc->brc', sel, m3,
                        preferred_element_type=jnp.float32)     # (B, HW//4, C)
    return pooled.reshape(B * (HW // 4), cout)                  # trivial merge


# --------------------------------- kernel -----------------------------------

def fused_cnn_kernel(x_ref,
                     w1_ref, c1s_ref, c1b_ref,
                     w2_ref, c2s_ref, c2b_ref,
                     w3_ref, c3s_ref, c3b_ref,
                     p1_ref, p2_ref, pg_ref,
                     fw1_ref, f1s_ref, f1b_ref,
                     fw2_ref, f2b_ref,
                     o_ref):
    B = x_ref.shape[2]
    xt = x_ref[0]                                              # (256, B) f32
    # (B*256, 1) conv-1 view: B static lane slices + sublane concat.
    x_col = jnp.concatenate([xt[:, b:b + 1] for b in range(B)], axis=0)

    # Block 1: conv 1->32 on 16x16 + BN + ReLU, maxpool -> (B*64, 32)
    y = _conv3x3_bn_relu(x_col, w1_ref, c1s_ref, c1b_ref, B, 16, 16, 1, 32)
    y = _maxpool2x2(y, p1_ref, B, 16, 16, 32)
    # Block 2: conv 32->64 on 8x8 + BN + ReLU, maxpool -> (B*16, 64)
    y = _conv3x3_bn_relu(y, w2_ref, c2s_ref, c2b_ref, B, 8, 8, 32, 64)
    y = _maxpool2x2(y, p2_ref, B, 8, 8, 64)
    # Block 3: conv 64->128 on 4x4 + BN + ReLU -> (B*16, 128)
    y = _conv3x3_bn_relu(y, w3_ref, c3s_ref, c3b_ref, B, 4, 4, 64, 128)

    # Final MaxPool2x2 + AdaptiveAvgPool2d(1): one (B, 16B) averaging matmul.
    m = jnp.maximum(y, _shift_rows(y, 1))
    m = jnp.maximum(m, _shift_rows(m, 4))
    g = jnp.dot(pg_ref[...], m.astype(jnp.bfloat16),
                preferred_element_type=jnp.float32)            # (B, 128)

    # Head (Dropout = identity in inference): Linear(128,64)+BN1d+ReLU,
    # Linear(64,1)+Sigmoid.
    h = jnp.dot(g.astype(jnp.bfloat16), fw1_ref[...],
                preferred_element_type=jnp.float32)            # (B, 64)
    h = jnp.maximum(h * f1s_ref[...] + f1b_ref[...], 0.0)
    logit = jnp.sum(h * fw2_ref[...], axis=1, keepdims=True) + f2b_ref[...]
    o_ref[0] = 1.0 / (1.0 + jnp.exp(-logit))                   # (B, 1)


# ------------------------------ params / model ------------------------------

_EPS = 1e-5


def _fold_bn(bias, gamma, beta, mean, var):
    scale = gamma / jnp.sqrt(var + _EPS)
    shift = (bias - mean) * scale + beta
    return scale, shift


def _conv_weight_matrix(w_oihw):
    # PyTorch (Cout, Cin, 3, 3) -> (9*Cin, Cout), rows ordered (kh, kw, cin).
    cout, cin = w_oihw.shape[0], w_oihw.shape[1]
    return jnp.transpose(w_oihw, (2, 3, 1, 0)).reshape(9 * cin, cout)


def _pool_select_matrix(H, W):
    # 0/1 matrix picking rows 2*h2*W + 2*w2 of the shift-maxed map (per sample).
    Ho, Wo = H // 2, W // 2
    S = np.zeros((Ho * Wo, H * W), np.float32)
    for h2 in range(Ho):
        for w2 in range(Wo):
            S[h2 * Wo + w2, 2 * h2 * W + 2 * w2] = 1.0
    return jnp.asarray(S, dtype=jnp.bfloat16)                  # 0/1 exact in bf16


def _final_pool_matrix(B):
    # (B, B*16) matrix: final 2x2 maxpool selection + global average (1/4 each).
    S = np.zeros((B, B * 16), np.float32)
    for b in range(B):
        for h2 in range(2):
            for w2 in range(2):
                S[b, b * 16 + 2 * h2 * 4 + 2 * w2] = 0.25
    return jnp.asarray(S, dtype=jnp.bfloat16)                  # 0.25 exact in bf16


def init_params(key):
    keys = jax.random.split(key, 8)

    def conv_block(k, cin, cout):
        kw_, kb = jax.random.split(k)
        w = jax.random.normal(kw_, (cout, cin, 3, 3), jnp.float32) / np.sqrt(9.0 * cin)
        b = jax.random.normal(kb, (cout,), jnp.float32) * 0.05
        scale, shift = _fold_bn(b, jnp.ones((cout,)), jnp.zeros((cout,)),
                                jnp.zeros((cout,)), jnp.ones((cout,)))
        return (_conv_weight_matrix(w).astype(jnp.bfloat16),
                scale.reshape(1, cout).astype(jnp.float32),
                shift.reshape(1, cout).astype(jnp.float32))

    w1, c1s, c1b = conv_block(keys[0], 1, 32)
    w2, c2s, c2b = conv_block(keys[1], 32, 64)
    w3, c3s, c3b = conv_block(keys[2], 64, 128)

    # fc1: Linear(128, 64) + BN1d(64) (eval-mode running stats)
    fw1 = jax.random.normal(keys[3], (64, 128), jnp.float32) / np.sqrt(128.0)
    fb1 = jax.random.normal(keys[4], (64,), jnp.float32) * 0.05
    f1s, f1b = _fold_bn(fb1, jnp.ones((64,)), jnp.zeros((64,)),
                        jnp.zeros((64,)), jnp.ones((64,)))
    # fc2: Linear(64, 1)
    fw2 = jax.random.normal(keys[5], (1, 64), jnp.float32) / np.sqrt(64.0)
    fb2 = jax.random.normal(keys[6], (1,), jnp.float32) * 0.05

    return dict(
        w1=w1, c1s=c1s, c1b=c1b,
        w2=w2, c2s=c2s, c2b=c2b,
        w3=w3, c3s=c3s, c3b=c3b,
        p1=_pool_select_matrix(16, 16),
        p2=_pool_select_matrix(8, 8),
        fw1=jnp.transpose(fw1).astype(jnp.bfloat16),           # (128, 64)
        f1s=f1s.reshape(1, 64).astype(jnp.float32),
        f1b=f1b.reshape(1, 64).astype(jnp.float32),
        fw2=fw2,                                               # (1, 64) f32
        f2b=fb2.reshape(1, 1),
    )


def forward(params, x_nchw, *, batch_tile=16):
    """x_nchw: (N, 1, 16, 16) float32 -> (N, 1) sigmoid scores."""
    N = x_nchw.shape[0]
    B = batch_tile if N > batch_tile else N                    # samples per grid step
    pad = (-N) % B
    G = (N + pad) // B

    x = x_nchw.reshape(N, 256).astype(jnp.float32)
    if pad:
        x = jnp.concatenate([x, jnp.zeros((pad, 256), jnp.float32)], axis=0)
    # (G, 256, B): pixels on sublanes, batch tile packed on the lane axis;
    # every grid block is a contiguous 256*B*4-byte HBM read.
    xb = x.reshape(G, B, 256).transpose(0, 2, 1)

    ops = [params[k] for k in ("w1", "c1s", "c1b", "w2", "c2s", "c2b",
                               "w3", "c3s", "c3b", "p1", "p2")]
    ops.append(_final_pool_matrix(B))
    ops += [params[k] for k in ("fw1", "f1s", "f1b", "fw2", "f2b")]

    in_specs = [pl.BlockSpec((1, 256, B), lambda i: (i, 0, 0))]
    in_specs += [pl.BlockSpec(a.shape, lambda i: (0, 0)) for a in ops]

    out = pl.pallas_call(
        fused_cnn_kernel,
        grid=(G,),
        out_shape=jax.ShapeDtypeStruct((G, B, 1), jnp.float32),
        in_specs=in_specs,
        out_specs=pl.BlockSpec((1, B, 1), lambda i: (i, 0, 0)),
        compiler_params=pltpu.CompilerParams(
            dimension_semantics=("parallel",),                 # v7x: 2 TCs split batch
            vmem_limit_bytes=48 * 1024 * 1024),
    )(xb, *ops)
    return out.reshape(G * B, 1)[:N]


if __name__ == "__main__":
    key = jax.random.PRNGKey(0)
    pkey, xkey = jax.random.split(key)
    params = init_params(pkey)
    x = jax.random.normal(xkey, (2, 1, 16, 16), jnp.float32)   # NCHW, 1 channel

    out = jax.jit(forward)(params, x)
    out = jax.block_until_ready(out)
    assert out.shape == (2, 1)
    assert bool(jnp.all((out >= 0.0) & (out <= 1.0)))
    print("KERNEL_OK")
</pallas_src>

<mosaic_0001>
module attributes {stable_mosaic.version = 11 : i64} {
  func.func @fused_cnn_kernel(%arg0: i32, %arg1: memref<1x256x2xf32, #tpu.memory_space<vmem>>, %arg2: memref<9x32xbf16, #tpu.memory_space<vmem>>, %arg3: memref<1x32xf32, #tpu.memory_space<vmem>>, %arg4: memref<1x32xf32, #tpu.memory_space<vmem>>, %arg5: memref<288x64xbf16, #tpu.memory_space<vmem>>, %arg6: memref<1x64xf32, #tpu.memory_space<vmem>>, %arg7: memref<1x64xf32, #tpu.memory_space<vmem>>, %arg8: memref<576x128xbf16, #tpu.memory_space<vmem>>, %arg9: memref<1x128xf32, #tpu.memory_space<vmem>>, %arg10: memref<1x128xf32, #tpu.memory_space<vmem>>, %arg11: memref<64x256xbf16, #tpu.memory_space<vmem>>, %arg12: memref<16x64xbf16, #tpu.memory_space<vmem>>, %arg13: memref<2x32xbf16, #tpu.memory_space<vmem>>, %arg14: memref<128x64xbf16, #tpu.memory_space<vmem>>, %arg15: memref<1x64xf32, #tpu.memory_space<vmem>>, %arg16: memref<1x64xf32, #tpu.memory_space<vmem>>, %arg17: memref<1x64xf32, #tpu.memory_space<vmem>>, %arg18: memref<1x1xf32, #tpu.memory_space<vmem>>, %arg19: memref<1x2x1xf32, #tpu.memory_space<vmem>>) attributes {dimension_semantics = [#tpu.dimension_semantics<parallel>], iteration_bounds = array<i64: 1>, scalar_prefetch = 0 : i64, scratch_operands = 0 : i64, tpu.core_type = #tpu.core_type<tc>, window_params = [{transform_indices = @transform_0, window_bounds = array<i64: 1, 256, 2>}, {pipeline_mode = #tpu.pipeline_mode<synchronous>, transform_indices = @transform_1, window_bounds = array<i64: 9, 32>}, {pipeline_mode = #tpu.pipeline_mode<synchronous>, transform_indices = @transform_2, window_bounds = array<i64: 1, 32>}, {pipeline_mode = #tpu.pipeline_mode<synchronous>, transform_indices = @transform_3, window_bounds = array<i64: 1, 32>}, {pipeline_mode = #tpu.pipeline_mode<synchronous>, transform_indices = @transform_4, window_bounds = array<i64: 288, 64>}, {pipeline_mode = #tpu.pipeline_mode<synchronous>, transform_indices = @transform_5, window_bounds = array<i64: 1, 64>}, {pipeline_mode = #tpu.pipeline_mode<synchronous>, transform_indices = @transform_6, window_bounds = array<i64: 1, 64>}, {pipeline_mode = #tpu.pipeline_mode<synchronous>, transform_indices = @transform_7, window_bounds = array<i64: 576, 128>}, {pipeline_mode = #tpu.pipeline_mode<synchronous>, transform_indices = @transform_8, window_bounds = array<i64: 1, 128>}, {pipeline_mode = #tpu.pipeline_mode<synchronous>, transform_indices = @transform_9, window_bounds = array<i64: 1, 128>}, {pipeline_mode = #tpu.pipeline_mode<synchronous>, transform_indices = @transform_10, window_bounds = array<i64: 64, 256>}, {pipeline_mode = #tpu.pipeline_mode<synchronous>, transform_indices = @transform_11, window_bounds = array<i64: 16, 64>}, {pipeline_mode = #tpu.pipeline_mode<synchronous>, transform_indices = @transform_12, window_bounds = array<i64: 2, 32>}, {pipeline_mode = #tpu.pipeline_mode<synchronous>, transform_indices = @transform_13, window_bounds = array<i64: 128, 64>}, {pipeline_mode = #tpu.pipeline_mode<synchronous>, transform_indices = @transform_14, window_bounds = array<i64: 1, 64>}, {pipeline_mode = #tpu.pipeline_mode<synchronous>, transform_indices = @transform_15, window_bounds = array<i64: 1, 64>}, {pipeline_mode = #tpu.pipeline_mode<synchronous>, transform_indices = @transform_16, window_bounds = array<i64: 1, 64>}, {pipeline_mode = #tpu.pipeline_mode<synchronous>, transform_indices = @transform_17, window_bounds = array<i64: 1, 1>}, {transform_indices = @transform_18, window_bounds = array<i64: 1, 2, 1>}]} {
    %c0 = arith.constant 0 : index
    %c0_0 = arith.constant 0 : index
    %c0_1 = arith.constant 0 : index
    %0 = vector.load %arg1[%c0, %c0_0, %c0_1] : memref<1x256x2xf32, #tpu.memory_space<vmem>>, vector<1x256x2xf32>
    %1 = vector.shape_cast %0 : vector<1x256x2xf32> to vector<256x2xf32>
    %2 = vector.extract_strided_slice %1 {offsets = [0, 0], sizes = [256, 1], strides = [1, 1]} : vector<256x2xf32> to vector<256x1xf32>
    %3 = vector.extract_strided_slice %1 {offsets = [0, 1], sizes = [256, 1], strides = [1, 1]} : vector<256x2xf32> to vector<256x1xf32>
    %4 = tpu.concatenate %2, %3 in 0 : vector<256x1xf32>, vector<256x1xf32> -> vector<512x1xf32>
    %5 = tpu.iota {dimensions = array<i32: 0>} : vector<512x1xi32>
    %c255_i32 = arith.constant 255 : i32
    %6 = vector.broadcast %c255_i32 : i32 to vector<512x1xi32>
    %7 = arith.andi %5, %6 : vector<512x1xi32>
    %c15_i32 = arith.constant 15 : i32
    %8 = vector.broadcast %c15_i32 : i32 to vector<512x1xi32>
    %9 = arith.andi %7, %8 : vector<512x1xi32>
    %c16_i32 = arith.constant 16 : i32
    %10 = vector.broadcast %c16_i32 : i32 to vector<512x1xi32>
    %11 = arith.cmpi sge, %7, %10 : vector<512x1xi32>
    %c240_i32 = arith.constant 240 : i32
    %12 = vector.broadcast %c240_i32 : i32 to vector<512x1xi32>
    %13 = arith.cmpi slt, %7, %12 : vector<512x1xi32>
    %c1_i32 = arith.constant 1 : i32
    %14 = vector.broadcast %c1_i32 : i32 to vector<512x1xi32>
    %15 = arith.cmpi sge, %9, %14 : vector<512x1xi32>
    %c15_i32_2 = arith.constant 15 : i32
    %16 = vector.broadcast %c15_i32_2 : i32 to vector<512x1xi32>
    %17 = arith.cmpi slt, %9, %16 : vector<512x1xi32>
    %c17_i32 = arith.constant 17 : i32
    %18 = tpu.dynamic_rotate %4 by %c17_i32 dim 0 : vector<512x1xf32>, i32 -> vector<512x1xf32>
    %19 = arith.andi %11, %15 : vector<512x1xi1>
    %cst = arith.constant 0.000000e+00 : f32
    %20 = vector.broadcast %cst : f32 to vector<512x1xf32>
    %21 = arith.select %19, %18, %20 : vector<512x1xi1>, vector<512x1xf32>
    %22 = arith.truncf %21 : vector<512x1xf32> to vector<512x1xbf16>
    %c16_i32_3 = arith.constant 16 : i32
    %23 = tpu.dynamic_rotate %4 by %c16_i32_3 dim 0 : vector<512x1xf32>, i32 -> vector<512x1xf32>
    %cst_4 = arith.constant 0.000000e+00 : f32
    %24 = vector.broadcast %cst_4 : f32 to vector<512x1xf32>
    %25 = arith.select %11, %23, %24 : vector<512x1xi1>, vector<512x1xf32>
    %26 = arith.truncf %25 : vector<512x1xf32> to vector<512x1xbf16>
    %c15_i32_5 = arith.constant 15 : i32
    %27 = tpu.dynamic_rotate %4 by %c15_i32_5 dim 0 : vector<512x1xf32>, i32 -> vector<512x1xf32>
    %28 = arith.andi %11, %17 : vector<512x1xi1>
    %cst_6 = arith.constant 0.000000e+00 : f32
    %29 = vector.broadcast %cst_6 : f32 to vector<512x1xf32>
    %30 = arith.select %28, %27, %29 : vector<512x1xi1>, vector<512x1xf32>
    %31 = arith.truncf %30 : vector<512x1xf32> to vector<512x1xbf16>
    %c1_i32_7 = arith.constant 1 : i32
    %32 = tpu.dynamic_rotate %4 by %c1_i32_7 dim 0 : vector<512x1xf32>, i32 -> vector<512x1xf32>
    %cst_8 = arith.constant 0.000000e+00 : f32
    %33 = vector.broadcast %cst_8 : f32 to vector<512x1xf32>
    %34 = arith.select %15, %32, %33 : vector<512x1xi1>, vector<512x1xf32>
    %35 = arith.truncf %34 : vector<512x1xf32> to vector<512x1xbf16>
    %36 = arith.truncf %4 : vector<512x1xf32> to vector<512x1xbf16>
    %c511_i32 = arith.constant 511 : i32
    %37 = tpu.dynamic_rotate %4 by %c511_i32 dim 0 : vector<512x1xf32>, i32 -> vector<512x1xf32>
    %cst_9 = arith.constant 0.000000e+00 : f32
    %38 = vector.broadcast %cst_9 : f32 to vector<512x1xf32>
    %39 = arith.select %17, %37, %38 : vector<512x1xi1>, vector<512x1xf32>
    %40 = arith.truncf %39 : vector<512x1xf32> to vector<512x1xbf16>
    %c497_i32 = arith.constant 497 : i32
    %41 = tpu.dynamic_rotate %4 by %c497_i32 dim 0 : vector<512x1xf32>, i32 -> vector<512x1xf32>
    %42 = arith.andi %13, %15 : vector<512x1xi1>
    %cst_10 = arith.constant 0.000000e+00 : f32
    %43 = vector.broadcast %cst_10 : f32 to vector<512x1xf32>
    %44 = arith.select %42, %41, %43 : vector<512x1xi1>, vector<512x1xf32>
    %45 = arith.truncf %44 : vector<512x1xf32> to vector<512x1xbf16>
    %c496_i32 = arith.constant 496 : i32
    %46 = tpu.dynamic_rotate %4 by %c496_i32 dim 0 : vector<512x1xf32>, i32 -> vector<512x1xf32>
    %cst_11 = arith.constant 0.000000e+00 : f32
    %47 = vector.broadcast %cst_11 : f32 to vector<512x1xf32>
    %48 = arith.select %13, %46, %47 : vector<512x1xi1>, vector<512x1xf32>
    %49 = arith.truncf %48 : vector<512x1xf32> to vector<512x1xbf16>
    %c495_i32 = arith.constant 495 : i32
    %50 = tpu.dynamic_rotate %4 by %c495_i32 dim 0 : vector<512x1xf32>, i32 -> vector<512x1xf32>
    %51 = arith.andi %13, %17 : vector<512x1xi1>
    %cst_12 = arith.constant 0.000000e+00 : f32
    %52 = vector.broadcast %cst_12 : f32 to vector<512x1xf32>
    %53 = arith.select %51, %50, %52 : vector<512x1xi1>, vector<512x1xf32>
    %54 = arith.truncf %53 : vector<512x1xf32> to vector<512x1xbf16>
    %55 = tpu.concatenate %22, %26, %31, %35, %36, %40, %45, %49, %54 in 1 : vector<512x1xbf16>, vector<512x1xbf16>, vector<512x1xbf16>, vector<512x1xbf16>, vector<512x1xbf16>, vector<512x1xbf16>, vector<512x1xbf16>, vector<512x1xbf16>, vector<512x1xbf16> -> vector<512x9xbf16>
    %c0_13 = arith.constant 0 : index
    %c0_14 = arith.constant 0 : index
    %56 = vector.load %arg2[%c0_13, %c0_14] : memref<9x32xbf16, #tpu.memory_space<vmem>>, vector<9x32xbf16>
    %cst_15 = arith.constant dense<0.000000e+00> : vector<512x32xf32>
    %57 = tpu.matmul %55, %56, %cst_15 {dimension_numbers = #tpu.dot_dimension_numbers<[1], [0], [0], [1], [0, 0, 1, 1], [], []>} : vector<512x9xbf16>, vector<9x32xbf16>, vector<512x32xf32> -> vector<512x32xf32>
    %c0_16 = arith.constant 0 : index
    %c0_17 = arith.constant 0 : index
    %58 = vector.load %arg3[%c0_16, %c0_17] : memref<1x32xf32, #tpu.memory_space<vmem>>, vector<1x32xf32>
    %59 = vector.broadcast %58 : vector<1x32xf32> to vector<512x32xf32>
    %60 = arith.mulf %57, %59 : vector<512x32xf32>
    %c0_18 = arith.constant 0 : index
    %c0_19 = arith.constant 0 : index
    %61 = vector.load %arg4[%c0_18, %c0_19] : memref<1x32xf32, #tpu.memory_space<vmem>>, vector<1x32xf32>
    %62 = vector.broadcast %61 : vector<1x32xf32> to vector<512x32xf32>
    %63 = arith.addf %60, %62 : vector<512x32xf32>
    %cst_20 = arith.constant 0.000000e+00 : f32
    %64 = vector.broadcast %cst_20 : f32 to vector<512x32xf32>
    %65 = arith.maximumf %63, %64 : vector<512x32xf32>
    %c511_i32_21 = arith.constant 511 : i32
    %66 = tpu.dynamic_rotate %65 by %c511_i32_21 dim 0 : vector<512x32xf32>, i32 -> vector<512x32xf32>
    %67 = arith.maximumf %65, %66 : vector<512x32xf32>
    %c496_i32_22 = arith.constant 496 : i32
    %68 = tpu.dynamic_rotate %67 by %c496_i32_22 dim 0 : vector<512x32xf32>, i32 -> vector<512x32xf32>
    %69 = arith.maximumf %67, %68 : vector<512x32xf32>
    %70 = vector.shape_cast %69 : vector<512x32xf32> to vector<2x256x32xf32>
    %71 = arith.truncf %70 : vector<2x256x32xf32> to vector<2x256x32xbf16>
    %c0_23 = arith.constant 0 : index
    %c0_24 = arith.constant 0 : index
    %72 = vector.load %arg11[%c0_23, %c0_24] : memref<64x256xbf16, #tpu.memory_space<vmem>>, vector<64x256xbf16>
    %73 = vector.shape_cast %72 : vector<64x256xbf16> to vector<1x64x256xbf16>
    %74 = vector.broadcast %73 : vector<1x64x256xbf16> to vector<2x64x256xbf16>
    "tpu.trace_start"() <{level = 10 : i32, message = "brp,bpc->brc"}> : () -> ()
    %cst_25 = arith.constant dense<0.000000e+00> : vector<2x64x32xf32>
    %75 = tpu.matmul %74, %71, %cst_25 {dimension_numbers = #tpu.dot_dimension_numbers<[2], [1], [1], [2], [0, 0, 0, 1, 1, 2], [0], [0]>} : vector<2x64x256xbf16>, vector<2x256x32xbf16>, vector<2x64x32xf32> -> vector<2x64x32xf32>
    "tpu.trace_stop"() : () -> ()
    %76 = vector.shape_cast %75 : vector<2x64x32xf32> to vector<128x32xf32>
    %77 = tpu.iota {dimensions = array<i32: 0>} : vector<128x32xi32>
    %c63_i32 = arith.constant 63 : i32
    %78 = vector.broadcast %c63_i32 : i32 to vector<128x32xi32>
    %79 = arith.andi %77, %78 : vector<128x32xi32>
    %c7_i32 = arith.constant 7 : i32
    %80 = vector.broadcast %c7_i32 : i32 to vector<128x32xi32>
    %81 = arith.andi %79, %80 : vector<128x32xi32>
    %c8_i32 = arith.constant 8 : i32
    %82 = vector.broadcast %c8_i32 : i32 to vector<128x32xi32>
    %83 = arith.cmpi sge, %79, %82 : vector<128x32xi32>
    %c56_i32 = arith.constant 56 : i32
    %84 = vector.broadcast %c56_i32 : i32 to vector<128x32xi32>
    %85 = arith.cmpi slt, %79, %84 : vector<128x32xi32>
    %c1_i32_26 = arith.constant 1 : i32
    %86 = vector.broadcast %c1_i32_26 : i32 to vector<128x32xi32>
    %87 = arith.cmpi sge, %81, %86 : vector<128x32xi32>
    %c7_i32_27 = arith.constant 7 : i32
    %88 = vector.broadcast %c7_i32_27 : i32 to vector<128x32xi32>
    %89 = arith.cmpi slt, %81, %88 : vector<128x32xi32>
    %c9_i32 = arith.constant 9 : i32
    %90 = tpu.dynamic_rotate %76 by %c9_i32 dim 0 : vector<128x32xf32>, i32 -> vector<128x32xf32>
    %91 = arith.andi %83, %87 : vector<128x32xi1>
    %cst_28 = arith.constant 0.000000e+00 : f32
    %92 = vector.broadcast %cst_28 : f32 to vector<128x32xf32>
    %93 = arith.select %91, %90, %92 : vector<128x32xi1>, vector<128x32xf32>
    %94 = arith.truncf %93 : vector<128x32xf32> to vector<128x32xbf16>
    %c8_i32_29 = arith.constant 8 : i32
    %95 = tpu.dynamic_rotate %76 by %c8_i32_29 dim 0 : vector<128x32xf32>, i32 -> vector<128x32xf32>
    %cst_30 = arith.constant 0.000000e+00 : f32
    %96 = vector.broadcast %cst_30 : f32 to vector<128x32xf32>
    %97 = arith.select %83, %95, %96 : vector<128x32xi1>, vector<128x32xf32>
    %98 = arith.truncf %97 : vector<128x32xf32> to vector<128x32xbf16>
    %c7_i32_31 = arith.constant 7 : i32
    %99 = tpu.dynamic_rotate %76 by %c7_i32_31 dim 0 : vector<128x32xf32>, i32 -> vector<128x32xf32>
    %100 = arith.andi %83, %89 : vector<128x32xi1>
    %cst_32 = arith.constant 0.000000e+00 : f32
    %101 = vector.broadcast %cst_32 : f32 to vector<128x32xf32>
    %102 = arith.select %100, %99, %101 : vector<128x32xi1>, vector<128x32xf32>
    %103 = arith.truncf %102 : vector<128x32xf32> to vector<128x32xbf16>
    %c1_i32_33 = arith.constant 1 : i32
    %104 = tpu.dynamic_rotate %76 by %c1_i32_33 dim 0 : vector<128x32xf32>, i32 -> vector<128x32xf32>
    %cst_34 = arith.constant 0.000000e+00 : f32
    %105 = vector.broadcast %cst_34 : f32 to vector<128x32xf32>
    %106 = arith.select %87, %104, %105 : vector<128x32xi1>, vector<128x32xf32>
    %107 = arith.truncf %106 : vector<128x32xf32> to vector<128x32xbf16>
    %108 = arith.truncf %76 : vector<128x32xf32> to vector<128x32xbf16>
    %c127_i32 = arith.constant 127 : i32
    %109 = tpu.dynamic_rotate %76 by %c127_i32 dim 0 : vector<128x32xf32>, i32 -> vector<128x32xf32>
    %cst_35 = arith.constant 0.000000e+00 : f32
    %110 = vector.broadcast %cst_35 : f32 to vector<128x32xf32>
    %111 = arith.select %89, %109, %110 : vector<128x32xi1>, vector<128x32xf32>
    %112 = arith.truncf %111 : vector<128x32xf32> to vector<128x32xbf16>
    %c121_i32 = arith.constant 121 : i32
    %113 = tpu.dynamic_rotate %76 by %c121_i32 dim 0 : vector<128x32xf32>, i32 -> vector<128x32xf32>
    %114 = arith.andi %85, %87 : vector<128x32xi1>
    %cst_36 = arith.constant 0.000000e+00 : f32
    %115 = vector.broadcast %cst_36 : f32 to vector<128x32xf32>
    %116 = arith.select %114, %113, %115 : vector<128x32xi1>, vector<128x32xf32>
    %117 = arith.truncf %116 : vector<128x32xf32> to vector<128x32xbf16>
    %c120_i32 = arith.constant 120 : i32
    %118 = tpu.dynamic_rotate %76 by %c120_i32 dim 0 : vector<128x32xf32>, i32 -> vector<128x32xf32>
    %cst_37 = arith.constant 0.000000e+00 : f32
    %119 = vector.broadcast %cst_37 : f32 to vector<128x32xf32>
    %120 = arith.select %85, %118, %119 : vector<128x32xi1>, vector<128x32xf32>
    %121 = arith.truncf %120 : vector<128x32xf32> to vector<128x32xbf16>
    %c119_i32 = arith.constant 119 : i32
    %122 = tpu.dynamic_rotate %76 by %c119_i32 dim 0 : vector<128x32xf32>, i32 -> vector<128x32xf32>
    %123 = arith.andi %85, %89 : vector<128x32xi1>
    %cst_38 = arith.constant 0.000000e+00 : f32
    %124 = vector.broadcast %cst_38 : f32 to vector<128x32xf32>
    %125 = arith.select %123, %122, %124 : vector<128x32xi1>, vector<128x32xf32>
    %126 = arith.truncf %125 : vector<128x32xf32> to vector<128x32xbf16>
    %127 = tpu.concatenate %94, %98, %103, %107, %108, %112, %117, %121, %126 in 1 : vector<128x32xbf16>, vector<128x32xbf16>, vector<128x32xbf16>, vector<128x32xbf16>, vector<128x32xbf16>, vector<128x32xbf16>, vector<128x32xbf16>, vector<128x32xbf16>, vector<128x32xbf16> -> vector<128x288xbf16>
    %c0_39 = arith.constant 0 : index
    %c0_40 = arith.constant 0 : index
    %128 = vector.load %arg5[%c0_39, %c0_40] : memref<288x64xbf16, #tpu.memory_space<vmem>>, vector<288x64xbf16>
    %cst_41 = arith.constant dense<0.000000e+00> : vector<128x64xf32>
    %129 = tpu.matmul %127, %128, %cst_41 {dimension_numbers = #tpu.dot_dimension_numbers<[1], [0], [0], [1], [0, 0, 1, 1], [], []>} : vector<128x288xbf16>, vector<288x64xbf16>, vector<128x64xf32> -> vector<128x64xf32>
    %c0_42 = arith.constant 0 : index
    %c0_43 = arith.constant 0 : index
    %130 = vector.load %arg6[%c0_42, %c0_43] : memref<1x64xf32, #tpu.memory_space<vmem>>, vector<1x64xf32>
    %131 = vector.broadcast %130 : vector<1x64xf32> to vector<128x64xf32>
    %132 = arith.mulf %129, %131 : vector<128x64xf32>
    %c0_44 = arith.constant 0 : index
    %c0_45 = arith.constant 0 : index
    %133 = vector.load %arg7[%c0_44, %c0_45] : memref<1x64xf32, #tpu.memory_space<vmem>>, vector<1x64xf32>
    %134 = vector.broadcast %133 : vector<1x64xf32> to vector<128x64xf32>
    %135 = arith.addf %132, %134 : vector<128x64xf32>
    %cst_46 = arith.constant 0.000000e+00 : f32
    %136 = vector.broadcast %cst_46 : f32 to vector<128x64xf32>
    %137 = arith.maximumf %135, %136 : vector<128x64xf32>
    %c127_i32_47 = arith.constant 127 : i32
    %138 = tpu.dynamic_rotate %137 by %c127_i32_47 dim 0 : vector<128x64xf32>, i32 -> vector<128x64xf32>
    %139 = arith.maximumf %137, %138 : vector<128x64xf32>
    %c120_i32_48 = arith.constant 120 : i32
    %140 = tpu.dynamic_rotate %139 by %c120_i32_48 dim 0 : vector<128x64xf32>, i32 -> vector<128x64xf32>
    %141 = arith.maximumf %139, %140 : vector<128x64xf32>
    %142 = vector.shape_cast %141 : vector<128x64xf32> to vector<2x64x64xf32>
    %143 = arith.truncf %142 : vector<2x64x64xf32> to vector<2x64x64xbf16>
    %c0_49 = arith.constant 0 : index
    %c0_50 = arith.constant 0 : index
    %144 = vector.load %arg12[%c0_49, %c0_50] : memref<16x64xbf16, #tpu.memory_space<vmem>>, vector<16x64xbf16>
    %145 = vector.shape_cast %144 : vector<16x64xbf16> to vector<1x16x64xbf16>
    %146 = vector.broadcast %145 : vector<1x16x64xbf16> to vector<2x16x64xbf16>
    "tpu.trace_start"() <{level = 10 : i32, message = "brp,bpc->brc"}> : () -> ()
    %cst_51 = arith.constant dense<0.000000e+00> : vector<2x16x64xf32>
    %147 = tpu.matmul %146, %143, %cst_51 {dimension_numbers = #tpu.dot_dimension_numbers<[2], [1], [1], [2], [0, 0, 0, 1, 1, 2], [0], [0]>} : vector<2x16x64xbf16>, vector<2x64x64xbf16>, vector<2x16x64xf32> -> vector<2x16x64xf32>
    "tpu.trace_stop"() : () -> ()
    %148 = vector.shape_cast %147 : vector<2x16x64xf32> to vector<32x64xf32>
    %149 = tpu.iota {dimensions = array<i32: 0>} : vector<32x64xi32>
    %c15_i32_52 = arith.constant 15 : i32
    %150 = vector.broadcast %c15_i32_52 : i32 to vector<32x64xi32>
    %151 = arith.andi %149, %150 : vector<32x64xi32>
    %c3_i32 = arith.constant 3 : i32
    %152 = vector.broadcast %c3_i32 : i32 to vector<32x64xi32>
    %153 = arith.andi %151, %152 : vector<32x64xi32>
    %c4_i32 = arith.constant 4 : i32
    %154 = vector.broadcast %c4_i32 : i32 to vector<32x64xi32>
    %155 = arith.cmpi sge, %151, %154 : vector<32x64xi32>
    %c12_i32 = arith.constant 12 : i32
    %156 = vector.broadcast %c12_i32 : i32 to vector<32x64xi32>
    %157 = arith.cmpi slt, %151, %156 : vector<32x64xi32>
    %c1_i32_53 = arith.constant 1 : i32
    %158 = vector.broadcast %c1_i32_53 : i32 to vector<32x64xi32>
    %159 = arith.cmpi sge, %153, %158 : vector<32x64xi32>
    %c3_i32_54 = arith.constant 3 : i32
    %160 = vector.broadcast %c3_i32_54 : i32 to vector<32x64xi32>
    %161 = arith.cmpi slt, %153, %160 : vector<32x64xi32>
    %c5_i32 = arith.constant 5 : i32
    %162 = tpu.dynamic_rotate %148 by %c5_i32 dim 0 : vector<32x64xf32>, i32 -> vector<32x64xf32>
    %163 = arith.andi %155, %159 : vector<32x64xi1>
    %cst_55 = arith.constant 0.000000e+00 : f32
    %164 = vector.broadcast %cst_55 : f32 to vector<32x64xf32>
    %165 = arith.select %163, %162, %164 : vector<32x64xi1>, vector<32x64xf32>
    %166 = arith.truncf %165 : vector<32x64xf32> to vector<32x64xbf16>
    %c4_i32_56 = arith.constant 4 : i32
    %167 = tpu.dynamic_rotate %148 by %c4_i32_56 dim 0 : vector<32x64xf32>, i32 -> vector<32x64xf32>
    %cst_57 = arith.constant 0.000000e+00 : f32
    %168 = vector.broadcast %cst_57 : f32 to vector<32x64xf32>
    %169 = arith.select %155, %167, %168 : vector<32x64xi1>, vector<32x64xf32>
    %170 = arith.truncf %169 : vector<32x64xf32> to vector<32x64xbf16>
    %c3_i32_58 = arith.constant 3 : i32
    %171 = tpu.dynamic_rotate %148 by %c3_i32_58 dim 0 : vector<32x64xf32>, i32 -> vector<32x64xf32>
    %172 = arith.andi %155, %161 : vector<32x64xi1>
    %cst_59 = arith.constant 0.000000e+00 : f32
    %173 = vector.broadcast %cst_59 : f32 to vector<32x64xf32>
    %174 = arith.select %172, %171, %173 : vector<32x64xi1>, vector<32x64xf32>
    %175 = arith.truncf %174 : vector<32x64xf32> to vector<32x64xbf16>
    %c1_i32_60 = arith.constant 1 : i32
    %176 = tpu.dynamic_rotate %148 by %c1_i32_60 dim 0 : vector<32x64xf32>, i32 -> vector<32x64xf32>
    %cst_61 = arith.constant 0.000000e+00 : f32
    %177 = vector.broadcast %cst_61 : f32 to vector<32x64xf32>
    %178 = arith.select %159, %176, %177 : vector<32x64xi1>, vector<32x64xf32>
    %179 = arith.truncf %178 : vector<32x64xf32> to vector<32x64xbf16>
    %180 = arith.truncf %148 : vector<32x64xf32> to vector<32x64xbf16>
    %c31_i32 = arith.constant 31 : i32
    %181 = tpu.dynamic_rotate %148 by %c31_i32 dim 0 : vector<32x64xf32>, i32 -> vector<32x64xf32>
    %cst_62 = arith.constant 0.000000e+00 : f32
    %182 = vector.broadcast %cst_62 : f32 to vector<32x64xf32>
    %183 = arith.select %161, %181, %182 : vector<32x64xi1>, vector<32x64xf32>
    %184 = arith.truncf %183 : vector<32x64xf32> to vector<32x64xbf16>
    %c29_i32 = arith.constant 29 : i32
    %185 = tpu.dynamic_rotate %148 by %c29_i32 dim 0 : vector<32x64xf32>, i32 -> vector<32x64xf32>
    %186 = arith.andi %157, %159 : vector<32x64xi1>
    %cst_63 = arith.constant 0.000000e+00 : f32
    %187 = vector.broadcast %cst_63 : f32 to vector<32x64xf32>
    %188 = arith.select %186, %185, %187 : vector<32x64xi1>, vector<32x64xf32>
    %189 = arith.truncf %188 : vector<32x64xf32> to vector<32x64xbf16>
    %c28_i32 = arith.constant 28 : i32
    %190 = tpu.dynamic_rotate %148 by %c28_i32 dim 0 : vector<32x64xf32>, i32 -> vector<32x64xf32>
    %cst_64 = arith.constant 0.000000e+00 : f32
    %191 = vector.broadcast %cst_64 : f32 to vector<32x64xf32>
    %192 = arith.select %157, %190, %191 : vector<32x64xi1>, vector<32x64xf32>
    %193 = arith.truncf %192 : vector<32x64xf32> to vector<32x64xbf16>
    %c27_i32 = arith.constant 27 : i32
    %194 = tpu.dynamic_rotate %148 by %c27_i32 dim 0 : vector<32x64xf32>, i32 -> vector<32x64xf32>
    %195 = arith.andi %157, %161 : vector<32x64xi1>
    %cst_65 = arith.constant 0.000000e+00 : f32
    %196 = vector.broadcast %cst_65 : f32 to vector<32x64xf32>
    %197 = arith.select %195, %194, %196 : vector<32x64xi1>, vector<32x64xf32>
    %198 = arith.truncf %197 : vector<32x64xf32> to vector<32x64xbf16>
    %199 = tpu.concatenate %166, %170, %175, %179, %180, %184, %189, %193, %198 in 1 : vector<32x64xbf16>, vector<32x64xbf16>, vector<32x64xbf16>, vector<32x64xbf16>, vector<32x64xbf16>, vector<32x64xbf16>, vector<32x64xbf16>, vector<32x64xbf16>, vector<32x64xbf16> -> vector<32x576xbf16>
    %c0_66 = arith.constant 0 : index
    %c0_67 = arith.constant 0 : index
    %200 = vector.load %arg8[%c0_66, %c0_67] : memref<576x128xbf16, #tpu.memory_space<vmem>>, vector<576x128xbf16>
    %cst_68 = arith.constant dense<0.000000e+00> : vector<32x128xf32>
    %201 = tpu.matmul %199, %200, %cst_68 {dimension_numbers = #tpu.dot_dimension_numbers<[1], [0], [0], [1], [0, 0, 1, 1], [], []>} : vector<32x576xbf16>, vector<576x128xbf16>, vector<32x128xf32> -> vector<32x128xf32>
    %c0_69 = arith.constant 0 : index
    %c0_70 = arith.constant 0 : index
    %202 = vector.load %arg9[%c0_69, %c0_70] : memref<1x128xf32, #tpu.memory_space<vmem>>, vector<1x128xf32>
    %203 = vector.broadcast %202 : vector<1x128xf32> to vector<32x128xf32>
    %204 = arith.mulf %201, %203 : vector<32x128xf32>
    %c0_71 = arith.constant 0 : index
    %c0_72 = arith.constant 0 : index
    %205 = vector.load %arg10[%c0_71, %c0_72] : memref<1x128xf32, #tpu.memory_space<vmem>>, vector<1x128xf32>
    %206 = vector.broadcast %205 : vector<1x128xf32> to vector<32x128xf32>
    %207 = arith.addf %204, %206 : vector<32x128xf32>
    %cst_73 = arith.constant 0.000000e+00 : f32
    %208 = vector.broadcast %cst_73 : f32 to vector<32x128xf32>
    %209 = arith.maximumf %207, %208 : vector<32x128xf32>
    %c31_i32_74 = arith.constant 31 : i32
    %210 = tpu.dynamic_rotate %209 by %c31_i32_74 dim 0 : vector<32x128xf32>, i32 -> vector<32x128xf32>
    %211 = arith.maximumf %209, %210 : vector<32x128xf32>
    %c28_i32_75 = arith.constant 28 : i32
    %212 = tpu.dynamic_rotate %211 by %c28_i32_75 dim 0 : vector<32x128xf32>, i32 -> vector<32x128xf32>
    %213 = arith.maximumf %211, %212 : vector<32x128xf32>
    %c0_76 = arith.constant 0 : index
    %c0_77 = arith.constant 0 : index
    %214 = vector.load %arg13[%c0_76, %c0_77] : memref<2x32xbf16, #tpu.memory_space<vmem>>, vector<2x32xbf16>
    %215 = arith.truncf %213 : vector<32x128xf32> to vector<32x128xbf16>
    %cst_78 = arith.constant dense<0.000000e+00> : vector<2x128xf32>
    %216 = tpu.matmul %214, %215, %cst_78 {dimension_numbers = #tpu.dot_dimension_numbers<[1], [0], [0], [1], [0, 0, 1, 1], [], []>} : vector<2x32xbf16>, vector<32x128xbf16>, vector<2x128xf32> -> vector<2x128xf32>
    %217 = arith.truncf %216 : vector<2x128xf32> to vector<2x128xbf16>
    %c0_79 = arith.constant 0 : index
    %c0_80 = arith.constant 0 : index
    %218 = vector.load %arg14[%c0_79, %c0_80] : memref<128x64xbf16, #tpu.memory_space<vmem>>, vector<128x64xbf16>
    %cst_81 = arith.constant dense<0.000000e+00> : vector<2x64xf32>
    %219 = tpu.matmul %217, %218, %cst_81 {dimension_numbers = #tpu.dot_dimension_numbers<[1], [0], [0], [1], [0, 0, 1, 1], [], []>} : vector<2x128xbf16>, vector<128x64xbf16>, vector<2x64xf32> -> vector<2x64xf32>
    %c0_82 = arith.constant 0 : index
    %c0_83 = arith.constant 0 : index
    %220 = vector.load %arg15[%c0_82, %c0_83] : memref<1x64xf32, #tpu.memory_space<vmem>>, vector<1x64xf32>
    %221 = vector.broadcast %220 : vector<1x64xf32> to vector<2x64xf32>
    %222 = arith.mulf %219, %221 : vector<2x64xf32>
    %c0_84 = arith.constant 0 : index
    %c0_85 = arith.constant 0 : index
    %223 = vector.load %arg16[%c0_84, %c0_85] : memref<1x64xf32, #tpu.memory_space<vmem>>, vector<1x64xf32>
    %224 = vector.broadcast %223 : vector<1x64xf32> to vector<2x64xf32>
    %225 = arith.addf %222, %224 : vector<2x64xf32>
    %cst_86 = arith.constant 0.000000e+00 : f32
    %226 = vector.broadcast %cst_86 : f32 to vector<2x64xf32>
    %227 = arith.maximumf %225, %226 : vector<2x64xf32>
    %c0_87 = arith.constant 0 : index
    %c0_88 = arith.constant 0 : index
    %228 = vector.load %arg17[%c0_87, %c0_88] : memref<1x64xf32, #tpu.memory_space<vmem>>, vector<1x64xf32>
    %229 = vector.broadcast %228 : vector<1x64xf32> to vector<2x64xf32>
    %230 = arith.mulf %227, %229 : vector<2x64xf32>
    %cst_89 = arith.constant dense<0.000000e+00> : vector<2xf32>
    %231 = vector.multi_reduction <add>, %230, %cst_89 [1] : vector<2x64xf32> to vector<2xf32>
    %232 = vector.shape_cast %231 : vector<2xf32> to vector<2x1xf32>
    %c0_90 = arith.constant 0 : index
    %c0_91 = arith.constant 0 : index
    %233 = vector.load %arg18[%c0_90, %c0_91] : memref<1x1xf32, #tpu.memory_space<vmem>>, vector<1x1xf32>
    %234 = vector.broadcast %233 : vector<1x1xf32> to vector<2x1xf32>
    %235 = arith.addf %232, %234 : vector<2x1xf32>
    %cst_92 = arith.constant 0.000000e+00 : f32
    %236 = vector.broadcast %cst_92 : f32 to vector<2x1xf32>
    %237 = arith.subf %236, %235 : vector<2x1xf32>
    %238 = math.exp %237 : vector<2x1xf32>
    %cst_93 = arith.constant 1.000000e+00 : f32
    %239 = vector.broadcast %cst_93 : f32 to vector<2x1xf32>
    %240 = arith.addf %239, %238 : vector<2x1xf32>
    %cst_94 = arith.constant 1.000000e+00 : f32
    %241 = vector.broadcast %cst_94 : f32 to vector<2x1xf32>
    %242 = arith.divf %241, %240 : vector<2x1xf32>
    %c0_95 = arith.constant 0 : index
    %c0_96 = arith.constant 0 : index
    %c0_97 = arith.constant 0 : index
    %243 = vector.load %arg19[%c0_95, %c0_96, %c0_97] : memref<1x2x1xf32, #tpu.memory_space<vmem>>, vector<1x2x1xf32>
    %244 = vector.shape_cast %243 : vector<1x2x1xf32> to vector<2x1xf32>
    %245 = vector.shape_cast %242 : vector<2x1xf32> to vector<1x2x1xf32>
    tpu.vector_store %arg19[%c0_95, %c0_96, %c0_97], %245 {strides = array<i32>} : memref<1x2x1xf32, #tpu.memory_space<vmem>>, vector<1x2x1xf32>,
    return
  }
  func.func @transform_0(%arg0: i32) -> (i32, i32, i32) {
    %c0_i32 = arith.constant 0 : i32
    %c0_i32_0 = arith.constant 0 : i32
    %c0_i32_1 = arith.constant 0 : i32
    return %arg0, %c0_i32, %c0_i32_0 : i32, i32, i32
  }
  func.func @transform_1(%arg0: i32) -> (i32, i32) {
    %c0_i32 = arith.constant 0 : i32
    %c0_i32_0 = arith.constant 0 : i32
    %c0_i32_1 = arith.constant 0 : i32
    return %c0_i32, %c0_i32_0 : i32, i32
  }
  func.func @transform_2(%arg0: i32) -> (i32, i32) {
    %c0_i32 = arith.constant 0 : i32
    %c0_i32_0 = arith.constant 0 : i32
    %c0_i32_1 = arith.constant 0 : i32
    return %c0_i32, %c0_i32_0 : i32, i32
  }
  func.func @transform_3(%arg0: i32) -> (i32, i32) {
    %c0_i32 = arith.constant 0 : i32
    %c0_i32_0 = arith.constant 0 : i32
    %c0_i32_1 = arith.constant 0 : i32
    return %c0_i32, %c0_i32_0 : i32, i32
  }
  func.func @transform_4(%arg0: i32) -> (i32, i32) {
    %c0_i32 = arith.constant 0 : i32
    %c0_i32_0 = arith.constant 0 : i32
    %c0_i32_1 = arith.constant 0 : i32
    return %c0_i32, %c0_i32_0 : i32, i32
  }
  func.func @transform_5(%arg0: i32) -> (i32, i32) {
    %c0_i32 = arith.constant 0 : i32
    %c0_i32_0 = arith.constant 0 : i32
    %c0_i32_1 = arith.constant 0 : i32
    return %c0_i32, %c0_i32_0 : i32, i32
  }
  func.func @transform_6(%arg0: i32) -> (i32, i32) {
    %c0_i32 = arith.constant 0 : i32
    %c0_i32_0 = arith.constant 0 : i32
    %c0_i32_1 = arith.constant 0 : i32
    return %c0_i32, %c0_i32_0 : i32, i32
  }
  func.func @transform_7(%arg0: i32) -> (i32, i32) {
    %c0_i32 = arith.constant 0 : i32
    %c0_i32_0 = arith.constant 0 : i32
    %c0_i32_1 = arith.constant 0 : i32
    return %c0_i32, %c0_i32_0 : i32, i32
  }
  func.func @transform_8(%arg0: i32) -> (i32, i32) {
    %c0_i32 = arith.constant 0 : i32
    %c0_i32_0 = arith.constant 0 : i32
    %c0_i32_1 = arith.constant 0 : i32
    return %c0_i32, %c0_i32_0 : i32, i32
  }
  func.func @transform_9(%arg0: i32) -> (i32, i32) {
    %c0_i32 = arith.constant 0 : i32
    %c0_i32_0 = arith.constant 0 : i32
    %c0_i32_1 = arith.constant 0 : i32
    return %c0_i32, %c0_i32_0 : i32, i32
  }
  func.func @transform_10(%arg0: i32) -> (i32, i32) {
    %c0_i32 = arith.constant 0 : i32
    %c0_i32_0 = arith.constant 0 : i32
    %c0_i32_1 = arith.constant 0 : i32
    return %c0_i32, %c0_i32_0 : i32, i32
  }
  func.func @transform_11(%arg0: i32) -> (i32, i32) {
    %c0_i32 = arith.constant 0 : i32
    %c0_i32_0 = arith.constant 0 : i32
    %c0_i32_1 = arith.constant 0 : i32
    return %c0_i32, %c0_i32_0 : i32, i32
  }
  func.func @transform_12(%arg0: i32) -> (i32, i32) {
    %c0_i32 = arith.constant 0 : i32
    %c0_i32_0 = arith.constant 0 : i32
    %c0_i32_1 = arith.constant 0 : i32
    return %c0_i32, %c0_i32_0 : i32, i32
  }
  func.func @transform_13(%arg0: i32) -> (i32, i32) {
    %c0_i32 = arith.constant 0 : i32
    %c0_i32_0 = arith.constant 0 : i32
    %c0_i32_1 = arith.constant 0 : i32
    return %c0_i32, %c0_i32_0 : i32, i32
  }
  func.func @transform_14(%arg0: i32) -> (i32, i32) {
    %c0_i32 = arith.constant 0 : i32
    %c0_i32_0 = arith.constant 0 : i32
    %c0_i32_1 = arith.constant 0 : i32
    return %c0_i32, %c0_i32_0 : i32, i32
  }
  func.func @transform_15(%arg0: i32) -> (i32, i32) {
    %c0_i32 = arith.constant 0 : i32
    %c0_i32_0 = arith.constant 0 : i32
    %c0_i32_1 = arith.constant 0 : i32
    return %c0_i32, %c0_i32_0 : i32, i32
  }
  func.func @transform_16(%arg0: i32) -> (i32, i32) {
    %c0_i32 = arith.constant 0 : i32
    %c0_i32_0 = arith.constant 0 : i32
    %c0_i32_1 = arith.constant 0 : i32
    return %c0_i32, %c0_i32_0 : i32, i32
  }
  func.func @transform_17(%arg0: i32) -> (i32, i32) {
    %c0_i32 = arith.constant 0 : i32
    %c0_i32_0 = arith.constant 0 : i32
    %c0_i32_1 = arith.constant 0 : i32
    return %c0_i32, %c0_i32_0 : i32, i32
  }
  func.func @transform_18(%arg0: i32) -> (i32, i32, i32) {
    %c0_i32 = arith.constant 0 : i32
    %c0_i32_0 = arith.constant 0 : i32
    %c0_i32_1 = arith.constant 0 : i32
    return %arg0, %c0_i32, %c0_i32_0 : i32, i32, i32
  }
}

</mosaic_0001>

<llo_original>
// kernel: forward.1
$region0: #{forward.1}
  #allocation0 [shape = 'u32[]', space=smem, size = 0x4, offset = 0x4, fixed_abs, tag = 'smem constant byte address 0x4 - core index']
  #allocation1 [shape = 'u32[144,128]{1,0:T(1,128)}', space=vmem, size = 0x12000, scoped, tag = 'internal scratch']
  #allocation2 [shape = 'f32[1,1]{1,0:T(1,128)S(1)}', space=vmem, size = 0x200, scoped, tag = 'scoped memory for forward.1']
  %s0 = inlined_call_operand.vmem [shape: f32[1,256,2], index: 0, kind: input, shape index: {}]
  %s1 = inlined_call_operand.vmem [shape: bf16[9,32], index: 1, kind: input, shape index: {}]
  %s2 = inlined_call_operand.vmem [shape: f32[1,32], index: 2, kind: input, shape index: {}]
  %s3 = inlined_call_operand.vmem [shape: f32[1,32], index: 3, kind: input, shape index: {}]
  %s4 = inlined_call_operand.vmem [shape: bf16[288,64], index: 4, kind: input, shape index: {}]
  %s5 = inlined_call_operand.vmem [shape: f32[1,64], index: 5, kind: input, shape index: {}]
  %s6 = inlined_call_operand.vmem [shape: f32[1,64], index: 6, kind: input, shape index: {}]
  %s7 = inlined_call_operand.vmem [shape: bf16[576,128], index: 7, kind: input, shape index: {}]
  %s8 = inlined_call_operand.vmem [shape: f32[1,128], index: 8, kind: input, shape index: {}]
  %s9 = inlined_call_operand.vmem [shape: f32[1,128], index: 9, kind: input, shape index: {}]
  %s10 = inlined_call_operand.vmem [shape: bf16[64,256], index: 10, kind: input, shape index: {}]
  %s11 = inlined_call_operand.vmem [shape: bf16[16,64], index: 11, kind: input, shape index: {}]
  %s12 = inlined_call_operand.vmem [shape: bf16[2,32], index: 12, kind: input, shape index: {}]
  %s13 = inlined_call_operand.vmem [shape: bf16[128,64], index: 13, kind: input, shape index: {}]
  %s14 = inlined_call_operand.vmem [shape: f32[1,64], index: 14, kind: input, shape index: {}]
  %s15 = inlined_call_operand.vmem [shape: f32[1,64], index: 15, kind: input, shape index: {}]
  %s16 = inlined_call_operand.vmem [shape: f32[1,64], index: 16, kind: input, shape index: {}]
  %s17 = inlined_call_operand.<no memory space> [shape: f32[1,1], index: 17, kind: input, shape index: {}]
  %s18 = inlined_call_operand.vmem [shape: f32[1,2,1], index: 18, kind: output, shape index: {}]
  %s19 = sld [smem:[#allocation0]]
  $region82: #{forward.1} parent=0
    _
  %s21 = ssub.s32 1, %s19
  %s22 = scalar_select 0, %s21, %s19
  %v23 = vstv %s17
  %24 = vst [vmem:[#allocation2] sm:$0x1] %v23
  // Predicated region
  $region2: #{forward.1} parent=0 // pred_check
    _
  $region3: #{forward.1} parent=0 // pred_check_branch
    %26 = sbr.rel (0) target = $region5
  $region4: #{forward.1} parent=0 // pred_region
    _
  $region5: #{forward.1} parent=0 // pred_fallthru
    _
  // Predicated region
  $region6: #{forward.1} parent=0 // pred_check
    _
  $region7: #{forward.1} parent=0 // pred_check_branch
    %28 = sbr.rel (0) target = $region9
  $region8: #{forward.1} parent=0 // pred_region
    _
  $region9: #{forward.1} parent=0 // pred_fallthru
    _
  // Predicated region
  $region10: #{forward.1} parent=0 // pred_check
    _
  $region11: #{forward.1} parent=0 // pred_check_branch
    %30 = sbr.rel (0) target = $region13
  $region12: #{forward.1} parent=0 // pred_region
    _
  $region13: #{forward.1} parent=0 // pred_fallthru
    _
  // Predicated region
  $region14: #{forward.1} parent=0 // pred_check
    _
  $region15: #{forward.1} parent=0 // pred_check_branch
    %32 = sbr.rel (0) target = $region17
  $region16: #{forward.1} parent=0 // pred_region
    _
  $region17: #{forward.1} parent=0 // pred_fallthru
    _
  // Predicated region
  $region18: #{forward.1} parent=0 // pred_check
    _
  $region19: #{forward.1} parent=0 // pred_check_branch
    %34 = sbr.rel (0) target = $region21
  $region20: #{forward.1} parent=0 // pred_region
    _
  $region21: #{forward.1} parent=0 // pred_fallthru
    _
  // Predicated region
  $region22: #{forward.1} parent=0 // pred_check
    _
  $region23: #{forward.1} parent=0 // pred_check_branch
    %36 = sbr.rel (0) target = $region25
  $region24: #{forward.1} parent=0 // pred_region
    _
  $region25: #{forward.1} parent=0 // pred_fallthru
    _
  // Predicated region
  $region26: #{forward.1} parent=0 // pred_check
    _
  $region27: #{forward.1} parent=0 // pred_check_branch
    %38 = sbr.rel (0) target = $region29
  $region28: #{forward.1} parent=0 // pred_region
    _
  $region29: #{forward.1} parent=0 // pred_fallthru
    _
  // Predicated region
  $region30: #{forward.1} parent=0 // pred_check
    _
  $region31: #{forward.1} parent=0 // pred_check_branch
    %40 = sbr.rel (0) target = $region33
  $region32: #{forward.1} parent=0 // pred_region
    _
  $region33: #{forward.1} parent=0 // pred_fallthru
    _
  // Predicated region
  $region34: #{forward.1} parent=0 // pred_check
    _
  $region35: #{forward.1} parent=0 // pred_check_branch
    %42 = sbr.rel (0) target = $region37
  $region36: #{forward.1} parent=0 // pred_region
    _
  $region37: #{forward.1} parent=0 // pred_fallthru
    _
  // Predicated region
  $region38: #{forward.1} parent=0 // pred_check
    _
  $region39: #{forward.1} parent=0 // pred_check_branch
    %44 = sbr.rel (0) target = $region41
  $region40: #{forward.1} parent=0 // pred_region
    _
  $region41: #{forward.1} parent=0 // pred_fallthru
    _
  // Predicated region
  $region42: #{forward.1} parent=0 // pred_check
    _
  $region43: #{forward.1} parent=0 // pred_check_branch
    %46 = sbr.rel (0) target = $region45
  $region44: #{forward.1} parent=0 // pred_region
    _
  $region45: #{forward.1} parent=0 // pred_fallthru
    _
  // Predicated region
  $region46: #{forward.1} parent=0 // pred_check
    _
  $region47: #{forward.1} parent=0 // pred_check_branch
    %48 = sbr.rel (0) target = $region49
  $region48: #{forward.1} parent=0 // pred_region
    _
  $region49: #{forward.1} parent=0 // pred_fallthru
    _
  // Predicated region
  $region50: #{forward.1} parent=0 // pred_check
    _
  $region51: #{forward.1} parent=0 // pred_check_branch
    %50 = sbr.rel (0) target = $region53
  $region52: #{forward.1} parent=0 // pred_region
    _
  $region53: #{forward.1} parent=0 // pred_fallthru
    _
  // Predicated region
  $region54: #{forward.1} parent=0 // pred_check
    _
  $region55: #{forward.1} parent=0 // pred_check_branch
    %52 = sbr.rel (0) target = $region57
  $region56: #{forward.1} parent=0 // pred_region
    _
  $region57: #{forward.1} parent=0 // pred_fallthru
    _
  // Predicated region
  $region58: #{forward.1} parent=0 // pred_check
    _
  $region59: #{forward.1} parent=0 // pred_check_branch
    %54 = sbr.rel (0) target = $region61
  $region60: #{forward.1} parent=0 // pred_region
    _
  $region61: #{forward.1} parent=0 // pred_fallthru
    _
  // Predicated region
  $region62: #{forward.1} parent=0 // pred_check
    _
  $region63: #{forward.1} parent=0 // pred_check_branch
    %56 = sbr.rel (0) target = $region65
  $region64: #{forward.1} parent=0 // pred_region
    _
  $region65: #{forward.1} parent=0 // pred_fallthru
    _
  // Predicated region
  $region66: #{forward.1} parent=0 // pred_check
    _
  $region67: #{forward.1} parent=0 // pred_check_branch
    %58 = sbr.rel (0) target = $region69
  $region68: #{forward.1} parent=0 // pred_region
    _
  $region69: #{forward.1} parent=0 // pred_fallthru
    _
  // Predicated region
  $region70: #{forward.1} parent=0 // pred_check
    _
  $region71: #{forward.1} parent=0 // pred_check_branch
    %60 = sbr.rel (0) target = $region73
  $region72: #{forward.1} parent=0 // pred_region
    _
  $region73: #{forward.1} parent=0 // pred_fallthru
    _
  %v62 = vld [vmem:[%s0] sm:$0xff]
  %v63 = vld [vmem:[%s0 + $0x8] sm:$0xff]
  %v64 = vld [vmem:[%s0 + $0x10] sm:$0xff]
  %v65 = vld [vmem:[%s0 + $0x18] sm:$0xff]
  %v66 = vld [vmem:[%s0 + $0x20] sm:$0xff]
  %v67 = vld [vmem:[%s0 + $0x28] sm:$0xff]
  %v68 = vld [vmem:[%s0 + $0x30] sm:$0xff]
  %v69 = vld [vmem:[%s0 + $0x38] sm:$0xff]
  %v70 = vld [vmem:[%s0 + $0x40] sm:$0xff]
  %v71 = vld [vmem:[%s0 + $0x48] sm:$0xff]
  %v72 = vld [vmem:[%s0 + $0x50] sm:$0xff]
  %v73 = vld [vmem:[%s0 + $0x58] sm:$0xff]
  %v74 = vld [vmem:[%s0 + $0x60] sm:$0xff]
  %v75 = vld [vmem:[%s0 + $0x68] sm:$0xff]
  %v76 = vld [vmem:[%s0 + $0x70] sm:$0xff]
  %v77 = vld [vmem:[%s0 + $0x78] sm:$0xff]
  %v78 = vld [vmem:[%s0 + $0x80] sm:$0xff]
  %v79 = vld [vmem:[%s0 + $0x88] sm:$0xff]
  %v80 = vld [vmem:[%s0 + $0x90] sm:$0xff]
  %v81 = vld [vmem:[%s0 + $0x98] sm:$0xff]
  %v82 = vld [vmem:[%s0 + $0xa0] sm:$0xff]
  %v83 = vld [vmem:[%s0 + $0xa8] sm:$0xff]
  %v84 = vld [vmem:[%s0 + $0xb0] sm:$0xff]
  %v85 = vld [vmem:[%s0 + $0xb8] sm:$0xff]
  %v86 = vld [vmem:[%s0 + $0xc0] sm:$0xff]
  %v87 = vld [vmem:[%s0 + $0xc8] sm:$0xff]
  %v88 = vld [vmem:[%s0 + $0xd0] sm:$0xff]
  %v89 = vld [vmem:[%s0 + $0xd8] sm:$0xff]
  %v90 = vld [vmem:[%s0 + $0xe0] sm:$0xff]
  %v91 = vld [vmem:[%s0 + $0xe8] sm:$0xff]
  %v92 = vld [vmem:[%s0 + $0xf0] sm:$0xff]
  %v93 = vld [vmem:[%s0 + $0xf8] sm:$0xff]
  %126 = vrot.lane.b32.xlu0 %v62, 127
  %v127 = vpop.permute.xlu0 %126
  %128 = vrot.lane.b32.xlu0 %v63, 127
  %v129 = vpop.permute.xlu0 %128
  %130 = vrot.lane.b32.xlu0 %v64, 127
  %v131 = vpop.permute.xlu0 %130
  %132 = vrot.lane.b32.xlu0 %v65, 127
  %v133 = vpop.permute.xlu0 %132
  %134 = vrot.lane.b32.xlu0 %v66, 127
  %v135 = vpop.permute.xlu0 %134
  %136 = vrot.lane.b32.xlu0 %v67, 127
  %v137 = vpop.permute.xlu0 %136
  %138 = vrot.lane.b32.xlu0 %v68, 127
  %v139 = vpop.permute.xlu0 %138
  %140 = vrot.lane.b32.xlu0 %v69, 127
  %v141 = vpop.permute.xlu0 %140
  %142 = vrot.lane.b32.xlu0 %v70, 127
  %v143 = vpop.permute.xlu0 %142
  %144 = vrot.lane.b32.xlu0 %v71, 127
  %v145 = vpop.permute.xlu0 %144
  %146 = vrot.lane.b32.xlu0 %v72, 127
  %v147 = vpop.permute.xlu0 %146
  %148 = vrot.lane.b32.xlu0 %v73, 127
  %v149 = vpop.permute.xlu0 %148
  %150 = vrot.lane.b32.xlu0 %v74, 127
  %v151 = vpop.permute.xlu0 %150
  %152 = vrot.lane.b32.xlu0 %v75, 127
  %v153 = vpop.permute.xlu0 %152
  %154 = vrot.lane.b32.xlu0 %v76, 127
  %v155 = vpop.permute.xlu0 %154
  %156 = vrot.lane.b32.xlu0 %v77, 127
  %v157 = vpop.permute.xlu0 %156
  %158 = vrot.lane.b32.xlu0 %v78, 127
  %v159 = vpop.permute.xlu0 %158
  %160 = vrot.lane.b32.xlu0 %v79, 127
  %v161 = vpop.permute.xlu0 %160
  %162 = vrot.lane.b32.xlu0 %v80, 127
  %v163 = vpop.permute.xlu0 %162
  %164 = vrot.lane.b32.xlu0 %v81, 127
  %v165 = vpop.permute.xlu0 %164
  %166 = vrot.lane.b32.xlu0 %v82, 127
  %v167 = vpop.permute.xlu0 %166
  %168 = vrot.lane.b32.xlu0 %v83, 127
  %v169 = vpop.permute.xlu0 %168
  %170 = vrot.lane.b32.xlu0 %v84, 127
  %v171 = vpop.permute.xlu0 %170
  %172 = vrot.lane.b32.xlu0 %v85, 127
  %v173 = vpop.permute.xlu0 %172
  %174 = vrot.lane.b32.xlu0 %v86, 127
  %v175 = vpop.permute.xlu0 %174
  %176 = vrot.lane.b32.xlu0 %v87, 127
  %v177 = vpop.permute.xlu0 %176
  %178 = vrot.lane.b32.xlu0 %v88, 127
  %v179 = vpop.permute.xlu0 %178
  %180 = vrot.lane.b32.xlu0 %v89, 127
  %v181 = vpop.permute.xlu0 %180
  %182 = vrot.lane.b32.xlu0 %v90, 127
  %v183 = vpop.permute.xlu0 %182
  %184 = vrot.lane.b32.xlu0 %v91, 127
  %v185 = vpop.permute.xlu0 %184
  %186 = vrot.lane.b32.xlu0 %v92, 127
  %v187 = vpop.permute.xlu0 %186
  %188 = vrot.lane.b32.xlu0 %v93, 127
  %v189 = vpop.permute.xlu0 %188
  %v222 = vlaneseq
  %v223 = vshrl.u32 %v222, 7
  %v224 = vadd.s32 %v223, 8
  %v225 = vadd.s32 %v223, 16
  %v226 = vadd.s32 %v223, 24
  %v227 = vadd.s32 %v223, 32
  %v228 = vadd.s32 %v223, 40
  %v229 = vadd.s32 %v223, 48
  %v230 = vadd.s32 %v223, 56
  %v231 = vadd.s32 %v223, 64
  %v232 = vadd.s32 %v223, 72
  %v233 = vadd.s32 %v223, 80
  %v234 = vadd.s32 %v223, 88
  %v235 = vadd.s32 %v223, 96
  %v236 = vadd.s32 %v223, 104
  %v237 = vadd.s32 %v223, 112
  %v238 = vadd.s32 %v223, 120
  %v239 = vadd.s32 %v223, 128
  %v240 = vadd.s32 %v223, 136
  %v241 = vadd.s32 %v223, 144
  %v242 = vadd.s32 %v223, 152
  %v243 = vadd.s32 %v223, 160
  %v244 = vadd.s32 %v223, 168
  %v245 = vadd.s32 %v223, 176
  %v246 = vadd.s32 %v223, 184
  %v247 = vadd.s32 %v223, 192
  %v248 = vadd.s32 %v223, 200
  %v249 = vadd.s32 %v223, 208
  %v250 = vadd.s32 %v223, 216
  %v251 = vadd.s32 %v223, 224
  %v252 = vadd.s32 %v223, 232
  %v253 = vadd.s32 %v223, 240
  %v254 = vadd.s32 %v223, 248
  %v255 = vadd.s32 %v223, 256
  %v256 = vadd.s32 %v223, 264
  %v257 = vadd.s32 %v223, 272
  %v258 = vadd.s32 %v223, 280
  %v259 = vadd.s32 %v223, 288
  %v260 = vadd.s32 %v223, 296
  %v261 = vadd.s32 %v223, 304
  %v262 = vadd.s32 %v223, 312
  %v263 = vadd.s32 %v223, 320
  %v264 = vadd.s32 %v223, 328
  %v265 = vadd.s32 %v223, 336
  %v266 = vadd.s32 %v223, 344
  %v267 = vadd.s32 %v223, 352
  %v268 = vadd.s32 %v223, 360
  %v269 = vadd.s32 %v223, 368
  %v270 = vadd.s32 %v223, 376
  %v271 = vadd.s32 %v223, 384
  %v272 = vadd.s32 %v223, 392
  %v273 = vadd.s32 %v223, 400
  %v274 = vadd.s32 %v223, 408
  %v275 = vadd.s32 %v223, 416
  %v276 = vadd.s32 %v223, 424
  %v277 = vadd.s32 %v223, 432
  %v278 = vadd.s32 %v223, 440
  %v279 = vadd.s32 %v223, 448
  %v280 = vadd.s32 %v223, 456
  %v281 = vadd.s32 %v223, 464
  %v282 = vadd.s32 %v223, 472
  %v283 = vadd.s32 %v223, 480
  %v284 = vadd.s32 %v223, 488
  %v285 = vadd.s32 %v223, 496
  %v286 = vadd.s32 %v223, 504
  %v287 = vand.u32 %v223, 255
  %v288 = vand.u32 %v224, 255
  %v289 = vand.u32 %v225, 255
  %v290 = vand.u32 %v226, 255
  %v291 = vand.u32 %v227, 255
  %v292 = vand.u32 %v228, 255
  %v293 = vand.u32 %v229, 255
  %v294 = vand.u32 %v230, 255
  %v295 = vand.u32 %v231, 255
  %v296 = vand.u32 %v232, 255
  %v297 = vand.u32 %v233, 255
  %v298 = vand.u32 %v234, 255
  %v299 = vand.u32 %v235, 255
  %v300 = vand.u32 %v236, 255
  %v301 = vand.u32 %v237, 255
  %v302 = vand.u32 %v238, 255
  %v303 = vand.u32 %v239, 255
  %v304 = vand.u32 %v240, 255
  %v305 = vand.u32 %v241, 255
  %v306 = vand.u32 %v242, 255
  %v307 = vand.u32 %v243, 255
  %v308 = vand.u32 %v244, 255
  %v309 = vand.u32 %v245, 255
  %v310 = vand.u32 %v246, 255
  %v311 = vand.u32 %v247, 255
  %v312 = vand.u32 %v248, 255
  %v313 = vand.u32 %v249, 255
  %v314 = vand.u32 %v250, 255
  %v315 = vand.u32 %v251, 255
  %v316 = vand.u32 %v252, 255
  %v317 = vand.u32 %v253, 255
  %v318 = vand.u32 %v254, 255
  %v319 = vand.u32 %v255, 255
  %v320 = vand.u32 %v256, 255
  %v321 = vand.u32 %v257, 255
  %v322 = vand.u32 %v258, 255
  %v323 = vand.u32 %v259, 255
  %v324 = vand.u32 %v260, 255
  %v325 = vand.u32 %v261, 255
  %v326 = vand.u32 %v262, 255
  %v327 = vand.u32 %v263, 255
  %v328 = vand.u32 %v264, 255
  %v329 = vand.u32 %v265, 255
  %v330 = vand.u32 %v266, 255
  %v331 = vand.u32 %v267, 255
  %v332 = vand.u32 %v268, 255
  %v333 = vand.u32 %v269, 255
  %v334 = vand.u32 %v270, 255
  %v335 = vand.u32 %v271, 255
  %v336 = vand.u32 %v272, 255
  %v337 = vand.u32 %v273, 255
  %v338 = vand.u32 %v274, 255
  %v339 = vand.u32 %v275, 255
  %v340 = vand.u32 %v276, 255
  %v341 = vand.u32 %v277, 255
  %v342 = vand.u32 %v278, 255
  %v343 = vand.u32 %v279, 255
  %v344 = vand.u32 %v280, 255
  %v345 = vand.u32 %v281, 255
  %v346 = vand.u32 %v282, 255
  %v347 = vand.u32 %v283, 255
  %v348 = vand.u32 %v284, 255
  %v349 = vand.u32 %v285, 255
  %v350 = vand.u32 %v286, 255
  %v351 = vand.u32 %v287, 15
  %v352 = vand.u32 %v288, 15
  %v353 = vand.u32 %v289, 15
  %v354 = vand.u32 %v290, 15
  %v355 = vand.u32 %v291, 15
  %v356 = vand.u32 %v292, 15
  %v357 = vand.u32 %v293, 15
  %v358 = vand.u32 %v294, 15
  %v359 = vand.u32 %v295, 15
  %v360 = vand.u32 %v296, 15
  %v361 = vand.u32 %v297, 15
  %v362 = vand.u32 %v298, 15
  %v363 = vand.u32 %v299, 15
  %v364 = vand.u32 %v300, 15
  %v365 = vand.u32 %v301, 15
  %v366 = vand.u32 %v302, 15
  %v367 = vand.u32 %v303, 15
  %v368 = vand.u32 %v304, 15
  %v369 = vand.u32 %v305, 15
  %v370 = vand.u32 %v306, 15
  %v371 = vand.u32 %v307, 15
  %v372 = vand.u32 %v308, 15
  %v373 = vand.u32 %v309, 15
  %v374 = vand.u32 %v310, 15
  %v375 = vand.u32 %v311, 15
  %v376 = vand.u32 %v312, 15
  %v377 = vand.u32 %v313, 15
  %v378 = vand.u32 %v314, 15
  %v379 = vand.u32 %v315, 15
  %v380 = vand.u32 %v316, 15
  %v381 = vand.u32 %v317, 15
  %v382 = vand.u32 %v318, 15
  %v383 = vand.u32 %v319, 15
  %v384 = vand.u32 %v320, 15
  %v385 = vand.u32 %v321, 15
  %v386 = vand.u32 %v322, 15
  %v387 = vand.u32 %v323, 15
  %v388 = vand.u32 %v324, 15
  %v389 = vand.u32 %v325, 15
  %v390 = vand.u32 %v326, 15
  %v391 = vand.u32 %v327, 15
  %v392 = vand.u32 %v328, 15
  %v393 = vand.u32 %v329, 15
  %v394 = vand.u32 %v330, 15
  %v395 = vand.u32 %v331, 15
  %v396 = vand.u32 %v332, 15
  %v397 = vand.u32 %v333, 15
  %v398 = vand.u32 %v334, 15
  %v399 = vand.u32 %v335, 15
  %v400 = vand.u32 %v336, 15
  %v401 = vand.u32 %v337, 15
  %v402 = vand.u32 %v338, 15
  %v403 = vand.u32 %v339, 15
  %v404 = vand.u32 %v340, 15
  %v405 = vand.u32 %v341, 15
  %v406 = vand.u32 %v342, 15
  %v407 = vand.u32 %v343, 15
  %v408 = vand.u32 %v344, 15
  %v409 = vand.u32 %v345, 15
  %v410 = vand.u32 %v346, 15
  %v411 = vand.u32 %v347, 15
  %v412 = vand.u32 %v348, 15
  %v413 = vand.u32 %v349, 15
  %v414 = vand.u32 %v350, 15
  %vm415 = vcmp.ge.s32.totalorder %v287, 16
  %vm416 = vcmp.ge.s32.totalorder %v288, 16
  %vm417 = vcmp.ge.s32.totalorder %v289, 16
  %vm418 = vcmp.ge.s32.totalorder %v290, 16
  %vm419 = vcmp.ge.s32.totalorder %v291, 16
  %vm420 = vcmp.ge.s32.totalorder %v292, 16
  %vm421 = vcmp.ge.s32.totalorder %v293, 16
  %vm422 = vcmp.ge.s32.totalorder %v294, 16
  %vm423 = vcmp.ge.s32.totalorder %v295, 16
  %vm424 = vcmp.ge.s32.totalorder %v296, 16
  %vm425 = vcmp.ge.s32.totalorder %v297, 16
  %vm426 = vcmp.ge.s32.totalorder %v298, 16
  %vm427 = vcmp.ge.s32.totalorder %v299, 16
  %vm428 = vcmp.ge.s32.totalorder %v300, 16
  %vm429 = vcmp.ge.s32.totalorder %v301, 16
  %vm430 = vcmp.ge.s32.totalorder %v302, 16
  %vm431 = vcmp.ge.s32.totalorder %v303, 16
  %vm432 = vcmp.ge.s32.totalorder %v304, 16
  %vm433 = vcmp.ge.s32.totalorder %v305, 16
  %vm434 = vcmp.ge.s32.totalorder %v306, 16
  %vm435 = vcmp.ge.s32.totalorder %v307, 16
  %vm436 = vcmp.ge.s32.totalorder %v308, 16
  %vm437 = vcmp.ge.s32.totalorder %v309, 16
  %vm438 = vcmp.ge.s32.totalorder %v310, 16
  %vm439 = vcmp.ge.s32.totalorder %v311, 16
  %vm440 = vcmp.ge.s32.totalorder %v312, 16
  %vm441 = vcmp.ge.s32.totalorder %v313, 16
  %vm442 = vcmp.ge.s32.totalorder %v314, 16
  %vm443 = vcmp.ge.s32.totalorder %v315, 16
  %vm444 = vcmp.ge.s32.totalorder %v316, 16
  %vm445 = vcmp.ge.s32.totalorder %v317, 16
  %vm446 = vcmp.ge.s32.totalorder %v318, 16
  %vm447 = vcmp.ge.s32.totalorder %v319, 16
  %vm448 = vcmp.ge.s32.totalorder %v320, 16
  %vm449 = vcmp.ge.s32.totalorder %v321, 16
  %vm450 = vcmp.ge.s32.totalorder %v322, 16
  %vm451 = vcmp.ge.s32.totalorder %v323, 16
  %vm452 = vcmp.ge.s32.totalorder %v324, 16
  %vm453 = vcmp.ge.s32.totalorder %v325, 16
  %vm454 = vcmp.ge.s32.totalorder %v326, 16
  %vm455 = vcmp.ge.s32.totalorder %v327, 16
  %vm456 = vcmp.ge.s32.totalorder %v328, 16
  %vm457 = vcmp.ge.s32.totalorder %v329, 16
  %vm458 = vcmp.ge.s32.totalorder %v330, 16
  %vm459 = vcmp.ge.s32.totalorder %v331, 16
  %vm460 = vcmp.ge.s32.totalorder %v332, 16
  %vm461 = vcmp.ge.s32.totalorder %v333, 16
  %vm462 = vcmp.ge.s32.totalorder %v334, 16
  %vm463 = vcmp.ge.s32.totalorder %v335, 16
  %vm464 = vcmp.ge.s32.totalorder %v336, 16
  %vm465 = vcmp.ge.s32.totalorder %v337, 16
  %vm466 = vcmp.ge.s32.totalorder %v338, 16
  %vm467 = vcmp.ge.s32.totalorder %v339, 16
  %vm468 = vcmp.ge.s32.totalorder %v340, 16
  %vm469 = vcmp.ge.s32.totalorder %v341, 16
  %vm470 = vcmp.ge.s32.totalorder %v342, 16
  %vm471 = vcmp.ge.s32.totalorder %v343, 16
  %vm472 = vcmp.ge.s32.totalorder %v344, 16
  %vm473 = vcmp.ge.s32.totalorder %v345, 16
  %vm474 = vcmp.ge.s32.totalorder %v346, 16
  %vm475 = vcmp.ge.s32.totalorder %v347, 16
  %vm476 = vcmp.ge.s32.totalorder %v348, 16
  %vm477 = vcmp.ge.s32.totalorder %v349, 16
  %vm478 = vcmp.ge.s32.totalorder %v350, 16
  %vm479 = vcmp.lt.s32.totalorder %v287, 240
  %vm480 = vcmp.lt.s32.totalorder %v288, 240
  %vm481 = vcmp.lt.s32.totalorder %v289, 240
  %vm482 = vcmp.lt.s32.totalorder %v290, 240
  %vm483 = vcmp.lt.s32.totalorder %v291, 240
  %vm484 = vcmp.lt.s32.totalorder %v292, 240
  %vm485 = vcmp.lt.s32.totalorder %v293, 240
  %vm486 = vcmp.lt.s32.totalorder %v294, 240
  %vm487 = vcmp.lt.s32.totalorder %v295, 240
  %vm488 = vcmp.lt.s32.totalorder %v296, 240
  %vm489 = vcmp.lt.s32.totalorder %v297, 240
  %vm490 = vcmp.lt.s32.totalorder %v298, 240
  %vm491 = vcmp.lt.s32.totalorder %v299, 240
  %vm492 = vcmp.lt.s32.totalorder %v300, 240
  %vm493 = vcmp.lt.s32.totalorder %v301, 240
  %vm494 = vcmp.lt.s32.totalorder %v302, 240
  %vm495 = vcmp.lt.s32.totalorder %v303, 240
  %vm496 = vcmp.lt.s32.totalorder %v304, 240
  %vm497 = vcmp.lt.s32.totalorder %v305, 240
  %vm498 = vcmp.lt.s32.totalorder %v306, 240
  %vm499 = vcmp.lt.s32.totalorder %v307, 240
  %vm500 = vcmp.lt.s32.totalorder %v308, 240
  %vm501 = vcmp.lt.s32.totalorder %v309, 240
  %vm502 = vcmp.lt.s32.totalorder %v310, 240
  %vm503 = vcmp.lt.s32.totalorder %v311, 240
  %vm504 = vcmp.lt.s32.totalorder %v312, 240
  %vm505 = vcmp.lt.s32.totalorder %v313, 240
  %vm506 = vcmp.lt.s32.totalorder %v314, 240
  %vm507 = vcmp.lt.s32.totalorder %v315, 240
  %vm508 = vcmp.lt.s32.totalorder %v316, 240
  %vm509 = vcmp.lt.s32.totalorder %v317, 240
  %vm510 = vcmp.lt.s32.totalorder %v318, 240
  %vm511 = vcmp.lt.s32.totalorder %v319, 240
  %vm512 = vcmp.lt.s32.totalorder %v320, 240
  %vm513 = vcmp.lt.s32.totalorder %v321, 240
  %vm514 = vcmp.lt.s32.totalorder %v322, 240
  %vm515 = vcmp.lt.s32.totalorder %v323, 240
  %vm516 = vcmp.lt.s32.totalorder %v324, 240
  %vm517 = vcmp.lt.s32.totalorder %v325, 240
  %vm518 = vcmp.lt.s32.totalorder %v326, 240
  %vm519 = vcmp.lt.s32.totalorder %v327, 240
  %vm520 = vcmp.lt.s32.totalorder %v328, 240
  %vm521 = vcmp.lt.s32.totalorder %v329, 240
  %vm522 = vcmp.lt.s32.totalorder %v330, 240
  %vm523 = vcmp.lt.s32.totalorder %v331, 240
  %vm524 = vcmp.lt.s32.totalorder %v332, 240
  %vm525 = vcmp.lt.s32.totalorder %v333, 240
  %vm526 = vcmp.lt.s32.totalorder %v334, 240
  %vm527 = vcmp.lt.s32.totalorder %v335, 240
  %vm528 = vcmp.lt.s32.totalorder %v336, 240
  %vm529 = vcmp.lt.s32.totalorder %v337, 240
  %vm530 = vcmp.lt.s32.totalorder %v338, 240
  %vm531 = vcmp.lt.s32.totalorder %v339, 240
  %vm532 = vcmp.lt.s32.totalorder %v340, 240
  %vm533 = vcmp.lt.s32.totalorder %v341, 240
  %vm534 = vcmp.lt.s32.totalorder %v342, 240
  %vm535 = vcmp.lt.s32.totalorder %v343, 240
  %vm536 = vcmp.lt.s32.totalorder %v344, 240
  %vm537 = vcmp.lt.s32.totalorder %v345, 240
  %vm538 = vcmp.lt.s32.totalorder %v346, 240
  %vm539 = vcmp.lt.s32.totalorder %v347, 240
  %vm540 = vcmp.lt.s32.totalorder %v348, 240
  %vm541 = vcmp.lt.s32.totalorder %v349, 240
  %vm542 = vcmp.lt.s32.totalorder %v350, 240
  %vm543 = vcmp.ge.s32.totalorder %v351, 1
  %vm544 = vcmp.ge.s32.totalorder %v352, 1
  %vm545 = vcmp.ge.s32.totalorder %v353, 1
  %vm546 = vcmp.ge.s32.totalorder %v354, 1
  %vm547 = vcmp.ge.s32.totalorder %v355, 1
  %vm548 = vcmp.ge.s32.totalorder %v356, 1
  %vm549 = vcmp.ge.s32.totalorder %v357, 1
  %vm550 = vcmp.ge.s32.totalorder %v358, 1
  %vm551 = vcmp.ge.s32.totalorder %v359, 1
  %vm552 = vcmp.ge.s32.totalorder %v360, 1
  %vm553 = vcmp.ge.s32.totalorder %v361, 1
  %vm554 = vcmp.ge.s32.totalorder %v362, 1
  %vm555 = vcmp.ge.s32.totalorder %v363, 1
  %vm556 = vcmp.ge.s32.totalorder %v364, 1
  %vm557 = vcmp.ge.s32.totalorder %v365, 1
  %vm558 = vcmp.ge.s32.totalorder %v366, 1
  %vm559 = vcmp.ge.s32.totalorder %v367, 1
  %vm560 = vcmp.ge.s32.totalorder %v368, 1
  %vm561 = vcmp.ge.s32.totalorder %v369, 1
  %vm562 = vcmp.ge.s32.totalorder %v370, 1
  %vm563 = vcmp.ge.s32.totalorder %v371, 1
  %vm564 = vcmp.ge.s32.totalorder %v372, 1
  %vm565 = vcmp.ge.s32.totalorder %v373, 1
  %vm566 = vcmp.ge.s32.totalorder %v374, 1
  %vm567 = vcmp.ge.s32.totalorder %v375, 1
  %vm568 = vcmp.ge.s32.totalorder %v376, 1
  %vm569 = vcmp.ge.s32.totalorder %v377, 1
  %vm570 = vcmp.ge.s32.totalorder %v378, 1
  %vm571 = vcmp.ge.s32.totalorder %v379, 1
  %vm572 = vcmp.ge.s32.totalorder %v380, 1
  %vm573 = vcmp.ge.s32.totalorder %v381, 1
  %vm574 = vcmp.ge.s32.totalorder %v382, 1
  %vm575 = vcmp.ge.s32.totalorder %v383, 1
  %vm576 = vcmp.ge.s32.totalorder %v384, 1
  %vm577 = vcmp.ge.s32.totalorder %v385, 1
  %vm578 = vcmp.ge.s32.totalorder %v386, 1
  %vm579 = vcmp.ge.s32.totalorder %v387, 1
  %vm580 = vcmp.ge.s32.totalorder %v388, 1
  %vm581 = vcmp.ge.s32.totalorder %v389, 1
  %vm582 = vcmp.ge.s32.totalorder %v390, 1
  %vm583 = vcmp.ge.s32.totalorder %v391, 1
  %vm584 = vcmp.ge.s32.totalorder %v392, 1
  %vm585 = vcmp.ge.s32.totalorder %v393, 1
  %vm586 = vcmp.ge.s32.totalorder %v394, 1
  %vm587 = vcmp.ge.s32.totalorder %v395, 1
  %vm588 = vcmp.ge.s32.totalorder %v396, 1
  %vm589 = vcmp.ge.s32.totalorder %v397, 1
  %vm590 = vcmp.ge.s32.totalorder %v398, 1
  %vm591 = vcmp.ge.s32.totalorder %v399, 1
  %vm592 = vcmp.ge.s32.totalorder %v400, 1
  %vm593 = vcmp.ge.s32.totalorder %v401, 1
  %vm594 = vcmp.ge.s32.totalorder %v402, 1
  %vm595 = vcmp.ge.s32.totalorder %v403, 1
  %vm596 = vcmp.ge.s32.totalorder %v404, 1
  %vm597 = vcmp.ge.s32.totalorder %v405, 1
  %vm598 = vcmp.ge.s32.totalorder %v406, 1
  %vm599 = vcmp.ge.s32.totalorder %v407, 1
  %vm600 = vcmp.ge.s32.totalorder %v408, 1
  %vm601 = vcmp.ge.s32.totalorder %v409, 1
  %vm602 = vcmp.ge.s32.totalorder %v410, 1
  %vm603 = vcmp.ge.s32.totalorder %v411, 1
  %vm604 = vcmp.ge.s32.totalorder %v412, 1
  %vm605 = vcmp.ge.s32.totalorder %v413, 1
  %vm606 = vcmp.ge.s32.totalorder %v414, 1
  %vm607 = vcmp.lt.s32.totalorder %v351, 15
  %vm608 = vcmp.lt.s32.totalorder %v352, 15
  %vm609 = vcmp.lt.s32.totalorder %v353, 15
  %vm610 = vcmp.lt.s32.totalorder %v354, 15
  %vm611 = vcmp.lt.s32.totalorder %v355, 15
  %vm612 = vcmp.lt.s32.totalorder %v356, 15
  %vm613 = vcmp.lt.s32.totalorder %v357, 15
  %vm614 = vcmp.lt.s32.totalorder %v358, 15
  %vm615 = vcmp.lt.s32.totalorder %v359, 15
  %vm616 = vcmp.lt.s32.totalorder %v360, 15
  %vm617 = vcmp.lt.s32.totalorder %v361, 15
  %vm618 = vcmp.lt.s32.totalorder %v362, 15
  %vm619 = vcmp.lt.s32.totalorder %v363, 15
  %vm620 = vcmp.lt.s32.totalorder %v364, 15
  %vm621 = vcmp.lt.s32.totalorder %v365, 15
  %vm622 = vcmp.lt.s32.totalorder %v366, 15
  %vm623 = vcmp.lt.s32.totalorder %v367, 15
  %vm624 = vcmp.lt.s32.totalorder %v368, 15
  %vm625 = vcmp.lt.s32.totalorder %v369, 15
  %vm626 = vcmp.lt.s32.totalorder %v370, 15
  %vm627 = vcmp.lt.s32.totalorder %v371, 15
  %vm628 = vcmp.lt.s32.totalorder %v372, 15
  %vm629 = vcmp.lt.s32.totalorder %v373, 15
  %vm630 = vcmp.lt.s32.totalorder %v374, 15
  %vm631 = vcmp.lt.s32.totalorder %v375, 15
  %vm632 = vcmp.lt.s32.totalorder %v376, 15
  %vm633 = vcmp.lt.s32.totalorder %v377, 15
  %vm634 = vcmp.lt.s32.totalorder %v378, 15
  %vm635 = vcmp.lt.s32.totalorder %v379, 15
  %vm636 = vcmp.lt.s32.totalorder %v380, 15
  %vm637 = vcmp.lt.s32.totalorder %v381, 15
  %vm638 = vcmp.lt.s32.totalorder %v382, 15
  %vm639 = vcmp.lt.s32.totalorder %v383, 15
  %vm640 = vcmp.lt.s32.totalorder %v384, 15
  %vm641 = vcmp.lt.s32.totalorder %v385, 15
  %vm642 = vcmp.lt.s32.totalorder %v386, 15
  %vm643 = vcmp.lt.s32.totalorder %v387, 15
  %vm644 = vcmp.lt.s32.totalorder %v388, 15
  %vm645 = vcmp.lt.s32.totalorder %v389, 15
  %vm646 = vcmp.lt.s32.totalorder %v390, 15
  %vm647 = vcmp.lt.s32.totalorder %v391, 15
  %vm648 = vcmp.lt.s32.totalorder %v392, 15
  %vm649 = vcmp.lt.s32.totalorder %v393, 15
  %vm650 = vcmp.lt.s32.totalorder %v394, 15
  %vm651 = vcmp.lt.s32.totalorder %v395, 15
  %vm652 = vcmp.lt.s32.totalorder %v396, 15
  %vm653 = vcmp.lt.s32.totalorder %v397, 15
  %vm654 = vcmp.lt.s32.totalorder %v398, 15
  %vm655 = vcmp.lt.s32.totalorder %v399, 15
  %vm656 = vcmp.lt.s32.totalorder %v400, 15
  %vm657 = vcmp.lt.s32.totalorder %v401, 15
  %vm658 = vcmp.lt.s32.totalorder %v402, 15
  %vm659 = vcmp.lt.s32.totalorder %v403, 15
  %vm660 = vcmp.lt.s32.totalorder %v404, 15
  %vm661 = vcmp.lt.s32.totalorder %v405, 15
  %vm662 = vcmp.lt.s32.totalorder %v406, 15
  %vm663 = vcmp.lt.s32.totalorder %v407, 15
  %vm664 = vcmp.lt.s32.totalorder %v408, 15
  %vm665 = vcmp.lt.s32.totalorder %v409, 15
  %vm666 = vcmp.lt.s32.totalorder %v410, 15
  %vm667 = vcmp.lt.s32.totalorder %v411, 15
  %vm668 = vcmp.lt.s32.totalorder %v412, 15
  %vm669 = vcmp.lt.s32.totalorder %v413, 15
  %vm670 = vcmp.lt.s32.totalorder %v414, 15
  %v671 = vrot.slane %v62, 7
  %v672 = vrot.slane %v63, 7
  %v673 = vrot.slane %v64, 7
  %v674 = vrot.slane %v65, 7
  %v675 = vrot.slane %v66, 7
  %v676 = vrot.slane %v67, 7
  %v677 = vrot.slane %v68, 7
  %v678 = vrot.slane %v69, 7
  %v679 = vrot.slane %v70, 7
  %v680 = vrot.slane %v71, 7
  %v681 = vrot.slane %v72, 7
  %v682 = vrot.slane %v73, 7
  %v683 = vrot.slane %v74, 7
  %v684 = vrot.slane %v75, 7
  %v685 = vrot.slane %v76, 7
  %v686 = vrot.slane %v77, 7
  %v687 = vrot.slane %v78, 7
  %v688 = vrot.slane %v79, 7
  %v689 = vrot.slane %v80, 7
  %v690 = vrot.slane %v81, 7
  %v691 = vrot.slane %v82, 7
  %v692 = vrot.slane %v83, 7
  %v693 = vrot.slane %v84, 7
  %v694 = vrot.slane %v85, 7
  %v695 = vrot.slane %v86, 7
  %v696 = vrot.slane %v87, 7
  %v697 = vrot.slane %v88, 7
  %v698 = vrot.slane %v89, 7
  %v699 = vrot.slane %v90, 7
  %v700 = vrot.slane %v91, 7
  %v701 = vrot.slane %v92, 7
  %v702 = vrot.slane %v93, 7
  %v703 = vrot.slane %v127, 7
  %v704 = vrot.slane %v129, 7
  %v705 = vrot.slane %v131, 7
  %v706 = vrot.slane %v133, 7
  %v707 = vrot.slane %v135, 7
  %v708 = vrot.slane %v137, 7
  %v709 = vrot.slane %v139, 7
  %v710 = vrot.slane %v141, 7
  %v711 = vrot.slane %v143, 7
  %v712 = vrot.slane %v145, 7
  %v713 = vrot.slane %v147, 7
  %v714 = vrot.slane %v149, 7
  %v715 = vrot.slane %v151, 7
  %v716 = vrot.slane %v153, 7
  %v717 = vrot.slane %v155, 7
  %v718 = vrot.slane %v157, 7
  %v719 = vrot.slane %v159, 7
  %v720 = vrot.slane %v161, 7
  %v721 = vrot.slane %v163, 7
  %v722 = vrot.slane %v165, 7
  %v723 = vrot.slane %v167, 7
  %v724 = vrot.slane %v169, 7
  %v725 = vrot.slane %v171, 7
  %v726 = vrot.slane %v173, 7
  %v727 = vrot.slane %v175, 7
  %v728 = vrot.slane %v177, 7
  %v729 = vrot.slane %v179, 7
  %v730 = vrot.slane %v181, 7
  %v731 = vrot.slane %v183, 7
  %v732 = vrot.slane %v185, 7
  %v733 = vrot.slane %v187, 7
  %v734 = vrot.slane %v189, 7
  %vm735 = vcmp.lt.s32.totalorder %v223, 1
  %v736 = vsel %vm735, %v733, %v734
  %v737 = vsel %vm735, %v732, %v733
  %v738 = vsel %vm735, %v731, %v732
  %v739 = vsel %vm735, %v730, %v731
  %v740 = vsel %vm735, %v729, %v730
  %v741 = vsel %vm735, %v728, %v729
  %v742 = vsel %vm735, %v727, %v728
  %v743 = vsel %vm735, %v726, %v727
  %v744 = vsel %vm735, %v725, %v726
  %v745 = vsel %vm735, %v724, %v725
  %v746 = vsel %vm735, %v723, %v724
  %v747 = vsel %vm735, %v722, %v723
  %v748 = vsel %vm735, %v721, %v722
  %v749 = vsel %vm735, %v720, %v721
  %v750 = vsel %vm735, %v719, %v720
  %v751 = vsel %vm735, %v718, %v719
  %v752 = vsel %vm735, %v717, %v718
  %v753 = vsel %vm735, %v716, %v717
  %v754 = vsel %vm735, %v715, %v716
  %v755 = vsel %vm735, %v714, %v715
  %v756 = vsel %vm735, %v713, %v714
  %v757 = vsel %vm735, %v712, %v713
  %v758 = vsel %vm735, %v711, %v712
  %v759 = vsel %vm735, %v710, %v711
  %v760 = vsel %vm735, %v709, %v710
  %v761 = vsel %vm735, %v708, %v709
  %v762 = vsel %vm735, %v707, %v708
  %v763 = vsel %vm735, %v706, %v707
  %v764 = vsel %vm735, %v705, %v706
  %v765 = vsel %vm735, %v704, %v705
  %v766 = vsel %vm735, %v703, %v704
  %v767 = vsel %vm735, %v702, %v703
  %v768 = vsel %vm735, %v701, %v702
  %v769 = vsel %vm735, %v700, %v701
  %v770 = vsel %vm735, %v699, %v700
  %v771 = vsel %vm735, %v698, %v699
  %v772 = vsel %vm735, %v697, %v698
  %v773 = vsel %vm735, %v696, %v697
  %v774 = vsel %vm735, %v695, %v696
  %v775 = vsel %vm735, %v694, %v695
  %v776 = vsel %vm735, %v693, %v694
  %v777 = vsel %vm735, %v692, %v693
  %v778 = vsel %vm735, %v691, %v692
  %v779 = vsel %vm735, %v690, %v691
  %v780 = vsel %vm735, %v689, %v690
  %v781 = vsel %vm735, %v688, %v689
  %v782 = vsel %vm735, %v687, %v688
  %v783 = vsel %vm735, %v686, %v687
  %v784 = vsel %vm735, %v685, %v686
  %v785 = vsel %vm735, %v684, %v685
  %v786 = vsel %vm735, %v683, %v684
  %v787 = vsel %vm735, %v682, %v683
  %v788 = vsel %vm735, %v681, %v682
  %v789 = vsel %vm735, %v680, %v681
  %v790 = vsel %vm735, %v679, %v680
  %v791 = vsel %vm735, %v678, %v679
  %v792 = vsel %vm735, %v677, %v678
  %v793 = vsel %vm735, %v676, %v677
  %v794 = vsel %vm735, %v675, %v676
  %v795 = vsel %vm735, %v674, %v675
  %v796 = vsel %vm735, %v673, %v674
  %v797 = vsel %vm735, %v672, %v673
  %v798 = vsel %vm735, %v671, %v672
  %v799 = vsel %vm735, %v734, %v671
  %vm800 = vmand %vm415, %vm543
  %vm801 = vmand %vm416, %vm544
  %vm802 = vmand %vm417, %vm545
  %vm803 = vmand %vm418, %vm546
  %vm804 = vmand %vm419, %vm547
  %vm805 = vmand %vm420, %vm548
  %vm806 = vmand %vm421, %vm549
  %vm807 = vmand %vm422, %vm550
  %vm808 = vmand %vm423, %vm551
  %vm809 = vmand %vm424, %vm552
  %vm810 = vmand %vm425, %vm553
  %vm811 = vmand %vm426, %vm554
  %vm812 = vmand %vm427, %vm555
  %vm813 = vmand %vm428, %vm556
  %vm814 = vmand %vm429, %vm557
  %vm815 = vmand %vm430, %vm558
  %vm816 = vmand %vm431, %vm559
  %vm817 = vmand %vm432, %vm560
  %vm818 = vmand %vm433, %vm561
  %vm819 = vmand %vm434, %vm562
  %vm820 = vmand %vm435, %vm563
  %vm821 = vmand %vm436, %vm564
  %vm822 = vmand %vm437, %vm565
  %vm823 = vmand %vm438, %vm566
  %vm824 = vmand %vm439, %vm567
  %vm825 = vmand %vm440, %vm568
  %vm826 = vmand %vm441, %vm569
  %vm827 = vmand %vm442, %vm570
  %vm828 = vmand %vm443, %vm571
  %vm829 = vmand %vm444, %vm572
  %vm830 = vmand %vm445, %vm573
  %vm831 = vmand %vm446, %vm574
  %vm832 = vmand %vm447, %vm575
  %vm833 = vmand %vm448, %vm576
  %vm834 = vmand %vm449, %vm577
  %vm835 = vmand %vm450, %vm578
  %vm836 = vmand %vm451, %vm579
  %vm837 = vmand %vm452, %vm580
  %vm838 = vmand %vm453, %vm581
  %vm839 = vmand %vm454, %vm582
  %vm840 = vmand %vm455, %vm583
  %vm841 = vmand %vm456, %vm584
  %vm842 = vmand %vm457, %vm585
  %vm843 = vmand %vm458, %vm586
  %vm844 = vmand %vm459, %vm587
  %vm845 = vmand %vm460, %vm588
  %vm846 = vmand %vm461, %vm589
  %vm847 = vmand %vm462, %vm590
  %vm848 = vmand %vm463, %vm591
  %vm849 = vmand %vm464, %vm592
  %vm850 = vmand %vm465, %vm593
  %vm851 = vmand %vm466, %vm594
  %vm852 = vmand %vm467, %vm595
  %vm853 = vmand %vm468, %vm596
  %vm854 = vmand %vm469, %vm597
  %vm855 = vmand %vm470, %vm598
  %vm856 = vmand %vm471, %vm599
  %vm857 = vmand %vm472, %vm600
  %vm858 = vmand %vm473, %vm601
  %vm859 = vmand %vm474, %vm602
  %vm860 = vmand %vm475, %vm603
  %vm861 = vmand %vm476, %vm604
  %vm862 = vmand %vm477, %vm605
  %vm863 = vmand %vm478, %vm606
  %v864 = vsel %vm800, %v737, 0.0
  %v865 = vsel %vm801, %v736, 0.0
  %v866 = vsel %vm802, %v799, 0.0
  %v867 = vsel %vm803, %v798, 0.0
  %v868 = vsel %vm804, %v797, 0.0
  %v869 = vsel %vm805, %v796, 0.0
  %v870 = vsel %vm806, %v795, 0.0
  %v871 = vsel %vm807, %v794, 0.0
  %v872 = vsel %vm808, %v793, 0.0
  %v873 = vsel %vm809, %v792, 0.0
  %v874 = vsel %vm810, %v791, 0.0
  %v875 = vsel %vm811, %v790, 0.0
  %v876 = vsel %vm812, %v789, 0.0
  %v877 = vsel %vm813, %v788, 0.0
  %v878 = vsel %vm814, %v787, 0.0
  %v879 = vsel %vm815, %v786, 0.0
  %v880 = vsel %vm816, %v785, 0.0
  %v881 = vsel %vm817, %v784, 0.0
  %v882 = vsel %vm818, %v783, 0.0
  %v883 = vsel %vm819, %v782, 0.0
  %v884 = vsel %vm820, %v781, 0.0
  %v885 = vsel %vm821, %v780, 0.0
  %v886 = vsel %vm822, %v779, 0.0
  %v887 = vsel %vm823, %v778, 0.0
  %v888 = vsel %vm824, %v777, 0.0
  %v889 = vsel %vm825, %v776, 0.0
  %v890 = vsel %vm826, %v775, 0.0
  %v891 = vsel %vm827, %v774, 0.0
  %v892 = vsel %vm828, %v773, 0.0
  %v893 = vsel %vm829, %v772, 0.0
  %v894 = vsel %vm830, %v771, 0.0
  %v895 = vsel %vm831, %v770, 0.0
  %v896 = vsel %vm832, %v769, 0.0
  %v897 = vsel %vm833, %v768, 0.0
  %v898 = vsel %vm834, %v767, 0.0
  %v899 = vsel %vm835, %v766, 0.0
  %v900 = vsel %vm836, %v765, 0.0
  %v901 = vsel %vm837, %v764, 0.0
  %v902 = vsel %vm838, %v763, 0.0
  %v903 = vsel %vm839, %v762, 0.0
  %v904 = vsel %vm840, %v761, 0.0
  %v905 = vsel %vm841, %v760, 0.0
  %v906 = vsel %vm842, %v759, 0.0
  %v907 = vsel %vm843, %v758, 0.0
  %v908 = vsel %vm844, %v757, 0.0
  %v909 = vsel %vm845, %v756, 0.0
  %v910 = vsel %vm846, %v755, 0.0
  %v911 = vsel %vm847, %v754, 0.0
  %v912 = vsel %vm848, %v753, 0.0
  %v913 = vsel %vm849, %v752, 0.0
  %v914 = vsel %vm850, %v751, 0.0
  %v915 = vsel %vm851, %v750, 0.0
  %v916 = vsel %vm852, %v749, 0.0
  %v917 = vsel %vm853, %v748, 0.0
  %v918 = vsel %vm854, %v747, 0.0
  %v919 = vsel %vm855, %v746, 0.0
  %v920 = vsel %vm856, %v745, 0.0
  %v921 = vsel %vm857, %v744, 0.0
  %v922 = vsel %vm858, %v743, 0.0
  %v923 = vsel %vm859, %v742, 0.0
  %v924 = vsel %vm860, %v741, 0.0
  %v925 = vsel %vm861, %v740, 0.0
  %v926 = vsel %vm862, %v739, 0.0
  %v927 = vsel %vm863, %v738, 0.0
  %v928 = vpack.c.bf16 %v865, %v864
  %v929 = vpack.c.bf16 %v867, %v866
  %v930 = vpack.c.bf16 %v869, %v868
  %v931 = vpack.c.bf16 %v871, %v870
  %v932 = vpack.c.bf16 %v873, %v872
  %v933 = vpack.c.bf16 %v875, %v874
  %v934 = vpack.c.bf16 %v877, %v876
  %v935 = vpack.c.bf16 %v879, %v878
  %v936 = vpack.c.bf16 %v881, %v880
  %v937 = vpack.c.bf16 %v883, %v882
  %v938 = vpack.c.bf16 %v885, %v884
  %v939 = vpack.c.bf16 %v887, %v886
  %v940 = vpack.c.bf16 %v889, %v888
  %v941 = vpack.c.bf16 %v891, %v890
  %v942 = vpack.c.bf16 %v893, %v892
  %v943 = vpack.c.bf16 %v895, %v894
  %v944 = vpack.c.bf16 %v897, %v896
  %v945 = vpack.c.bf16 %v899, %v898
  %v946 = vpack.c.bf16 %v901, %v900
  %v947 = vpack.c.bf16 %v903, %v902
  %v948 = vpack.c.bf16 %v905, %v904
  %v949 = vpack.c.bf16 %v907, %v906
  %v950 = vpack.c.bf16 %v909, %v908
  %v951 = vpack.c.bf16 %v911, %v910
  %v952 = vpack.c.bf16 %v913, %v912
  %v953 = vpack.c.bf16 %v915, %v914
  %v954 = vpack.c.bf16 %v917, %v916
  %v955 = vpack.c.bf16 %v919, %v918
  %v956 = vpack.c.bf16 %v921, %v920
  %v957 = vpack.c.bf16 %v923, %v922
  %v958 = vpack.c.bf16 %v925, %v924
  %v959 = vpack.c.bf16 %v927, %v926
  %v960 = vsel %vm415, %v187, 0.0
  %v961 = vsel %vm416, %v189, 0.0
  %v962 = vsel %vm417, %v62, 0.0
  %v963 = vsel %vm418, %v63, 0.0
  %v964 = vsel %vm419, %v64, 0.0
  %v965 = vsel %vm420, %v65, 0.0
  %v966 = vsel %vm421, %v66, 0.0
  %v967 = vsel %vm422, %v67, 0.0
  %v968 = vsel %vm423, %v68, 0.0
  %v969 = vsel %vm424, %v69, 0.0
  %v970 = vsel %vm425, %v70, 0.0
  %v971 = vsel %vm426, %v71, 0.0
  %v972 = vsel %vm427, %v72, 0.0
  %v973 = vsel %vm428, %v73, 0.0
  %v974 = vsel %vm429, %v74, 0.0
  %v975 = vsel %vm430, %v75, 0.0
  %v976 = vsel %vm431, %v76, 0.0
  %v977 = vsel %vm432, %v77, 0.0
  %v978 = vsel %vm433, %v78, 0.0
  %v979 = vsel %vm434, %v79, 0.0
  %v980 = vsel %vm435, %v80, 0.0
  %v981 = vsel %vm436, %v81, 0.0
  %v982 = vsel %vm437, %v82, 0.0
  %v983 = vsel %vm438, %v83, 0.0
  %v984 = vsel %vm439, %v84, 0.0
  %v985 = vsel %vm440, %v85, 0.0
  %v986 = vsel %vm441, %v86, 0.0
  %v987 = vsel %vm442, %v87, 0.0
  %v988 = vsel %vm443, %v88, 0.0
  %v989 = vsel %vm444, %v89, 0.0
  %v990 = vsel %vm445, %v90, 0.0
  %v991 = vsel %vm446, %v91, 0.0
  %v992 = vsel %vm447, %v92, 0.0
  %v993 = vsel %vm448, %v93, 0.0
  %v994 = vsel %vm449, %v127, 0.0
  %v995 = vsel %vm450, %v129, 0.0
  %v996 = vsel %vm451, %v131, 0.0
  %v997 = vsel %vm452, %v133, 0.0
  %v998 = vsel %vm453, %v135, 0.0
  %v999 = vsel %vm454, %v137, 0.0
  %v1000 = vsel %vm455, %v139, 0.0
  %v1001 = vsel %vm456, %v141, 0.0
  %v1002 = vsel %vm457, %v143, 0.0
  %v1003 = vsel %vm458, %v145, 0.0
  %v1004 = vsel %vm459, %v147, 0.0
  %v1005 = vsel %vm460, %v149, 0.0
  %v1006 = vsel %vm461, %v151, 0.0
  %v1007 = vsel %vm462, %v153, 0.0
  %v1008 = vsel %vm463, %v155, 0.0
  %v1009 = vsel %vm464, %v157, 0.0
  %v1010 = vsel %vm465, %v159, 0.0
  %v1011 = vsel %vm466, %v161, 0.0
  %v1012 = vsel %vm467, %v163, 0.0
  %v1013 = vsel %vm468, %v165, 0.0
  %v1014 = vsel %vm469, %v167, 0.0
  %v1015 = vsel %vm470, %v169, 0.0
  %v1016 = vsel %vm471, %v171, 0.0
  %v1017 = vsel %vm472, %v173, 0.0
  %v1018 = vsel %vm473, %v175, 0.0
  %v1019 = vsel %vm474, %v177, 0.0
  %v1020 = vsel %vm475, %v179, 0.0
  %v1021 = vsel %vm476, %v181, 0.0
  %v1022 = vsel %vm477, %v183, 0.0
  %v1023 = vsel %vm478, %v185, 0.0
  %v1024 = vpack.c.bf16 %v961, %v960
  %v1025 = vpack.c.bf16 %v963, %v962
  %v1026 = vpack.c.bf16 %v965, %v964
  %v1027 = vpack.c.bf16 %v967, %v966
  %v1028 = vpack.c.bf16 %v969, %v968
  %v1029 = vpack.c.bf16 %v971, %v970
  %v1030 = vpack.c.bf16 %v973, %v972
  %v1031 = vpack.c.bf16 %v975, %v974
  %v1032 = vpack.c.bf16 %v977, %v976
  %v1033 = vpack.c.bf16 %v979, %v978
  %v1034 = vpack.c.bf16 %v981, %v980
  %v1035 = vpack.c.bf16 %v983, %v982
  %v1036 = vpack.c.bf16 %v985, %v984
  %v1037 = vpack.c.bf16 %v987, %v986
  %v1038 = vpack.c.bf16 %v989, %v988
  %v1039 = vpack.c.bf16 %v991, %v990
  %v1040 = vpack.c.bf16 %v993, %v992
  %v1041 = vpack.c.bf16 %v995, %v994
  %v1042 = vpack.c.bf16 %v997, %v996
  %v1043 = vpack.c.bf16 %v999, %v998
  %v1044 = vpack.c.bf16 %v1001, %v1000
  %v1045 = vpack.c.bf16 %v1003, %v1002
  %v1046 = vpack.c.bf16 %v1005, %v1004
  %v1047 = vpack.c.bf16 %v1007, %v1006
  %v1048 = vpack.c.bf16 %v1009, %v1008
  %v1049 = vpack.c.bf16 %v1011, %v1010
  %v1050 = vpack.c.bf16 %v1013, %v1012
  %v1051 = vpack.c.bf16 %v1015, %v1014
  %v1052 = vpack.c.bf16 %v1017, %v1016
  %v1053 = vpack.c.bf16 %v1019, %v1018
  %v1054 = vpack.c.bf16 %v1021, %v1020
  %v1055 = vpack.c.bf16 %v1023, %v1022
  %v1056 = vrot.slane %v62, 1
  %v1057 = vrot.slane %v63, 1
  %v1058 = vrot.slane %v64, 1
  %v1059 = vrot.slane %v65, 1
  %v1060 = vrot.slane %v66, 1
  %v1061 = vrot.slane %v67, 1
  %v1062 = vrot.slane %v68, 1
  %v1063 = vrot.slane %v69, 1
  %v1064 = vrot.slane %v70, 1
  %v1065 = vrot.slane %v71, 1
  %v1066 = vrot.slane %v72, 1
  %v1067 = vrot.slane %v73, 1
  %v1068 = vrot.slane %v74, 1
  %v1069 = vrot.slane %v75, 1
  %v1070 = vrot.slane %v76, 1
  %v1071 = vrot.slane %v77, 1
  %v1072 = vrot.slane %v78, 1
  %v1073 = vrot.slane %v79, 1
  %v1074 = vrot.slane %v80, 1
  %v1075 = vrot.slane %v81, 1
  %v1076 = vrot.slane %v82, 1
  %v1077 = vrot.slane %v83, 1
  %v1078 = vrot.slane %v84, 1
  %v1079 = vrot.slane %v85, 1
  %v1080 = vrot.slane %v86, 1
  %v1081 = vrot.slane %v87, 1
  %v1082 = vrot.slane %v88, 1
  %v1083 = vrot.slane %v89, 1
  %v1084 = vrot.slane %v90, 1
  %v1085 = vrot.slane %v91, 1
  %v1086 = vrot.slane %v92, 1
  %v1087 = vrot.slane %v93, 1
  %v1088 = vrot.slane %v127, 1
  %v1089 = vrot.slane %v129, 1
  %v1090 = vrot.slane %v131, 1
  %v1091 = vrot.slane %v133, 1
  %v1092 = vrot.slane %v135, 1
  %v1093 = vrot.slane %v137, 1
  %v1094 = vrot.slane %v139, 1
  %v1095 = vrot.slane %v141, 1
  %v1096 = vrot.slane %v143, 1
  %v1097 = vrot.slane %v145, 1
  %v1098 = vrot.slane %v147, 1
  %v1099 = vrot.slane %v149, 1
  %v1100 = vrot.slane %v151, 1
  %v1101 = vrot.slane %v153, 1
  %v1102 = vrot.slane %v155, 1
  %v1103 = vrot.slane %v157, 1
  %v1104 = vrot.slane %v159, 1
  %v1105 = vrot.slane %v161, 1
  %v1106 = vrot.slane %v163, 1
  %v1107 = vrot.slane %v165, 1
  %v1108 = vrot.slane %v167, 1
  %v1109 = vrot.slane %v169, 1
  %v1110 = vrot.slane %v171, 1
  %v1111 = vrot.slane %v173, 1
  %v1112 = vrot.slane %v175, 1
  %v1113 = vrot.slane %v177, 1
  %v1114 = vrot.slane %v179, 1
  %v1115 = vrot.slane %v181, 1
  %v1116 = vrot.slane %v183, 1
  %v1117 = vrot.slane %v185, 1
  %v1118 = vrot.slane %v187, 1
  %v1119 = vrot.slane %v189, 1
  %vm1120 = vcmp.lt.s32.totalorder %v223, 7
  %v1121 = vsel %vm1120, %v1118, %v1119
  %v1122 = vsel %vm1120, %v1117, %v1118
  %v1123 = vsel %vm1120, %v1116, %v1117
  %v1124 = vsel %vm1120, %v1115, %v1116
  %v1125 = vsel %vm1120, %v1114, %v1115
  %v1126 = vsel %vm1120, %v1113, %v1114
  %v1127 = vsel %vm1120, %v1112, %v1113
  %v1128 = vsel %vm1120, %v1111, %v1112
  %v1129 = vsel %vm1120, %v1110, %v1111
  %v1130 = vsel %vm1120, %v1109, %v1110
  %v1131 = vsel %vm1120, %v1108, %v1109
  %v1132 = vsel %vm1120, %v1107, %v1108
  %v1133 = vsel %vm1120, %v1106, %v1107
  %v1134 = vsel %vm1120, %v1105, %v1106
  %v1135 = vsel %vm1120, %v1104, %v1105
  %v1136 = vsel %vm1120, %v1103, %v1104
  %v1137 = vsel %vm1120, %v1102, %v1103
  %v1138 = vsel %vm1120, %v1101, %v1102
  %v1139 = vsel %vm1120, %v1100, %v1101
  %v1140 = vsel %vm1120, %v1099, %v1100
  %v1141 = vsel %vm1120, %v1098, %v1099
  %v1142 = vsel %vm1120, %v1097, %v1098
  %v1143 = vsel %vm1120, %v1096, %v1097
  %v1144 = vsel %vm1120, %v1095, %v1096
  %v1145 = vsel %vm1120, %v1094, %v1095
  %v1146 = vsel %vm1120, %v1093, %v1094
  %v1147 = vsel %vm1120, %v1092, %v1093
  %v1148 = vsel %vm1120, %v1091, %v1092
  %v1149 = vsel %vm1120, %v1090, %v1091
  %v1150 = vsel %vm1120, %v1089, %v1090
  %v1151 = vsel %vm1120, %v1088, %v1089
  %v1152 = vsel %vm1120, %v1087, %v1088
  %v1153 = vsel %vm1120, %v1086, %v1087
  %v1154 = vsel %vm1120, %v1085, %v1086
  %v1155 = vsel %vm1120, %v1084, %v1085
  %v1156 = vsel %vm1120, %v1083, %v1084
  %v1157 = vsel %vm1120, %v1082, %v1083
  %v1158 = vsel %vm1120, %v1081, %v1082
  %v1159 = vsel %vm1120, %v1080, %v1081
  %v1160 = vsel %vm1120, %v1079, %v1080
  %v1161 = vsel %vm1120, %v1078, %v1079
  %v1162 = vsel %vm1120, %v1077, %v1078
  %v1163 = vsel %vm1120, %v1076, %v1077
  %v1164 = vsel %vm1120, %v1075, %v1076
  %v1165 = vsel %vm1120, %v1074, %v1075
  %v1166 = vsel %vm1120, %v1073, %v1074
  %v1167 = vsel %vm1120, %v1072, %v1073
  %v1168 = vsel %vm1120, %v1071, %v1072
  %v1169 = vsel %vm1120, %v1070, %v1071
  %v1170 = vsel %vm1120, %v1069, %v1070
  %v1171 = vsel %vm1120, %v1068, %v1069
  %v1172 = vsel %vm1120, %v1067, %v1068
  %v1173 = vsel %vm1120, %v1066, %v1067
  %v1174 = vsel %vm1120, %v1065, %v1066
  %v1175 = vsel %vm1120, %v1064, %v1065
  %v1176 = vsel %vm1120, %v1063, %v1064
  %v1177 = vsel %vm1120, %v1062, %v1063
  %v1178 = vsel %vm1120, %v1061, %v1062
  %v1179 = vsel %vm1120, %v1060, %v1061
  %v1180 = vsel %vm1120, %v1059, %v1060
  %v1181 = vsel %vm1120, %v1058, %v1059
  %v1182 = vsel %vm1120, %v1057, %v1058
  %v1183 = vsel %vm1120, %v1056, %v1057
  %v1184 = vsel %vm1120, %v1119, %v1056
  %vm1185 = vmand %vm415, %vm607
  %vm1186 = vmand %vm416, %vm608
  %vm1187 = vmand %vm417, %vm609
  %vm1188 = vmand %vm418, %vm610
  %vm1189 = vmand %vm419, %vm611
  %vm1190 = vmand %vm420, %vm612
  %vm1191 = vmand %vm421, %vm613
  %vm1192 = vmand %vm422, %vm614
  %vm1193 = vmand %vm423, %vm615
  %vm1194 = vmand %vm424, %vm616
  %vm1195 = vmand %vm425, %vm617
  %vm1196 = vmand %vm426, %vm618
  %vm1197 = vmand %vm427, %vm619
  %vm1198 = vmand %vm428, %vm620
  %vm1199 = vmand %vm429, %vm621
  %vm1200 = vmand %vm430, %vm622
  %vm1201 = vmand %vm431, %vm623
  %vm1202 = vmand %vm432, %vm624
  %vm1203 = vmand %vm433, %vm625
  %vm1204 = vmand %vm434, %vm626
  %vm1205 = vmand %vm435, %vm627
  %vm1206 = vmand %vm436, %vm628
  %vm1207 = vmand %vm437, %vm629
  %vm1208 = vmand %vm438, %vm630
  %vm1209 = vmand %vm439, %vm631
  %vm1210 = vmand %vm440, %vm632
  %vm1211 = vmand %vm441, %vm633
  %vm1212 = vmand %vm442, %vm634
  %vm1213 = vmand %vm443, %vm635
  %vm1214 = vmand %vm444, %vm636
  %vm1215 = vmand %vm445, %vm637
  %vm1216 = vmand %vm446, %vm638
  %vm1217 = vmand %vm447, %vm639
  %vm1218 = vmand %vm448, %vm640
  %vm1219 = vmand %vm449, %vm641
  %vm1220 = vmand %vm450, %vm642
  %vm1221 = vmand %vm451, %vm643
  %vm1222 = vmand %vm452, %vm644
  %vm1223 = vmand %vm453, %vm645
  %vm1224 = vmand %vm454, %vm646
  %vm1225 = vmand %vm455, %vm647
  %vm1226 = vmand %vm456, %vm648
  %vm1227 = vmand %vm457, %vm649
  %vm1228 = vmand %vm458, %vm650
  %vm1229 = vmand %vm459, %vm651
  %vm1230 = vmand %vm460, %vm652
  %vm1231 = vmand %vm461, %vm653
  %vm1232 = vmand %vm462, %vm654
  %vm1233 = vmand %vm463, %vm655
  %vm1234 = vmand %vm464, %vm656
  %vm1235 = vmand %vm465, %vm657
  %vm1236 = vmand %vm466, %vm658
  %vm1237 = vmand %vm467, %vm659
  %vm1238 = vmand %vm468, %vm660
  %vm1239 = vmand %vm469, %vm661
  %vm1240 = vmand %vm470, %vm662
  %vm1241 = vmand %vm471, %vm663
  %vm1242 = vmand %vm472, %vm664
  %vm1243 = vmand %vm473, %vm665
  %vm1244 = vmand %vm474, %vm666
  %vm1245 = vmand %vm475, %vm667
  %vm1246 = vmand %vm476, %vm668
  %vm1247 = vmand %vm477, %vm669
  %vm1248 = vmand %vm478, %vm670
  %v1249 = vsel %vm1185, %v1121, 0.0
  %v1250 = vsel %vm1186, %v1184, 0.0
  %v1251 = vsel %vm1187, %v1183, 0.0
  %v1252 = vsel %vm1188, %v1182, 0.0
  %v1253 = vsel %vm1189, %v1181, 0.0
  %v1254 = vsel %vm1190, %v1180, 0.0
  %v1255 = vsel %vm1191, %v1179, 0.0
  %v1256 = vsel %vm1192, %v1178, 0.0
  %v1257 = vsel %vm1193, %v1177, 0.0
  %v1258 = vsel %vm1194, %v1176, 0.0
  %v1259 = vsel %vm1195, %v1175, 0.0
  %v1260 = vsel %vm1196, %v1174, 0.0
  %v1261 = vsel %vm1197, %v1173, 0.0
  %v1262 = vsel %vm1198, %v1172, 0.0
  %v1263 = vsel %vm1199, %v1171, 0.0
  %v1264 = vsel %vm1200, %v1170, 0.0
  %v1265 = vsel %vm1201, %v1169, 0.0
  %v1266 = vsel %vm1202, %v1168, 0.0
  %v1267 = vsel %vm1203, %v1167, 0.0
  %v1268 = vsel %vm1204, %v1166, 0.0
  %v1269 = vsel %vm1205, %v1165, 0.0
  %v1270 = vsel %vm1206, %v1164, 0.0
  %v1271 = vsel %vm1207, %v1163, 0.0
  %v1272 = vsel %vm1208, %v1162, 0.0
  %v1273 = vsel %vm1209, %v1161, 0.0
  %v1274 = vsel %vm1210, %v1160, 0.0
  %v1275 = vsel %vm1211, %v1159, 0.0
  %v1276 = vsel %vm1212, %v1158, 0.0
  %v1277 = vsel %vm1213, %v1157, 0.0
  %v1278 = vsel %vm1214, %v1156, 0.0
  %v1279 = vsel %vm1215, %v1155, 0.0
  %v1280 = vsel %vm1216, %v1154, 0.0
  %v1281 = vsel %vm1217, %v1153, 0.0
  %v1282 = vsel %vm1218, %v1152, 0.0
  %v1283 = vsel %vm1219, %v1151, 0.0
  %v1284 = vsel %vm1220, %v1150, 0.0
  %v1285 = vsel %vm1221, %v1149, 0.0
  %v1286 = vsel %vm1222, %v1148, 0.0
  %v1287 = vsel %vm1223, %v1147, 0.0
  %v1288 = vsel %vm1224, %v1146, 0.0
  %v1289 = vsel %vm1225, %v1145, 0.0
  %v1290 = vsel %vm1226, %v1144, 0.0
  %v1291 = vsel %vm1227, %v1143, 0.0
  %v1292 = vsel %vm1228, %v1142, 0.0
  %v1293 = vsel %vm1229, %v1141, 0.0
  %v1294 = vsel %vm1230, %v1140, 0.0
  %v1295 = vsel %vm1231, %v1139, 0.0
  %v1296 = vsel %vm1232, %v1138, 0.0
  %v1297 = vsel %vm1233, %v1137, 0.0
  %v1298 = vsel %vm1234, %v1136, 0.0
  %v1299 = vsel %vm1235, %v1135, 0.0
  %v1300 = vsel %vm1236, %v1134, 0.0
  %v1301 = vsel %vm1237, %v1133, 0.0
  %v1302 = vsel %vm1238, %v1132, 0.0
  %v1303 = vsel %vm1239, %v1131, 0.0
  %v1304 = vsel %vm1240, %v1130, 0.0
  %v1305 = vsel %vm1241, %v1129, 0.0
  %v1306 = vsel %vm1242, %v1128, 0.0
  %v1307 = vsel %vm1243, %v1127, 0.0
  %v1308 = vsel %vm1244, %v1126, 0.0
  %v1309 = vsel %vm1245, %v1125, 0.0
  %v1310 = vsel %vm1246, %v1124, 0.0
  %v1311 = vsel %vm1247, %v1123, 0.0
  %v1312 = vsel %vm1248, %v1122, 0.0
  %v1313 = vpack.c.bf16 %v1250, %v1249
  %v1314 = vpack.c.bf16 %v1252, %v1251
  %v1315 = vpack.c.bf16 %v1254, %v1253
  %v1316 = vpack.c.bf16 %v1256, %v1255
  %v1317 = vpack.c.bf16 %v1258, %v1257
  %v1318 = vpack.c.bf16 %v1260, %v1259
  %v1319 = vpack.c.bf16 %v1262, %v1261
  %v1320 = vpack.c.bf16 %v1264, %v1263
  %v1321 = vpack.c.bf16 %v1266, %v1265
  %v1322 = vpack.c.bf16 %v1268, %v1267
  %v1323 = vpack.c.bf16 %v1270, %v1269
  %v1324 = vpack.c.bf16 %v1272, %v1271
  %v1325 = vpack.c.bf16 %v1274, %v1273
  %v1326 = vpack.c.bf16 %v1276, %v1275
  %v1327 = vpack.c.bf16 %v1278, %v1277
  %v1328 = vpack.c.bf16 %v1280, %v1279
  %v1329 = vpack.c.bf16 %v1282, %v1281
  %v1330 = vpack.c.bf16 %v1284, %v1283
  %v1331 = vpack.c.bf16 %v1286, %v1285
  %v1332 = vpack.c.bf16 %v1288, %v1287
  %v1333 = vpack.c.bf16 %v1290, %v1289
  %v1334 = vpack.c.bf16 %v1292, %v1291
  %v1335 = vpack.c.bf16 %v1294, %v1293
  %v1336 = vpack.c.bf16 %v1296, %v1295
  %v1337 = vpack.c.bf16 %v1298, %v1297
  %v1338 = vpack.c.bf16 %v1300, %v1299
  %v1339 = vpack.c.bf16 %v1302, %v1301
  %v1340 = vpack.c.bf16 %v1304, %v1303
  %v1341 = vpack.c.bf16 %v1306, %v1305
  %v1342 = vpack.c.bf16 %v1308, %v1307
  %v1343 = vpack.c.bf16 %v1310, %v1309
  %v1344 = vpack.c.bf16 %v1312, %v1311
  %v1345 = vsel %vm543, %v799, 0.0
  %v1346 = vsel %vm544, %v798, 0.0
  %v1347 = vsel %vm545, %v797, 0.0
  %v1348 = vsel %vm546, %v796, 0.0
  %v1349 = vsel %vm547, %v795, 0.0
  %v1350 = vsel %vm548, %v794, 0.0
  %v1351 = vsel %vm549, %v793, 0.0
  %v1352 = vsel %vm550, %v792, 0.0
  %v1353 = vsel %vm551, %v791, 0.0
  %v1354 = vsel %vm552, %v790, 0.0
  %v1355 = vsel %vm553, %v789, 0.0
  %v1356 = vsel %vm554, %v788, 0.0
  %v1357 = vsel %vm555, %v787, 0.0
  %v1358 = vsel %vm556, %v786, 0.0
  %v1359 = vsel %vm557, %v785, 0.0
  %v1360 = vsel %vm558, %v784, 0.0
  %v1361 = vsel %vm559, %v783, 0.0
  %v1362 = vsel %vm560, %v782, 0.0
  %v1363 = vsel %vm561, %v781, 0.0
  %v1364 = vsel %vm562, %v780, 0.0
  %v1365 = vsel %vm563, %v779, 0.0
  %v1366 = vsel %vm564, %v778, 0.0
  %v1367 = vsel %vm565, %v777, 0.0
  %v1368 = vsel %vm566, %v776, 0.0
  %v1369 = vsel %vm567, %v775, 0.0
  %v1370 = vsel %vm568, %v774, 0.0
  %v1371 = vsel %vm569, %v773, 0.0
  %v1372 = vsel %vm570, %v772, 0.0
  %v1373 = vsel %vm571, %v771, 0.0
  %v1374 = vsel %vm572, %v770, 0.0
  %v1375 = vsel %vm573, %v769, 0.0
  %v1376 = vsel %vm574, %v768, 0.0
  %v1377 = vsel %vm575, %v767, 0.0
  %v1378 = vsel %vm576, %v766, 0.0
  %v1379 = vsel %vm577, %v765, 0.0
  %v1380 = vsel %vm578, %v764, 0.0
  %v1381 = vsel %vm579, %v763, 0.0
  %v1382 = vsel %vm580, %v762, 0.0
  %v1383 = vsel %vm581, %v761, 0.0
  %v1384 = vsel %vm582, %v760, 0.0
  %v1385 = vsel %vm583, %v759, 0.0
  %v1386 = vsel %vm584, %v758, 0.0
  %v1387 = vsel %vm585, %v757, 0.0
  %v1388 = vsel %vm586, %v756, 0.0
  %v1389 = vsel %vm587, %v755, 0.0
  %v1390 = vsel %vm588, %v754, 0.0
  %v1391 = vsel %vm589, %v753, 0.0
  %v1392 = vsel %vm590, %v752, 0.0
  %v1393 = vsel %vm591, %v751, 0.0
  %v1394 = vsel %vm592, %v750, 0.0
  %v1395 = vsel %vm593, %v749, 0.0
  %v1396 = vsel %vm594, %v748, 0.0
  %v1397 = vsel %vm595, %v747, 0.0
  %v1398 = vsel %vm596, %v746, 0.0
  %v1399 = vsel %vm597, %v745, 0.0
  %v1400 = vsel %vm598, %v744, 0.0
  %v1401 = vsel %vm599, %v743, 0.0
  %v1402 = vsel %vm600, %v742, 0.0
  %v1403 = vsel %vm601, %v741, 0.0
  %v1404 = vsel %vm602, %v740, 0.0
  %v1405 = vsel %vm603, %v739, 0.0
  %v1406 = vsel %vm604, %v738, 0.0
  %v1407 = vsel %vm605, %v737, 0.0
  %v1408 = vsel %vm606, %v736, 0.0
  %v1409 = vpack.c.bf16 %v1346, %v1345
  %v1410 = vpack.c.bf16 %v1348, %v1347
  %v1411 = vpack.c.bf16 %v1350, %v1349
  %v1412 = vpack.c.bf16 %v1352, %v1351
  %v1413 = vpack.c.bf16 %v1354, %v1353
  %v1414 = vpack.c.bf16 %v1356, %v1355
  %v1415 = vpack.c.bf16 %v1358, %v1357
  %v1416 = vpack.c.bf16 %v1360, %v1359
  %v1417 = vpack.c.bf16 %v1362, %v1361
  %v1418 = vpack.c.bf16 %v1364, %v1363
  %v1419 = vpack.c.bf16 %v1366, %v1365
  %v1420 = vpack.c.bf16 %v1368, %v1367
  %v1421 = vpack.c.bf16 %v1370, %v1369
  %v1422 = vpack.c.bf16 %v1372, %v1371
  %v1423 = vpack.c.bf16 %v1374, %v1373
  %v1424 = vpack.c.bf16 %v1376, %v1375
  %v1425 = vpack.c.bf16 %v1378, %v1377
  %v1426 = vpack.c.bf16 %v1380, %v1379
  %v1427 = vpack.c.bf16 %v1382, %v1381
  %v1428 = vpack.c.bf16 %v1384, %v1383
  %v1429 = vpack.c.bf16 %v1386, %v1385
  %v1430 = vpack.c.bf16 %v1388, %v1387
  %v1431 = vpack.c.bf16 %v1390, %v1389
  %v1432 = vpack.c.bf16 %v1392, %v1391
  %v1433 = vpack.c.bf16 %v1394, %v1393
  %v1434 = vpack.c.bf16 %v1396, %v1395
  %v1435 = vpack.c.bf16 %v1398, %v1397
  %v1436 = vpack.c.bf16 %v1400, %v1399
  %v1437 = vpack.c.bf16 %v1402, %v1401
  %v1438 = vpack.c.bf16 %v1404, %v1403
  %v1439 = vpack.c.bf16 %v1406, %v1405
  %v1440 = vpack.c.bf16 %v1408, %v1407
  %v1441 = vpack.c.bf16 %v63, %v62
  %v1442 = vpack.c.bf16 %v65, %v64
  %v1443 = vpack.c.bf16 %v67, %v66
  %v1444 = vpack.c.bf16 %v69, %v68
  %v1445 = vpack.c.bf16 %v71, %v70
  %v1446 = vpack.c.bf16 %v73, %v72
  %v1447 = vpack.c.bf16 %v75, %v74
  %v1448 = vpack.c.bf16 %v77, %v76
  %v1449 = vpack.c.bf16 %v79, %v78
  %v1450 = vpack.c.bf16 %v81, %v80
  %v1451 = vpack.c.bf16 %v83, %v82
  %v1452 = vpack.c.bf16 %v85, %v84
  %v1453 = vpack.c.bf16 %v87, %v86
  %v1454 = vpack.c.bf16 %v89, %v88
  %v1455 = vpack.c.bf16 %v91, %v90
  %v1456 = vpack.c.bf16 %v93, %v92
  %v1457 = vpack.c.bf16 %v129, %v127
  %v1458 = vpack.c.bf16 %v133, %v131
  %v1459 = vpack.c.bf16 %v137, %v135
  %v1460 = vpack.c.bf16 %v141, %v139
  %v1461 = vpack.c.bf16 %v145, %v143
  %v1462 = vpack.c.bf16 %v149, %v147
  %v1463 = vpack.c.bf16 %v153, %v151
  %v1464 = vpack.c.bf16 %v157, %v155
  %v1465 = vpack.c.bf16 %v161, %v159
  %v1466 = vpack.c.bf16 %v165, %v163
  %v1467 = vpack.c.bf16 %v169, %v167
  %v1468 = vpack.c.bf16 %v173, %v171
  %v1469 = vpack.c.bf16 %v177, %v175
  %v1470 = vpack.c.bf16 %v181, %v179
  %v1471 = vpack.c.bf16 %v185, %v183
  %v1472 = vpack.c.bf16 %v189, %v187
  %v1473 = vsel %vm607, %v1183, 0.0
  %v1474 = vsel %vm608, %v1182, 0.0
  %v1475 = vsel %vm609, %v1181, 0.0
  %v1476 = vsel %vm610, %v1180, 0.0
  %v1477 = vsel %vm611, %v1179, 0.0
  %v1478 = vsel %vm612, %v1178, 0.0
  %v1479 = vsel %vm613, %v1177, 0.0
  %v1480 = vsel %vm614, %v1176, 0.0
  %v1481 = vsel %vm615, %v1175, 0.0
  %v1482 = vsel %vm616, %v1174, 0.0
  %v1483 = vsel %vm617, %v1173, 0.0
  %v1484 = vsel %vm618, %v1172, 0.0
  %v1485 = vsel %vm619, %v1171, 0.0
  %v1486 = vsel %vm620, %v1170, 0.0
  %v1487 = vsel %vm621, %v1169, 0.0
  %v1488 = vsel %vm622, %v1168, 0.0
  %v1489 = vsel %vm623, %v1167, 0.0
  %v1490 = vsel %vm624, %v1166, 0.0
  %v1491 = vsel %vm625, %v1165, 0.0
  %v1492 = vsel %vm626, %v1164, 0.0
  %v1493 = vsel %vm627, %v1163, 0.0
  %v1494 = vsel %vm628, %v1162, 0.0
  %v1495 = vsel %vm629, %v1161, 0.0
  %v1496 = vsel %vm630, %v1160, 0.0
  %v1497 = vsel %vm631, %v1159, 0.0
  %v1498 = vsel %vm632, %v1158, 0.0
  %v1499 = vsel %vm633, %v1157, 0.0
  %v1500 = vsel %vm634, %v1156, 0.0
  %v1501 = vsel %vm635, %v1155, 0.0
  %v1502 = vsel %vm636, %v1154, 0.0
  %v1503 = vsel %vm637, %v1153, 0.0
  %v1504 = vsel %vm638, %v1152, 0.0
  %v1505 = vsel %vm639, %v1151, 0.0
  %v1506 = vsel %vm640, %v1150, 0.0
  %v1507 = vsel %vm641, %v1149, 0.0
  %v1508 = vsel %vm642, %v1148, 0.0
  %v1509 = vsel %vm643, %v1147, 0.0
  %v1510 = vsel %vm644, %v1146, 0.0
  %v1511 = vsel %vm645, %v1145, 0.0
  %v1512 = vsel %vm646, %v1144, 0.0
  %v1513 = vsel %vm647, %v1143, 0.0
  %v1514 = vsel %vm648, %v1142, 0.0
  %v1515 = vsel %vm649, %v1141, 0.0
  %v1516 = vsel %vm650, %v1140, 0.0
  %v1517 = vsel %vm651, %v1139, 0.0
  %v1518 = vsel %vm652, %v1138, 0.0
  %v1519 = vsel %vm653, %v1137, 0.0
  %v1520 = vsel %vm654, %v1136, 0.0
  %v1521 = vsel %vm655, %v1135, 0.0
  %v1522 = vsel %vm656, %v1134, 0.0
  %v1523 = vsel %vm657, %v1133, 0.0
  %v1524 = vsel %vm658, %v1132, 0.0
  %v1525 = vsel %vm659, %v1131, 0.0
  %v1526 = vsel %vm660, %v1130, 0.0
  %v1527 = vsel %vm661, %v1129, 0.0
  %v1528 = vsel %vm662, %v1128, 0.0
  %v1529 = vsel %vm663, %v1127, 0.0
  %v1530 = vsel %vm664, %v1126, 0.0
  %v1531 = vsel %vm665, %v1125, 0.0
  %v1532 = vsel %vm666, %v1124, 0.0
  %v1533 = vsel %vm667, %v1123, 0.0
  %v1534 = vsel %vm668, %v1122, 0.0
  %v1535 = vsel %vm669, %v1121, 0.0
  %v1536 = vsel %vm670, %v1184, 0.0
  %v1537 = vpack.c.bf16 %v1474, %v1473
  %v1538 = vpack.c.bf16 %v1476, %v1475
  %v1539 = vpack.c.bf16 %v1478, %v1477
  %v1540 = vpack.c.bf16 %v1480, %v1479
  %v1541 = vpack.c.bf16 %v1482, %v1481
  %v1542 = vpack.c.bf16 %v1484, %v1483
  %v1543 = vpack.c.bf16 %v1486, %v1485
  %v1544 = vpack.c.bf16 %v1488, %v1487
  %v1545 = vpack.c.bf16 %v1490, %v1489
  %v1546 = vpack.c.bf16 %v1492, %v1491
  %v1547 = vpack.c.bf16 %v1494, %v1493
  %v1548 = vpack.c.bf16 %v1496, %v1495
  %v1549 = vpack.c.bf16 %v1498, %v1497
  %v1550 = vpack.c.bf16 %v1500, %v1499
  %v1551 = vpack.c.bf16 %v1502, %v1501
  %v1552 = vpack.c.bf16 %v1504, %v1503
  %v1553 = vpack.c.bf16 %v1506, %v1505
  %v1554 = vpack.c.bf16 %v1508, %v1507
  %v1555 = vpack.c.bf16 %v1510, %v1509
  %v1556 = vpack.c.bf16 %v1512, %v1511
  %v1557 = vpack.c.bf16 %v1514, %v1513
  %v1558 = vpack.c.bf16 %v1516, %v1515
  %v1559 = vpack.c.bf16 %v1518, %v1517
  %v1560 = vpack.c.bf16 %v1520, %v1519
  %v1561 = vpack.c.bf16 %v1522, %v1521
  %v1562 = vpack.c.bf16 %v1524, %v1523
  %v1563 = vpack.c.bf16 %v1526, %v1525
  %v1564 = vpack.c.bf16 %v1528, %v1527
  %v1565 = vpack.c.bf16 %v1530, %v1529
  %v1566 = vpack.c.bf16 %v1532, %v1531
  %v1567 = vpack.c.bf16 %v1534, %v1533
  %v1568 = vpack.c.bf16 %v1536, %v1535
  %vm1569 = vmand %vm479, %vm543
  %vm1570 = vmand %vm480, %vm544
  %vm1571 = vmand %vm481, %vm545
  %vm1572 = vmand %vm482, %vm546
  %vm1573 = vmand %vm483, %vm547
  %vm1574 = vmand %vm484, %vm548
  %vm1575 = vmand %vm485, %vm549
  %vm1576 = vmand %vm486, %vm550
  %vm1577 = vmand %vm487, %vm551
  %vm1578 = vmand %vm488, %vm552
  %vm1579 = vmand %vm489, %vm553
  %vm1580 = vmand %vm490, %vm554
  %vm1581 = vmand %vm491, %vm555
  %vm1582 = vmand %vm492, %vm556
  %vm1583 = vmand %vm493, %vm557
  %vm1584 = vmand %vm494, %vm558
  %vm1585 = vmand %vm495, %vm559
  %vm1586 = vmand %vm496, %vm560
  %vm1587 = vmand %vm497, %vm561
  %vm1588 = vmand %vm498, %vm562
  %vm1589 = vmand %vm499, %vm563
  %vm1590 = vmand %vm500, %vm564
  %vm1591 = vmand %vm501, %vm565
  %vm1592 = vmand %vm502, %vm566
  %vm1593 = vmand %vm503, %vm567
  %vm1594 = vmand %vm504, %vm568
  %vm1595 = vmand %vm505, %vm569
  %vm1596 = vmand %vm506, %vm570
  %vm1597 = vmand %vm507, %vm571
  %vm1598 = vmand %vm508, %vm572
  %vm1599 = vmand %vm509, %vm573
  %vm1600 = vmand %vm510, %vm574
  %vm1601 = vmand %vm511, %vm575
  %vm1602 = vmand %vm512, %vm576
  %vm1603 = vmand %vm513, %vm577
  %vm1604 = vmand %vm514, %vm578
  %vm1605 = vmand %vm515, %vm579
  %vm1606 = vmand %vm516, %vm580
  %vm1607 = vmand %vm517, %vm581
  %vm1608 = vmand %vm518, %vm582
  %vm1609 = vmand %vm519, %vm583
  %vm1610 = vmand %vm520, %vm584
  %vm1611 = vmand %vm521, %vm585
  %vm1612 = vmand %vm522, %vm586
  %vm1613 = vmand %vm523, %vm587
  %vm1614 = vmand %vm524, %vm588
  %vm1615 = vmand %vm525, %vm589
  %vm1616 = vmand %vm526, %vm590
  %vm1617 = vmand %vm527, %vm591
  %vm1618 = vmand %vm528, %vm592
  %vm1619 = vmand %vm529, %vm593
  %vm1620 = vmand %vm530, %vm594
  %vm1621 = vmand %vm531, %vm595
  %vm1622 = vmand %vm532, %vm596
  %vm1623 = vmand %vm533, %vm597
  %vm1624 = vmand %vm534, %vm598
  %vm1625 = vmand %vm535, %vm599
  %vm1626 = vmand %vm536, %vm600
  %vm1627 = vmand %vm537, %vm601
  %vm1628 = vmand %vm538, %vm602
  %vm1629 = vmand %vm539, %vm603
  %vm1630 = vmand %vm540, %vm604
  %vm1631 = vmand %vm541, %vm605
  %vm1632 = vmand %vm542, %vm606
  %v1633 = vsel %vm1569, %v797, 0.0
  %v1634 = vsel %vm1570, %v796, 0.0
  %v1635 = vsel %vm1571, %v795, 0.0
  %v1636 = vsel %vm1572, %v794, 0.0
  %v1637 = vsel %vm1573, %v793, 0.0
  %v1638 = vsel %vm1574, %v792, 0.0
  %v1639 = vsel %vm1575, %v791, 0.0
  %v1640 = vsel %vm1576, %v790, 0.0
  %v1641 = vsel %vm1577, %v789, 0.0
  %v1642 = vsel %vm1578, %v788, 0.0
  %v1643 = vsel %vm1579, %v787, 0.0
  %v1644 = vsel %vm1580, %v786, 0.0
  %v1645 = vsel %vm1581, %v785, 0.0
  %v1646 = vsel %vm1582, %v784, 0.0
  %v1647 = vsel %vm1583, %v783, 0.0
  %v1648 = vsel %vm1584, %v782, 0.0
  %v1649 = vsel %vm1585, %v781, 0.0
  %v1650 = vsel %vm1586, %v780, 0.0
  %v1651 = vsel %vm1587, %v779, 0.0
  %v1652 = vsel %vm1588, %v778, 0.0
  %v1653 = vsel %vm1589, %v777, 0.0
  %v1654 = vsel %vm1590, %v776, 0.0
  %v1655 = vsel %vm1591, %v775, 0.0
  %v1656 = vsel %vm1592, %v774, 0.0
  %v1657 = vsel %vm1593, %v773, 0.0
  %v1658 = vsel %vm1594, %v772, 0.0
  %v1659 = vsel %vm1595, %v771, 0.0
  %v1660 = vsel %vm1596, %v770, 0.0
  %v1661 = vsel %vm1597, %v769, 0.0
  %v1662 = vsel %vm1598, %v768, 0.0
  %v1663 = vsel %vm1599, %v767, 0.0
  %v1664 = vsel %vm1600, %v766, 0.0
  %v1665 = vsel %vm1601, %v765, 0.0
  %v1666 = vsel %vm1602, %v764, 0.0
  %v1667 = vsel %vm1603, %v763, 0.0
  %v1668 = vsel %vm1604, %v762, 0.0
  %v1669 = vsel %vm1605, %v761, 0.0
  %v1670 = vsel %vm1606, %v760, 0.0
  %v1671 = vsel %vm1607, %v759, 0.0
  %v1672 = vsel %vm1608, %v758, 0.0
  %v1673 = vsel %vm1609, %v757, 0.0
  %v1674 = vsel %vm1610, %v756, 0.0
  %v1675 = vsel %vm1611, %v755, 0.0
  %v1676 = vsel %vm1612, %v754, 0.0
  %v1677 = vsel %vm1613, %v753, 0.0
  %v1678 = vsel %vm1614, %v752, 0.0
  %v1679 = vsel %vm1615, %v751, 0.0
  %v1680 = vsel %vm1616, %v750, 0.0
  %v1681 = vsel %vm1617, %v749, 0.0
  %v1682 = vsel %vm1618, %v748, 0.0
  %v1683 = vsel %vm1619, %v747, 0.0
  %v1684 = vsel %vm1620, %v746, 0.0
  %v1685 = vsel %vm1621, %v745, 0.0
  %v1686 = vsel %vm1622, %v744, 0.0
  %v1687 = vsel %vm1623, %v743, 0.0
  %v1688 = vsel %vm1624, %v742, 0.0
  %v1689 = vsel %vm1625, %v741, 0.0
  %v1690 = vsel %vm1626, %v740, 0.0
  %v1691 = vsel %vm1627, %v739, 0.0
  %v1692 = vsel %vm1628, %v738, 0.0
  %v1693 = vsel %vm1629, %v737, 0.0
  %v1694 = vsel %vm1630, %v736, 0.0
  %v1695 = vsel %vm1631, %v799, 0.0
  %v1696 = vsel %vm1632, %v798, 0.0
  %v1697 = vpack.c.bf16 %v1634, %v1633
  %v1698 = vpack.c.bf16 %v1636, %v1635
  %v1699 = vpack.c.bf16 %v1638, %v1637
  %v1700 = vpack.c.bf16 %v1640, %v1639
  %v1701 = vpack.c.bf16 %v1642, %v1641
  %v1702 = vpack.c.bf16 %v1644, %v1643
  %v1703 = vpack.c.bf16 %v1646, %v1645
  %v1704 = vpack.c.bf16 %v1648, %v1647
  %v1705 = vpack.c.bf16 %v1650, %v1649
  %v1706 = vpack.c.bf16 %v1652, %v1651
  %v1707 = vpack.c.bf16 %v1654, %v1653
  %v1708 = vpack.c.bf16 %v1656, %v1655
  %v1709 = vpack.c.bf16 %v1658, %v1657
  %v1710 = vpack.c.bf16 %v1660, %v1659
  %v1711 = vpack.c.bf16 %v1662, %v1661
  %v1712 = vpack.c.bf16 %v1664, %v1663
  %v1713 = vpack.c.bf16 %v1666, %v1665
  %v1714 = vpack.c.bf16 %v1668, %v1667
  %v1715 = vpack.c.bf16 %v1670, %v1669
  %v1716 = vpack.c.bf16 %v1672, %v1671
  %v1717 = vpack.c.bf16 %v1674, %v1673
  %v1718 = vpack.c.bf16 %v1676, %v1675
  %v1719 = vpack.c.bf16 %v1678, %v1677
  %v1720 = vpack.c.bf16 %v1680, %v1679
  %v1721 = vpack.c.bf16 %v1682, %v1681
  %v1722 = vpack.c.bf16 %v1684, %v1683
  %v1723 = vpack.c.bf16 %v1686, %v1685
  %v1724 = vpack.c.bf16 %v1688, %v1687
  %v1725 = vpack.c.bf16 %v1690, %v1689
  %v1726 = vpack.c.bf16 %v1692, %v1691
  %v1727 = vpack.c.bf16 %v1694, %v1693
  %v1728 = vpack.c.bf16 %v1696, %v1695
  %v1729 = vsel %vm479, %v64, 0.0
  %v1730 = vsel %vm480, %v65, 0.0
  %v1731 = vsel %vm481, %v66, 0.0
  %v1732 = vsel %vm482, %v67, 0.0
  %v1733 = vsel %vm483, %v68, 0.0
  %v1734 = vsel %vm484, %v69, 0.0
  %v1735 = vsel %vm485, %v70, 0.0
  %v1736 = vsel %vm486, %v71, 0.0
  %v1737 = vsel %vm487, %v72, 0.0
  %v1738 = vsel %vm488, %v73, 0.0
  %v1739 = vsel %vm489, %v74, 0.0
  %v1740 = vsel %vm490, %v75, 0.0
  %v1741 = vsel %vm491, %v76, 0.0
  %v1742 = vsel %vm492, %v77, 0.0
  %v1743 = vsel %vm493, %v78, 0.0
  %v1744 = vsel %vm494, %v79, 0.0
  %v1745 = vsel %vm495, %v80, 0.0
  %v1746 = vsel %vm496, %v81, 0.0
  %v1747 = vsel %vm497, %v82, 0.0
  %v1748 = vsel %vm498, %v83, 0.0
  %v1749 = vsel %vm499, %v84, 0.0
  %v1750 = vsel %vm500, %v85, 0.0
  %v1751 = vsel %vm501, %v86, 0.0
  %v1752 = vsel %vm502, %v87, 0.0
  %v1753 = vsel %vm503, %v88, 0.0
  %v1754 = vsel %vm504, %v89, 0.0
  %v1755 = vsel %vm505, %v90, 0.0
  %v1756 = vsel %vm506, %v91, 0.0
  %v1757 = vsel %vm507, %v92, 0.0
  %v1758 = vsel %vm508, %v93, 0.0
  %v1759 = vsel %vm509, %v127, 0.0
  %v1760 = vsel %vm510, %v129, 0.0
  %v1761 = vsel %vm511, %v131, 0.0
  %v1762 = vsel %vm512, %v133, 0.0
  %v1763 = vsel %vm513, %v135, 0.0
  %v1764 = vsel %vm514, %v137, 0.0
  %v1765 = vsel %vm515, %v139, 0.0
  %v1766 = vsel %vm516, %v141, 0.0
  %v1767 = vsel %vm517, %v143, 0.0
  %v1768 = vsel %vm518, %v145, 0.0
  %v1769 = vsel %vm519, %v147, 0.0
  %v1770 = vsel %vm520, %v149, 0.0
  %v1771 = vsel %vm521, %v151, 0.0
  %v1772 = vsel %vm522, %v153, 0.0
  %v1773 = vsel %vm523, %v155, 0.0
  %v1774 = vsel %vm524, %v157, 0.0
  %v1775 = vsel %vm525, %v159, 0.0
  %v1776 = vsel %vm526, %v161, 0.0
  %v1777 = vsel %vm527, %v163, 0.0
  %v1778 = vsel %vm528, %v165, 0.0
  %v1779 = vsel %vm529, %v167, 0.0
  %v1780 = vsel %vm530, %v169, 0.0
  %v1781 = vsel %vm531, %v171, 0.0
  %v1782 = vsel %vm532, %v173, 0.0
  %v1783 = vsel %vm533, %v175, 0.0
  %v1784 = vsel %vm534, %v177, 0.0
  %v1785 = vsel %vm535, %v179, 0.0
  %v1786 = vsel %vm536, %v181, 0.0
  %v1787 = vsel %vm537, %v183, 0.0
  %v1788 = vsel %vm538, %v185, 0.0
  %v1789 = vsel %vm539, %v187, 0.0
  %v1790 = vsel %vm540, %v189, 0.0
  %v1791 = vsel %vm541, %v62, 0.0
  %v1792 = vsel %vm542, %v63, 0.0
  %v1793 = vpack.c.bf16 %v1730, %v1729
  %v1794 = vpack.c.bf16 %v1732, %v1731
  %v1795 = vpack.c.bf16 %v1734, %v1733
  %v1796 = vpack.c.bf16 %v1736, %v1735
  %v1797 = vpack.c.bf16 %v1738, %v1737
  %v1798 = vpack.c.bf16 %v1740, %v1739
  %v1799 = vpack.c.bf16 %v1742, %v1741
  %v1800 = vpack.c.bf16 %v1744, %v1743
  %v1801 = vpack.c.bf16 %v1746, %v1745
  %v1802 = vpack.c.bf16 %v1748, %v1747
  %v1803 = vpack.c.bf16 %v1750, %v1749
  %v1804 = vpack.c.bf16 %v1752, %v1751
  %v1805 = vpack.c.bf16 %v1754, %v1753
  %v1806 = vpack.c.bf16 %v1756, %v1755
  %v1807 = vpack.c.bf16 %v1758, %v1757
  %v1808 = vpack.c.bf16 %v1760, %v1759
  %v1809 = vpack.c.bf16 %v1762, %v1761
  %v1810 = vpack.c.bf16 %v1764, %v1763
  %v1811 = vpack.c.bf16 %v1766, %v1765
  %v1812 = vpack.c.bf16 %v1768, %v1767
  %v1813 = vpack.c.bf16 %v1770, %v1769
  %v1814 = vpack.c.bf16 %v1772, %v1771
  %v1815 = vpack.c.bf16 %v1774, %v1773
  %v1816 = vpack.c.bf16 %v1776, %v1775
  %v1817 = vpack.c.bf16 %v1778, %v1777
  %v1818 = vpack.c.bf16 %v1780, %v1779
  %v1819 = vpack.c.bf16 %v1782, %v1781
  %v1820 = vpack.c.bf16 %v1784, %v1783
  %v1821 = vpack.c.bf16 %v1786, %v1785
  %v1822 = vpack.c.bf16 %v1788, %v1787
  %v1823 = vpack.c.bf16 %v1790, %v1789
  %v1824 = vpack.c.bf16 %v1792, %v1791
  %vm1825 = vmand %vm479, %vm607
  %vm1826 = vmand %vm480, %vm608
  %vm1827 = vmand %vm481, %vm609
  %vm1828 = vmand %vm482, %vm610
  %vm1829 = vmand %vm483, %vm611
  %vm1830 = vmand %vm484, %vm612
  %vm1831 = vmand %vm485, %vm613
  %vm1832 = vmand %vm486, %vm614
  %vm1833 = vmand %vm487, %vm615
  %vm1834 = vmand %vm488, %vm616
  %vm1835 = vmand %vm489, %vm617
  %vm1836 = vmand %vm490, %vm618
  %vm1837 = vmand %vm491, %vm619
  %vm1838 = vmand %vm492, %vm620
  %vm1839 = vmand %vm493, %vm621
  %vm1840 = vmand %vm494, %vm622
  %vm1841 = vmand %vm495, %vm623
  %vm1842 = vmand %vm496, %vm624
  %vm1843 = vmand %vm497, %vm625
  %vm1844 = vmand %vm498, %vm626
  %vm1845 = vmand %vm499, %vm627
  %vm1846 = vmand %vm500, %vm628
  %vm1847 = vmand %vm501, %vm629
  %vm1848 = vmand %vm502, %vm630
  %vm1849 = vmand %vm503, %vm631
  %vm1850 = vmand %vm504, %vm632
  %vm1851 = vmand %vm505, %vm633
  %vm1852 = vmand %vm506, %vm634
  %vm1853 = vmand %vm507, %vm635
  %vm1854 = vmand %vm508, %vm636
  %vm1855 = vmand %vm509, %vm637
  %vm1856 = vmand %vm510, %vm638
  %vm1857 = vmand %vm511, %vm639
  %vm1858 = vmand %vm512, %vm640
  %vm1859 = vmand %vm513, %vm641
  %vm1860 = vmand %vm514, %vm642
  %vm1861 = vmand %vm515, %vm643
  %vm1862 = vmand %vm516, %vm644
  %vm1863 = vmand %vm517, %vm645
  %vm1864 = vmand %vm518, %vm646
  %vm1865 = vmand %vm519, %vm647
  %vm1866 = vmand %vm520, %vm648
  %vm1867 = vmand %vm521, %vm649
  %vm1868 = vmand %vm522, %vm650
  %vm1869 = vmand %vm523, %vm651
  %vm1870 = vmand %vm524, %vm652
  %vm1871 = vmand %vm525, %vm653
  %vm1872 = vmand %vm526, %vm654
  %vm1873 = vmand %vm527, %vm655
  %vm1874 = vmand %vm528, %vm656
  %vm1875 = vmand %vm529, %vm657
  %vm1876 = vmand %vm530, %vm658
  %vm1877 = vmand %vm531, %vm659
  %vm1878 = vmand %vm532, %vm660
  %vm1879 = vmand %vm533, %vm661
  %vm1880 = vmand %vm534, %vm662
  %vm1881 = vmand %vm535, %vm663
  %vm1882 = vmand %vm536, %vm664
  %vm1883 = vmand %vm537, %vm665
  %vm1884 = vmand %vm538, %vm666
  %vm1885 = vmand %vm539, %vm667
  %vm1886 = vmand %vm540, %vm668
  %vm1887 = vmand %vm541, %vm669
  %vm1888 = vmand %vm542, %vm670
  %v1889 = vsel %vm1825, %v1181, 0.0
  %v1890 = vsel %vm1826, %v1180, 0.0
  %v1891 = vsel %vm1827, %v1179, 0.0
  %v1892 = vsel %vm1828, %v1178, 0.0
  %v1893 = vsel %vm1829, %v1177, 0.0
  %v1894 = vsel %vm1830, %v1176, 0.0
  %v1895 = vsel %vm1831, %v1175, 0.0
  %v1896 = vsel %vm1832, %v1174, 0.0
  %v1897 = vsel %vm1833, %v1173, 0.0
  %v1898 = vsel %vm1834, %v1172, 0.0
  %v1899 = vsel %vm1835, %v1171, 0.0
  %v1900 = vsel %vm1836, %v1170, 0.0
  %v1901 = vsel %vm1837, %v1169, 0.0
  %v1902 = vsel %vm1838, %v1168, 0.0
  %v1903 = vsel %vm1839, %v1167, 0.0
  %v1904 = vsel %vm1840, %v1166, 0.0
  %v1905 = vsel %vm1841, %v1165, 0.0
  %v1906 = vsel %vm1842, %v1164, 0.0
  %v1907 = vsel %vm1843, %v1163, 0.0
  %v1908 = vsel %vm1844, %v1162, 0.0
  %v1909 = vsel %vm1845, %v1161, 0.0
  %v1910 = vsel %vm1846, %v1160, 0.0
  %v1911 = vsel %vm1847, %v1159, 0.0
  %v1912 = vsel %vm1848, %v1158, 0.0
  %v1913 = vsel %vm1849, %v1157, 0.0
  %v1914 = vsel %vm1850, %v1156, 0.0
  %v1915 = vsel %vm1851, %v1155, 0.0
  %v1916 = vsel %vm1852, %v1154, 0.0
  %v1917 = vsel %vm1853, %v1153, 0.0
  %v1918 = vsel %vm1854, %v1152, 0.0
  %v1919 = vsel %vm1855, %v1151, 0.0
  %v1920 = vsel %vm1856, %v1150, 0.0
  %v1921 = vsel %vm1857, %v1149, 0.0
  %v1922 = vsel %vm1858, %v1148, 0.0
  %v1923 = vsel %vm1859, %v1147, 0.0
  %v1924 = vsel %vm1860, %v1146, 0.0
  %v1925 = vsel %vm1861, %v1145, 0.0
  %v1926 = vsel %vm1862, %v1144, 0.0
  %v1927 = vsel %vm1863, %v1143, 0.0
  %v1928 = vsel %vm1864, %v1142, 0.0
  %v1929 = vsel %vm1865, %v1141, 0.0
  %v1930 = vsel %vm1866, %v1140, 0.0
  %v1931 = vsel %vm1867, %v1139, 0.0
  %v1932 = vsel %vm1868, %v1138, 0.0
  %v1933 = vsel %vm1869, %v1137, 0.0
  %v1934 = vsel %vm1870, %v1136, 0.0
  %v1935 = vsel %vm1871, %v1135, 0.0
  %v1936 = vsel %vm1872, %v1134, 0.0
  %v1937 = vsel %vm1873, %v1133, 0.0
  %v1938 = vsel %vm1874, %v1132, 0.0
  %v1939 = vsel %vm1875, %v1131, 0.0
  %v1940 = vsel %vm1876, %v1130, 0.0
  %v1941 = vsel %vm1877, %v1129, 0.0
  %v1942 = vsel %vm1878, %v1128, 0.0
  %v1943 = vsel %vm1879, %v1127, 0.0
  %v1944 = vsel %vm1880, %v1126, 0.0
  %v1945 = vsel %vm1881, %v1125, 0.0
  %v1946 = vsel %vm1882, %v1124, 0.0
  %v1947 = vsel %vm1883, %v1123, 0.0
  %v1948 = vsel %vm1884, %v1122, 0.0
  %v1949 = vsel %vm1885, %v1121, 0.0
  %v1950 = vsel %vm1886, %v1184, 0.0
  %v1951 = vsel %vm1887, %v1183, 0.0
  %v1952 = vsel %vm1888, %v1182, 0.0
  %v1953 = vpack.c.bf16 %v1890, %v1889
  %v1954 = vpack.c.bf16 %v1892, %v1891
  %v1955 = vpack.c.bf16 %v1894, %v1893
  %v1956 = vpack.c.bf16 %v1896, %v1895
  %v1957 = vpack.c.bf16 %v1898, %v1897
  %v1958 = vpack.c.bf16 %v1900, %v1899
  %v1959 = vpack.c.bf16 %v1902, %v1901
  %v1960 = vpack.c.bf16 %v1904, %v1903
  %v1961 = vpack.c.bf16 %v1906, %v1905
  %v1962 = vpack.c.bf16 %v1908, %v1907
  %v1963 = vpack.c.bf16 %v1910, %v1909
  %v1964 = vpack.c.bf16 %v1912, %v1911
  %v1965 = vpack.c.bf16 %v1914, %v1913
  %v1966 = vpack.c.bf16 %v1916, %v1915
  %v1967 = vpack.c.bf16 %v1918, %v1917
  %v1968 = vpack.c.bf16 %v1920, %v1919
  %v1969 = vpack.c.bf16 %v1922, %v1921
  %v1970 = vpack.c.bf16 %v1924, %v1923
  %v1971 = vpack.c.bf16 %v1926, %v1925
  %v1972 = vpack.c.bf16 %v1928, %v1927
  %v1973 = vpack.c.bf16 %v1930, %v1929
  %v1974 = vpack.c.bf16 %v1932, %v1931
  %v1975 = vpack.c.bf16 %v1934, %v1933
  %v1976 = vpack.c.bf16 %v1936, %v1935
  %v1977 = vpack.c.bf16 %v1938, %v1937
  %v1978 = vpack.c.bf16 %v1940, %v1939
  %v1979 = vpack.c.bf16 %v1942, %v1941
  %v1980 = vpack.c.bf16 %v1944, %v1943
  %v1981 = vpack.c.bf16 %v1946, %v1945
  %v1982 = vpack.c.bf16 %v1948, %v1947
  %v1983 = vpack.c.bf16 %v1950, %v1949
  %v1984 = vpack.c.bf16 %v1952, %v1951
  %2017 = vrot.lane.b32.xlu0 %v1024, 1
  %v2018 = vpop.permute.xlu0 %2017
  %2019 = vrot.lane.b32.xlu0 %v1025, 1
  %v2020 = vpop.permute.xlu0 %2019
  %2021 = vrot.lane.b32.xlu0 %v1026, 1
  %v2022 = vpop.permute.xlu0 %2021
  %2023 = vrot.lane.b32.xlu0 %v1027, 1
  %v2024 = vpop.permute.xlu0 %2023
  %2025 = vrot.lane.b32.xlu0 %v1028, 1
  %v2026 = vpop.permute.xlu0 %2025
  %2027 = vrot.lane.b32.xlu0 %v1029, 1
  %v2028 = vpop.permute.xlu0 %2027
  %2029 = vrot.lane.b32.xlu0 %v1030, 1
  %v2030 = vpop.permute.xlu0 %2029
  %2031 = vrot.lane.b32.xlu0 %v1031, 1
  %v2032 = vpop.permute.xlu0 %2031
  %2033 = vrot.lane.b32.xlu0 %v1032, 1
  %v2034 = vpop.permute.xlu0 %2033
  %2035 = vrot.lane.b32.xlu0 %v1033, 1
  %v2036 = vpop.permute.xlu0 %2035
  %2037 = vrot.lane.b32.xlu0 %v1034, 1
  %v2038 = vpop.permute.xlu0 %2037
  %2039 = vrot.lane.b32.xlu0 %v1035, 1
  %v2040 = vpop.permute.xlu0 %2039
  %2041 = vrot.lane.b32.xlu0 %v1036, 1
  %v2042 = vpop.permute.xlu0 %2041
  %2043 = vrot.lane.b32.xlu0 %v1037, 1
  %v2044 = vpop.permute.xlu0 %2043
  %2045 = vrot.lane.b32.xlu0 %v1038, 1
  %v2046 = vpop.permute.xlu0 %2045
  %2047 = vrot.lane.b32.xlu0 %v1039, 1
  %v2048 = vpop.permute.xlu0 %2047
  %2049 = vrot.lane.b32.xlu0 %v1040, 1
  %v2050 = vpop.permute.xlu0 %2049
  %2051 = vrot.lane.b32.xlu0 %v1041, 1
  %v2052 = vpop.permute.xlu0 %2051
  %2053 = vrot.lane.b32.xlu0 %v1042, 1
  %v2054 = vpop.permute.xlu0 %2053
  %2055 = vrot.lane.b32.xlu0 %v1043, 1
  %v2056 = vpop.permute.xlu0 %2055
  %2057 = vrot.lane.b32.xlu0 %v1044, 1
  %v2058 = vpop.permute.xlu0 %2057
  %2059 = vrot.lane.b32.xlu0 %v1045, 1
  %v2060 = vpop.permute.xlu0 %2059
  %2061 = vrot.lane.b32.xlu0 %v1046, 1
  %v2062 = vpop.permute.xlu0 %2061
  %2063 = vrot.lane.b32.xlu0 %v1047, 1
  %v2064 = vpop.permute.xlu0 %2063
  %2065 = vrot.lane.b32.xlu0 %v1048, 1
  %v2066 = vpop.permute.xlu0 %2065
  %2067 = vrot.lane.b32.xlu0 %v1049, 1
  %v2068 = vpop.permute.xlu0 %2067
  %2069 = vrot.lane.b32.xlu0 %v1050, 1
  %v2070 = vpop.permute.xlu0 %2069
  %2071 = vrot.lane.b32.xlu0 %v1051, 1
  %v2072 = vpop.permute.xlu0 %2071
  %2073 = vrot.lane.b32.xlu0 %v1052, 1
  %v2074 = vpop.permute.xlu0 %2073
  %2075 = vrot.lane.b32.xlu0 %v1053, 1
  %v2076 = vpop.permute.xlu0 %2075
  %2077 = vrot.lane.b32.xlu0 %v1054, 1
  %v2078 = vpop.permute.xlu0 %2077
  %2079 = vrot.lane.b32.xlu0 %v1055, 1
  %v2080 = vpop.permute.xlu0 %2079
  %2113 = vrot.lane.b32.xlu0 %v1313, 2
  %v2114 = vpop.permute.xlu0 %2113
  %2115 = vrot.lane.b32.xlu0 %v1314, 2
  %v2116 = vpop.permute.xlu0 %2115
  %2117 = vrot.lane.b32.xlu0 %v1315, 2
  %v2118 = vpop.permute.xlu0 %2117
  %2119 = vrot.lane.b32.xlu0 %v1316, 2
  %v2120 = vpop.permute.xlu0 %2119
  %2121 = vrot.lane.b32.xlu0 %v1317, 2
  %v2122 = vpop.permute.xlu0 %2121
  %2123 = vrot.lane.b32.xlu0 %v1318, 2
  %v2124 = vpop.permute.xlu0 %2123
  %2125 = vrot.lane.b32.xlu0 %v1319, 2
  %v2126 = vpop.permute.xlu0 %2125
  %2127 = vrot.lane.b32.xlu0 %v1320, 2
  %v2128 = vpop.permute.xlu0 %2127
  %2129 = vrot.lane.b32.xlu0 %v1321, 2
  %v2130 = vpop.permute.xlu0 %2129
  %2131 = vrot.lane.b32.xlu0 %v1322, 2
  %v2132 = vpop.permute.xlu0 %2131
  %2133 = vrot.lane.b32.xlu0 %v1323, 2
  %v2134 = vpop.permute.xlu0 %2133
  %2135 = vrot.lane.b32.xlu0 %v1324, 2
  %v2136 = vpop.permute.xlu0 %2135
  %2137 = vrot.lane.b32.xlu0 %v1325, 2
  %v2138 = vpop.permute.xlu0 %2137
  %2139 = vrot.lane.b32.xlu0 %v1326, 2
  %v2140 = vpop.permute.xlu0 %2139
  %2141 = vrot.lane.b32.xlu0 %v1327, 2
  %v2142 = vpop.permute.xlu0 %2141
  %2143 = vrot.lane.b32.xlu0 %v1328, 2
  %v2144 = vpop.permute.xlu0 %2143
  %2145 = vrot.lane.b32.xlu0 %v1329, 2
  %v2146 = vpop.permute.xlu0 %2145
  %2147 = vrot.lane.b32.xlu0 %v1330, 2
  %v2148 = vpop.permute.xlu0 %2147
  %2149 = vrot.lane.b32.xlu0 %v1331, 2
  %v2150 = vpop.permute.xlu0 %2149
  %2151 = vrot.lane.b32.xlu0 %v1332, 2
  %v2152 = vpop.permute.xlu0 %2151
  %2153 = vrot.lane.b32.xlu0 %v1333, 2
  %v2154 = vpop.permute.xlu0 %2153
  %2155 = vrot.lane.b32.xlu0 %v1334, 2
  %v2156 = vpop.permute.xlu0 %2155
  %2157 = vrot.lane.b32.xlu0 %v1335, 2
  %v2158 = vpop.permute.xlu0 %2157
  %2159 = vrot.lane.b32.xlu0 %v1336, 2
  %v2160 = vpop.permute.xlu0 %2159
  %2161 = vrot.lane.b32.xlu0 %v1337, 2
  %v2162 = vpop.permute.xlu0 %2161
  %2163 = vrot.lane.b32.xlu0 %v1338, 2
  %v2164 = vpop.permute.xlu0 %2163
  %2165 = vrot.lane.b32.xlu0 %v1339, 2
  %v2166 = vpop.permute.xlu0 %2165
  %2167 = vrot.lane.b32.xlu0 %v1340, 2
  %v2168 = vpop.permute.xlu0 %2167
  %2169 = vrot.lane.b32.xlu0 %v1341, 2
  %v2170 = vpop.permute.xlu0 %2169
  %2171 = vrot.lane.b32.xlu0 %v1342, 2
  %v2172 = vpop.permute.xlu0 %2171
  %2173 = vrot.lane.b32.xlu0 %v1343, 2
  %v2174 = vpop.permute.xlu0 %2173
  %2175 = vrot.lane.b32.xlu0 %v1344, 2
  %v2176 = vpop.permute.xlu0 %2175
  %2209 = vrot.lane.b32.xlu0 %v1409, 3
  %v2210 = vpop.permute.xlu0 %2209
  %2211 = vrot.lane.b32.xlu0 %v1410, 3
  %v2212 = vpop.permute.xlu0 %2211
  %2213 = vrot.lane.b32.xlu0 %v1411, 3
  %v2214 = vpop.permute.xlu0 %2213
  %2215 = vrot.lane.b32.xlu0 %v1412, 3
  %v2216 = vpop.permute.xlu0 %2215
  %2217 = vrot.lane.b32.xlu0 %v1413, 3
  %v2218 = vpop.permute.xlu0 %2217
  %2219 = vrot.lane.b32.xlu0 %v1414, 3
  %v2220 = vpop.permute.xlu0 %2219
  %2221 = vrot.lane.b32.xlu0 %v1415, 3
  %v2222 = vpop.permute.xlu0 %2221
  %2223 = vrot.lane.b32.xlu0 %v1416, 3
  %v2224 = vpop.permute.xlu0 %2223
  %2225 = vrot.lane.b32.xlu0 %v1417, 3
  %v2226 = vpop.permute.xlu0 %2225
  %2227 = vrot.lane.b32.xlu0 %v1418, 3
  %v2228 = vpop.permute.xlu0 %2227
  %2229 = vrot.lane.b32.xlu0 %v1419, 3
  %v2230 = vpop.permute.xlu0 %2229
  %2231 = vrot.lane.b32.xlu0 %v1420, 3
  %v2232 = vpop.permute.xlu0 %2231
  %2233 = vrot.lane.b32.xlu0 %v1421, 3
  %v2234 = vpop.permute.xlu0 %2233
  %2235 = vrot.lane.b32.xlu0 %v1422, 3
  %v2236 = vpop.permute.xlu0 %2235
  %2237 = vrot.lane.b32.xlu0 %v1423, 3
  %v2238 = vpop.permute.xlu0 %2237
  %2239 = vrot.lane.b32.xlu0 %v1424, 3
  %v2240 = vpop.permute.xlu0 %2239
  %2241 = vrot.lane.b32.xlu0 %v1425, 3
  %v2242 = vpop.permute.xlu0 %2241
  %2243 = vrot.lane.b32.xlu0 %v1426, 3
  %v2244 = vpop.permute.xlu0 %2243
  %2245 = vrot.lane.b32.xlu0 %v1427, 3
  %v2246 = vpop.permute.xlu0 %2245
  %2247 = vrot.lane.b32.xlu0 %v1428, 3
  %v2248 = vpop.permute.xlu0 %2247
  %2249 = vrot.lane.b32.xlu0 %v1429, 3
  %v2250 = vpop.permute.xlu0 %2249
  %2251 = vrot.lane.b32.xlu0 %v1430, 3
  %v2252 = vpop.permute.xlu0 %2251
  %2253 = vrot.lane.b32.xlu0 %v1431, 3
  %v2254 = vpop.permute.xlu0 %2253
  %2255 = vrot.lane.b32.xlu0 %v1432, 3
  %v2256 = vpop.permute.xlu0 %2255
  %2257 = vrot.lane.b32.xlu0 %v1433, 3
  %v2258 = vpop.permute.xlu0 %2257
  %2259 = vrot.lane.b32.xlu0 %v1434, 3
  %v2260 = vpop.permute.xlu0 %2259
  %2261 = vrot.lane.b32.xlu0 %v1435, 3
  %v2262 = vpop.permute.xlu0 %2261
  %2263 = vrot.lane.b32.xlu0 %v1436, 3
  %v2264 = vpop.permute.xlu0 %2263
  %2265 = vrot.lane.b32.xlu0 %v1437, 3
  %v2266 = vpop.permute.xlu0 %2265
  %2267 = vrot.lane.b32.xlu0 %v1438, 3
  %v2268 = vpop.permute.xlu0 %2267
  %2269 = vrot.lane.b32.xlu0 %v1439, 3
  %v2270 = vpop.permute.xlu0 %2269
  %2271 = vrot.lane.b32.xlu0 %v1440, 3
  %v2272 = vpop.permute.xlu0 %2271
  %2305 = vrot.lane.b32.xlu0 %v1441, 4
  %v2306 = vpop.permute.xlu0 %2305
  %2307 = vrot.lane.b32.xlu0 %v1442, 4
  %v2308 = vpop.permute.xlu0 %2307
  %2309 = vrot.lane.b32.xlu0 %v1443, 4
  %v2310 = vpop.permute.xlu0 %2309
  %2311 = vrot.lane.b32.xlu0 %v1444, 4
  %v2312 = vpop.permute.xlu0 %2311
  %2313 = vrot.lane.b32.xlu0 %v1445, 4
  %v2314 = vpop.permute.xlu0 %2313
  %2315 = vrot.lane.b32.xlu0 %v1446, 4
  %v2316 = vpop.permute.xlu0 %2315
  %2317 = vrot.lane.b32.xlu0 %v1447, 4
  %v2318 = vpop.permute.xlu0 %2317
  %2319 = vrot.lane.b32.xlu0 %v1448, 4
  %v2320 = vpop.permute.xlu0 %2319
  %2321 = vrot.lane.b32.xlu0 %v1449, 4
  %v2322 = vpop.permute.xlu0 %2321
  %2323 = vrot.lane.b32.xlu0 %v1450, 4
  %v2324 = vpop.permute.xlu0 %2323
  %2325 = vrot.lane.b32.xlu0 %v1451, 4
  %v2326 = vpop.permute.xlu0 %2325
  %2327 = vrot.lane.b32.xlu0 %v1452, 4
  %v2328 = vpop.permute.xlu0 %2327
  %2329 = vrot.lane.b32.xlu0 %v1453, 4
  %v2330 = vpop.permute.xlu0 %2329
  %2331 = vrot.lane.b32.xlu0 %v1454, 4
  %v2332 = vpop.permute.xlu0 %2331
  %2333 = vrot.lane.b32.xlu0 %v1455, 4
  %v2334 = vpop.permute.xlu0 %2333
  %2335 = vrot.lane.b32.xlu0 %v1456, 4
  %v2336 = vpop.permute.xlu0 %2335
  %2337 = vrot.lane.b32.xlu0 %v1457, 4
  %v2338 = vpop.permute.xlu0 %2337
  %2339 = vrot.lane.b32.xlu0 %v1458, 4
  %v2340 = vpop.permute.xlu0 %2339
  %2341 = vrot.lane.b32.xlu0 %v1459, 4
  %v2342 = vpop.permute.xlu0 %2341
  %2343 = vrot.lane.b32.xlu0 %v1460, 4
  %v2344 = vpop.permute.xlu0 %2343
  %2345 = vrot.lane.b32.xlu0 %v1461, 4
  %v2346 = vpop.permute.xlu0 %2345
  %2347 = vrot.lane.b32.xlu0 %v1462, 4
  %v2348 = vpop.permute.xlu0 %2347
  %2349 = vrot.lane.b32.xlu0 %v1463, 4
  %v2350 = vpop.permute.xlu0 %2349
  %2351 = vrot.lane.b32.xlu0 %v1464, 4
  %v2352 = vpop.permute.xlu0 %2351
  %2353 = vrot.lane.b32.xlu0 %v1465, 4
  %v2354 = vpop.permute.xlu0 %2353
  %2355 = vrot.lane.b32.xlu0 %v1466, 4
  %v2356 = vpop.permute.xlu0 %2355
  %2357 = vrot.lane.b32.xlu0 %v1467, 4
  %v2358 = vpop.permute.xlu0 %2357
  %2359 = vrot.lane.b32.xlu0 %v1468, 4
  %v2360 = vpop.permute.xlu0 %2359
  %2361 = vrot.lane.b32.xlu0 %v1469, 4
  %v2362 = vpop.permute.xlu0 %2361
  %2363 = vrot.lane.b32.xlu0 %v1470, 4
  %v2364 = vpop.permute.xlu0 %2363
  %2365 = vrot.lane.b32.xlu0 %v1471, 4
  %v2366 = vpop.permute.xlu0 %2365
  %2367 = vrot.lane.b32.xlu0 %v1472, 4
  %v2368 = vpop.permute.xlu0 %2367
  %2401 = vrot.lane.b32.xlu0 %v1537, 5
  %v2402 = vpop.permute.xlu0 %2401
  %2403 = vrot.lane.b32.xlu0 %v1538, 5
  %v2404 = vpop.permute.xlu0 %2403
  %2405 = vrot.lane.b32.xlu0 %v1539, 5
  %v2406 = vpop.permute.xlu0 %2405
  %2407 = vrot.lane.b32.xlu0 %v1540, 5
  %v2408 = vpop.permute.xlu0 %2407
  %2409 = vrot.lane.b32.xlu0 %v1541, 5
  %v2410 = vpop.permute.xlu0 %2409
  %2411 = vrot.lane.b32.xlu0 %v1542, 5
  %v2412 = vpop.permute.xlu0 %2411
  %2413 = vrot.lane.b32.xlu0 %v1543, 5
  %v2414 = vpop.permute.xlu0 %2413
  %2415 = vrot.lane.b32.xlu0 %v1544, 5
  %v2416 = vpop.permute.xlu0 %2415
  %2417 = vrot.lane.b32.xlu0 %v1545, 5
  %v2418 = vpop.permute.xlu0 %2417
  %2419 = vrot.lane.b32.xlu0 %v1546, 5
  %v2420 = vpop.permute.xlu0 %2419
  %2421 = vrot.lane.b32.xlu0 %v1547, 5
  %v2422 = vpop.permute.xlu0 %2421
  %2423 = vrot.lane.b32.xlu0 %v1548, 5
  %v2424 = vpop.permute.xlu0 %2423
  %2425 = vrot.lane.b32.xlu0 %v1549, 5
  %v2426 = vpop.permute.xlu0 %2425
  %2427 = vrot.lane.b32.xlu0 %v1550, 5
  %v2428 = vpop.permute.xlu0 %2427
  %2429 = vrot.lane.b32.xlu0 %v1551, 5
  %v2430 = vpop.permute.xlu0 %2429
  %2431 = vrot.lane.b32.xlu0 %v1552, 5
  %v2432 = vpop.permute.xlu0 %2431
  %2433 = vrot.lane.b32.xlu0 %v1553, 5
  %v2434 = vpop.permute.xlu0 %2433
  %2435 = vrot.lane.b32.xlu0 %v1554, 5
  %v2436 = vpop.permute.xlu0 %2435
  %2437 = vrot.lane.b32.xlu0 %v1555, 5
  %v2438 = vpop.permute.xlu0 %2437
  %2439 = vrot.lane.b32.xlu0 %v1556, 5
  %v2440 = vpop.permute.xlu0 %2439
  %2441 = vrot.lane.b32.xlu0 %v1557, 5
  %v2442 = vpop.permute.xlu0 %2441
  %2443 = vrot.lane.b32.xlu0 %v1558, 5
  %v2444 = vpop.permute.xlu0 %2443
  %2445 = vrot.lane.b32.xlu0 %v1559, 5
  %v2446 = vpop.permute.xlu0 %2445
  %2447 = vrot.lane.b32.xlu0 %v1560, 5
  %v2448 = vpop.permute.xlu0 %2447
  %2449 = vrot.lane.b32.xlu0 %v1561, 5
  %v2450 = vpop.permute.xlu0 %2449
  %2451 = vrot.lane.b32.xlu0 %v1562, 5
  %v2452 = vpop.permute.xlu0 %2451
  %2453 = vrot.lane.b32.xlu0 %v1563, 5
  %v2454 = vpop.permute.xlu0 %2453
  %2455 = vrot.lane.b32.xlu0 %v1564, 5
  %v2456 = vpop.permute.xlu0 %2455
  %2457 = vrot.lane.b32.xlu0 %v1565, 5
  %v2458 = vpop.permute.xlu0 %2457
  %2459 = vrot.lane.b32.xlu0 %v1566, 5
  %v2460 = vpop.permute.xlu0 %2459
  %2461 = vrot.lane.b32.xlu0 %v1567, 5
  %v2462 = vpop.permute.xlu0 %2461
  %2463 = vrot.lane.b32.xlu0 %v1568, 5
  %v2464 = vpop.permute.xlu0 %2463
  %2497 = vrot.lane.b32.xlu0 %v1697, 6
  %v2498 = vpop.permute.xlu0 %2497
  %2499 = vrot.lane.b32.xlu0 %v1698, 6
  %v2500 = vpop.permute.xlu0 %2499
  %2501 = vrot.lane.b32.xlu0 %v1699, 6
  %v2502 = vpop.permute.xlu0 %2501
  %2503 = vrot.lane.b32.xlu0 %v1700, 6
  %v2504 = vpop.permute.xlu0 %2503
  %2505 = vrot.lane.b32.xlu0 %v1701, 6
  %v2506 = vpop.permute.xlu0 %2505
  %2507 = vrot.lane.b32.xlu0 %v1702, 6
  %v2508 = vpop.permute.xlu0 %2507
  %2509 = vrot.lane.b32.xlu0 %v1703, 6
  %v2510 = vpop.permute.xlu0 %2509
  %2511 = vrot.lane.b32.xlu0 %v1704, 6
  %v2512 = vpop.permute.xlu0 %2511
  %2513 = vrot.lane.b32.xlu0 %v1705, 6
  %v2514 = vpop.permute.xlu0 %2513
  %2515 = vrot.lane.b32.xlu0 %v1706, 6
  %v2516 = vpop.permute.xlu0 %2515
  %2517 = vrot.lane.b32.xlu0 %v1707, 6
  %v2518 = vpop.permute.xlu0 %2517
  %2519 = vrot.lane.b32.xlu0 %v1708, 6
  %v2520 = vpop.permute.xlu0 %2519
  %2521 = vrot.lane.b32.xlu0 %v1709, 6
  %v2522 = vpop.permute.xlu0 %2521
  %2523 = vrot.lane.b32.xlu0 %v1710, 6
  %v2524 = vpop.permute.xlu0 %2523
  %2525 = vrot.lane.b32.xlu0 %v1711, 6
  %v2526 = vpop.permute.xlu0 %2525
  %2527 = vrot.lane.b32.xlu0 %v1712, 6
  %v2528 = vpop.permute.xlu0 %2527
  %2529 = vrot.lane.b32.xlu0 %v1713, 6
  %v2530 = vpop.permute.xlu0 %2529
  %2531 = vrot.lane.b32.xlu0 %v1714, 6
  %v2532 = vpop.permute.xlu0 %2531
  %2533 = vrot.lane.b32.xlu0 %v1715, 6
  %v2534 = vpop.permute.xlu0 %2533
  %2535 = vrot.lane.b32.xlu0 %v1716, 6
  %v2536 = vpop.permute.xlu0 %2535
  %2537 = vrot.lane.b32.xlu0 %v1717, 6
  %v2538 = vpop.permute.xlu0 %2537
  %2539 = vrot.lane.b32.xlu0 %v1718, 6
  %v2540 = vpop.permute.xlu0 %2539
  %2541 = vrot.lane.b32.xlu0 %v1719, 6
  %v2542 = vpop.permute.xlu0 %2541
  %2543 = vrot.lane.b32.xlu0 %v1720, 6
  %v2544 = vpop.permute.xlu0 %2543
  %2545 = vrot.lane.b32.xlu0 %v1721, 6
  %v2546 = vpop.permute.xlu0 %2545
  %2547 = vrot.lane.b32.xlu0 %v1722, 6
  %v2548 = vpop.permute.xlu0 %2547
  %2549 = vrot.lane.b32.xlu0 %v1723, 6
  %v2550 = vpop.permute.xlu0 %2549
  %2551 = vrot.lane.b32.xlu0 %v1724, 6
  %v2552 = vpop.permute.xlu0 %2551
  %2553 = vrot.lane.b32.xlu0 %v1725, 6
  %v2554 = vpop.permute.xlu0 %2553
  %2555 = vrot.lane.b32.xlu0 %v1726, 6
  %v2556 = vpop.permute.xlu0 %2555
  %2557 = vrot.lane.b32.xlu0 %v1727, 6
  %v2558 = vpop.permute.xlu0 %2557
  %2559 = vrot.lane.b32.xlu0 %v1728, 6
  %v2560 = vpop.permute.xlu0 %2559
  %2593 = vrot.lane.b32.xlu0 %v1793, 7
  %v2594 = vpop.permute.xlu0 %2593
  %2595 = vrot.lane.b32.xlu0 %v1794, 7
  %v2596 = vpop.permute.xlu0 %2595
  %2597 = vrot.lane.b32.xlu0 %v1795, 7
  %v2598 = vpop.permute.xlu0 %2597
  %2599 = vrot.lane.b32.xlu0 %v1796, 7
  %v2600 = vpop.permute.xlu0 %2599
  %2601 = vrot.lane.b32.xlu0 %v1797, 7
  %v2602 = vpop.permute.xlu0 %2601
  %2603 = vrot.lane.b32.xlu0 %v1798, 7
  %v2604 = vpop.permute.xlu0 %2603
  %2605 = vrot.lane.b32.xlu0 %v1799, 7
  %v2606 = vpop.permute.xlu0 %2605
  %2607 = vrot.lane.b32.xlu0 %v1800, 7
  %v2608 = vpop.permute.xlu0 %2607
  %2609 = vrot.lane.b32.xlu0 %v1801, 7
  %v2610 = vpop.permute.xlu0 %2609
  %2611 = vrot.lane.b32.xlu0 %v1802, 7
  %v2612 = vpop.permute.xlu0 %2611
  %2613 = vrot.lane.b32.xlu0 %v1803, 7
  %v2614 = vpop.permute.xlu0 %2613
  %2615 = vrot.lane.b32.xlu0 %v1804, 7
  %v2616 = vpop.permute.xlu0 %2615
  %2617 = vrot.lane.b32.xlu0 %v1805, 7
  %v2618 = vpop.permute.xlu0 %2617
  %2619 = vrot.lane.b32.xlu0 %v1806, 7
  %v2620 = vpop.permute.xlu0 %2619
  %2621 = vrot.lane.b32.xlu0 %v1807, 7
  %v2622 = vpop.permute.xlu0 %2621
  %2623 = vrot.lane.b32.xlu0 %v1808, 7
  %v2624 = vpop.permute.xlu0 %2623
  %2625 = vrot.lane.b32.xlu0 %v1809, 7
  %v2626 = vpop.permute.xlu0 %2625
  %2627 = vrot.lane.b32.xlu0 %v1810, 7
  %v2628 = vpop.permute.xlu0 %2627
  %2629 = vrot.lane.b32.xlu0 %v1811, 7
  %v2630 = vpop.permute.xlu0 %2629
  %2631 = vrot.lane.b32.xlu0 %v1812, 7
  %v2632 = vpop.permute.xlu0 %2631
  %2633 = vrot.lane.b32.xlu0 %v1813, 7
  %v2634 = vpop.permute.xlu0 %2633
  %2635 = vrot.lane.b32.xlu0 %v1814, 7
  %v2636 = vpop.permute.xlu0 %2635
  %2637 = vrot.lane.b32.xlu0 %v1815, 7
  %v2638 = vpop.permute.xlu0 %2637
  %2639 = vrot.lane.b32.xlu0 %v1816, 7
  %v2640 = vpop.permute.xlu0 %2639
  %2641 = vrot.lane.b32.xlu0 %v1817, 7
  %v2642 = vpop.permute.xlu0 %2641
  %2643 = vrot.lane.b32.xlu0 %v1818, 7
  %v2644 = vpop.permute.xlu0 %2643
  %2645 = vrot.lane.b32.xlu0 %v1819, 7
  %v2646 = vpop.permute.xlu0 %2645
  %2647 = vrot.lane.b32.xlu0 %v1820, 7
  %v2648 = vpop.permute.xlu0 %2647
  %2649 = vrot.lane.b32.xlu0 %v1821, 7
  %v2650 = vpop.permute.xlu0 %2649
  %2651 = vrot.lane.b32.xlu0 %v1822, 7
  %v2652 = vpop.permute.xlu0 %2651
  %2653 = vrot.lane.b32.xlu0 %v1823, 7
  %v2654 = vpop.permute.xlu0 %2653
  %2655 = vrot.lane.b32.xlu0 %v1824, 7
  %v2656 = vpop.permute.xlu0 %2655
  %2689 = vrot.lane.b32.xlu0 %v1953, 8
  %v2690 = vpop.permute.xlu0 %2689
  %2691 = vrot.lane.b32.xlu0 %v1954, 8
  %v2692 = vpop.permute.xlu0 %2691
  %2693 = vrot.lane.b32.xlu0 %v1955, 8
  %v2694 = vpop.permute.xlu0 %2693
  %2695 = vrot.lane.b32.xlu0 %v1956, 8
  %v2696 = vpop.permute.xlu0 %2695
  %2697 = vrot.lane.b32.xlu0 %v1957, 8
  %v2698 = vpop.permute.xlu0 %2697
  %2699 = vrot.lane.b32.xlu0 %v1958, 8
  %v2700 = vpop.permute.xlu0 %2699
  %2701 = vrot.lane.b32.xlu0 %v1959, 8
  %v2702 = vpop.permute.xlu0 %2701
  %2703 = vrot.lane.b32.xlu0 %v1960, 8
  %v2704 = vpop.permute.xlu0 %2703
  %2705 = vrot.lane.b32.xlu0 %v1961, 8
  %v2706 = vpop.permute.xlu0 %2705
  %2707 = vrot.lane.b32.xlu0 %v1962, 8
  %v2708 = vpop.permute.xlu0 %2707
  %2709 = vrot.lane.b32.xlu0 %v1963, 8
  %v2710 = vpop.permute.xlu0 %2709
  %2711 = vrot.lane.b32.xlu0 %v1964, 8
  %v2712 = vpop.permute.xlu0 %2711
  %2713 = vrot.lane.b32.xlu0 %v1965, 8
  %v2714 = vpop.permute.xlu0 %2713
  %2715 = vrot.lane.b32.xlu0 %v1966, 8
  %v2716 = vpop.permute.xlu0 %2715
  %2717 = vrot.lane.b32.xlu0 %v1967, 8
  %v2718 = vpop.permute.xlu0 %2717
  %2719 = vrot.lane.b32.xlu0 %v1968, 8
  %v2720 = vpop.permute.xlu0 %2719
  %2721 = vrot.lane.b32.xlu0 %v1969, 8
  %v2722 = vpop.permute.xlu0 %2721
  %2723 = vrot.lane.b32.xlu0 %v1970, 8
  %v2724 = vpop.permute.xlu0 %2723
  %2725 = vrot.lane.b32.xlu0 %v1971, 8
  %v2726 = vpop.permute.xlu0 %2725
  %2727 = vrot.lane.b32.xlu0 %v1972, 8
  %v2728 = vpop.permute.xlu0 %2727
  %2729 = vrot.lane.b32.xlu0 %v1973, 8
  %v2730 = vpop.permute.xlu0 %2729
  %2731 = vrot.lane.b32.xlu0 %v1974, 8
  %v2732 = vpop.permute.xlu0 %2731
  %2733 = vrot.lane.b32.xlu0 %v1975, 8
  %v2734 = vpop.permute.xlu0 %2733
  %2735 = vrot.lane.b32.xlu0 %v1976, 8
  %v2736 = vpop.permute.xlu0 %2735
  %2737 = vrot.lane.b32.xlu0 %v1977, 8
  %v2738 = vpop.permute.xlu0 %2737
  %2739 = vrot.lane.b32.xlu0 %v1978, 8
  %v2740 = vpop.permute.xlu0 %2739
  %2741 = vrot.lane.b32.xlu0 %v1979, 8
  %v2742 = vpop.permute.xlu0 %2741
  %2743 = vrot.lane.b32.xlu0 %v1980, 8
  %v2744 = vpop.permute.xlu0 %2743
  %2745 = vrot.lane.b32.xlu0 %v1981, 8
  %v2746 = vpop.permute.xlu0 %2745
  %2747 = vrot.lane.b32.xlu0 %v1982, 8
  %v2748 = vpop.permute.xlu0 %2747
  %2749 = vrot.lane.b32.xlu0 %v1983, 8
  %v2750 = vpop.permute.xlu0 %2749
  %2751 = vrot.lane.b32.xlu0 %v1984, 8
  %v2752 = vpop.permute.xlu0 %2751
  %vm2753 = vcmask 7168
  %v2756 = vsel %vm2753, %v928, %v2018
  %v2759 = vsel %vm2753, %v929, %v2020
  %v2762 = vsel %vm2753, %v930, %v2022
  %v2765 = vsel %vm2753, %v931, %v2024
  %v2768 = vsel %vm2753, %v932, %v2026
  %v2771 = vsel %vm2753, %v933, %v2028
  %v2774 = vsel %vm2753, %v934, %v2030
  %v2777 = vsel %vm2753, %v935, %v2032
  %v2780 = vsel %vm2753, %v936, %v2034
  %v2783 = vsel %vm2753, %v937, %v2036
  %v2786 = vsel %vm2753, %v938, %v2038
  %v2789 = vsel %vm2753, %v939, %v2040
  %v2792 = vsel %vm2753, %v940, %v2042
  %v2795 = vsel %vm2753, %v941, %v2044
  %v2798 = vsel %vm2753, %v942, %v2046
  %v2801 = vsel %vm2753, %v943, %v2048
  %v2804 = vsel %vm2753, %v944, %v2050
  %v2807 = vsel %vm2753, %v945, %v2052
  %v2810 = vsel %vm2753, %v946, %v2054
  %v2813 = vsel %vm2753, %v947, %v2056
  %v2816 = vsel %vm2753, %v948, %v2058
  %v2819 = vsel %vm2753, %v949, %v2060
  %v2822 = vsel %vm2753, %v950, %v2062
  %v2825 = vsel %vm2753, %v951, %v2064
  %v2828 = vsel %vm2753, %v952, %v2066
  %v2831 = vsel %vm2753, %v953, %v2068
  %v2834 = vsel %vm2753, %v954, %v2070
  %v2837 = vsel %vm2753, %v955, %v2072
  %v2840 = vsel %vm2753, %v956, %v2074
  %v2843 = vsel %vm2753, %v957, %v2076
  %v2846 = vsel %vm2753, %v958, %v2078
  %v2849 = vsel %vm2753, %v959, %v2080
  %vm2850 = vcmask 15360
  %v2852 = vsel %vm2850, %v2756, %v2114
  %v2854 = vsel %vm2850, %v2759, %v2116
  %v2856 = vsel %vm2850, %v2762, %v2118
  %v2858 = vsel %vm2850, %v2765, %v2120
  %v2860 = vsel %vm2850, %v2768, %v2122
  %v2862 = vsel %vm2850, %v2771, %v2124
  %v2864 = vsel %vm2850, %v2774, %v2126
  %v2866 = vsel %vm2850, %v2777, %v2128
  %v2868 = vsel %vm2850, %v2780, %v2130
  %v2870 = vsel %vm2850, %v2783, %v2132
  %v2872 = vsel %vm2850, %v2786, %v2134
  %v2874 = vsel %vm2850, %v2789, %v2136
  %v2876 = vsel %vm2850, %v2792, %v2138
  %v2878 = vsel %vm2850, %v2795, %v2140
  %v2880 = vsel %vm2850, %v2798, %v2142
  %v2882 = vsel %vm2850, %v2801, %v2144
  %v2884 = vsel %vm2850, %v2804, %v2146
  %v2886 = vsel %vm2850, %v2807, %v2148
  %v2888 = vsel %vm2850, %v2810, %v2150
  %v2890 = vsel %vm2850, %v2813, %v2152
  %v2892 = vsel %vm2850, %v2816, %v2154
  %v2894 = vsel %vm2850, %v2819, %v2156
  %v2896 = vsel %vm2850, %v2822, %v2158
  %v2898 = vsel %vm2850, %v2825, %v2160
  %v2900 = vsel %vm2850, %v2828, %v2162
  %v2902 = vsel %vm2850, %v2831, %v2164
  %v2904 = vsel %vm2850, %v2834, %v2166
  %v2906 = vsel %vm2850, %v2837, %v2168
  %v2908 = vsel %vm2850, %v2840, %v2170
  %v2910 = vsel %vm2850, %v2843, %v2172
  %v2912 = vsel %vm2850, %v2846, %v2174
  %v2914 = vsel %vm2850, %v2849, %v2176
  %vm2915 = vcmask 23552
  %v2917 = vsel %vm2915, %v2852, %v2210
  %v2919 = vsel %vm2915, %v2854, %v2212
  %v2921 = vsel %vm2915, %v2856, %v2214
  %v2923 = vsel %vm2915, %v2858, %v2216
  %v2925 = vsel %vm2915, %v2860, %v2218
  %v2927 = vsel %vm2915, %v2862, %v2220
  %v2929 = vsel %vm2915, %v2864, %v2222
  %v2931 = vsel %vm2915, %v2866, %v2224
  %v2933 = vsel %vm2915, %v2868, %v2226
  %v2935 = vsel %vm2915, %v2870, %v2228
  %v2937 = vsel %vm2915, %v2872, %v2230
  %v2939 = vsel %vm2915, %v2874, %v2232
  %v2941 = vsel %vm2915, %v2876, %v2234
  %v2943 = vsel %vm2915, %v2878, %v2236
  %v2945 = vsel %vm2915, %v2880, %v2238
  %v2947 = vsel %vm2915, %v2882, %v2240
  %v2949 = vsel %vm2915, %v2884, %v2242
  %v2951 = vsel %vm2915, %v2886, %v2244
  %v2953 = vsel %vm2915, %v2888, %v2246
  %v2955 = vsel %vm2915, %v2890, %v2248
  %v2957 = vsel %vm2915, %v2892, %v2250
  %v2959 = vsel %vm2915, %v2894, %v2252
  %v2961 = vsel %vm2915, %v2896, %v2254
  %v2963 = vsel %vm2915, %v2898, %v2256
  %v2965 = vsel %vm2915, %v2900, %v2258
  %v2967 = vsel %vm2915, %v2902, %v2260
  %v2969 = vsel %vm2915, %v2904, %v2262
  %v2971 = vsel %vm2915, %v2906, %v2264
  %v2973 = vsel %vm2915, %v2908, %v2266
  %v2975 = vsel %vm2915, %v2910, %v2268
  %v2977 = vsel %vm2915, %v2912, %v2270
  %v2979 = vsel %vm2915, %v2914, %v2272
  %vm2980 = vcmask 31744
  %v2982 = vsel %vm2980, %v2917, %v2306
  %v2984 = vsel %vm2980, %v2919, %v2308
  %v2986 = vsel %vm2980, %v2921, %v2310
  %v2988 = vsel %vm2980, %v2923, %v2312
  %v2990 = vsel %vm2980, %v2925, %v2314
  %v2992 = vsel %vm2980, %v2927, %v2316
  %v2994 = vsel %vm2980, %v2929, %v2318
  %v2996 = vsel %vm2980, %v2931, %v2320
  %v2998 = vsel %vm2980, %v2933, %v2322
  %v3000 = vsel %vm2980, %v2935, %v2324
  %v3002 = vsel %vm2980, %v2937, %v2326
  %v3004 = vsel %vm2980, %v2939, %v2328
  %v3006 = vsel %vm2980, %v2941, %v2330
  %v3008 = vsel %vm2980, %v2943, %v2332
  %v3010 = vsel %vm2980, %v2945, %v2334
  %v3012 = vsel %vm2980, %v2947, %v2336
  %v3014 = vsel %vm2980, %v2949, %v2338
  %v3016 = vsel %vm2980, %v2951, %v2340
  %v3018 = vsel %vm2980, %v2953, %v2342
  %v3020 = vsel %vm2980, %v2955, %v2344
  %v3022 = vsel %vm2980, %v2957, %v2346
  %v3024 = vsel %vm2980, %v2959, %v2348
  %v3026 = vsel %vm2980, %v2961, %v2350
  %v3028 = vsel %vm2980, %v2963, %v2352
  %v3030 = vsel %vm2980, %v2965, %v2354
  %v3032 = vsel %vm2980, %v2967, %v2356
  %v3034 = vsel %vm2980, %v2969, %v2358
  %v3036 = vsel %vm2980, %v2971, %v2360
  %v3038 = vsel %vm2980, %v2973, %v2362
  %v3040 = vsel %vm2980, %v2975, %v2364
  %v3042 = vsel %vm2980, %v2977, %v2366
  %v3044 = vsel %vm2980, %v2979, %v2368
  %vm3045 = vcmask 39936
  %v3047 = vsel %vm3045, %v2982, %v2402
  %v3049 = vsel %vm3045, %v2984, %v2404
  %v3051 = vsel %vm3045, %v2986, %v2406
  %v3053 = vsel %vm3045, %v2988, %v2408
  %v3055 = vsel %vm3045, %v2990, %v2410
  %v3057 = vsel %vm3045, %v2992, %v2412
  %v3059 = vsel %vm3045, %v2994, %v2414
  %v3061 = vsel %vm3045, %v2996, %v2416
  %v3063 = vsel %vm3045, %v2998, %v2418
  %v3065 = vsel %vm3045, %v3000, %v2420
  %v3067 = vsel %vm3045, %v3002, %v2422
  %v3069 = vsel %vm3045, %v3004, %v2424
  %v3071 = vsel %vm3045, %v3006, %v2426
  %v3073 = vsel %vm3045, %v3008, %v2428
  %v3075 = vsel %vm3045, %v3010, %v2430
  %v3077 = vsel %vm3045, %v3012, %v2432
  %v3079 = vsel %vm3045, %v3014, %v2434
  %v3081 = vsel %vm3045, %v3016, %v2436
  %v3083 = vsel %vm3045, %v3018, %v2438
  %v3085 = vsel %vm3045, %v3020, %v2440
  %v3087 = vsel %vm3045, %v3022, %v2442
  %v3089 = vsel %vm3045, %v3024, %v2444
  %v3091 = vsel %vm3045, %v3026, %v2446
  %v3093 = vsel %vm3045, %v3028, %v2448
  %v3095 = vsel %vm3045, %v3030, %v2450
  %v3097 = vsel %vm3045, %v3032, %v2452
  %v3099 = vsel %vm3045, %v3034, %v2454
  %v3101 = vsel %vm3045, %v3036, %v2456
  %v3103 = vsel %vm3045, %v3038, %v2458
  %v3105 = vsel %vm3045, %v3040, %v2460
  %v3107 = vsel %vm3045, %v3042, %v2462
  %v3109 = vsel %vm3045, %v3044, %v2464
  %vm3110 = vcmask 48128
  %v3112 = vsel %vm3110, %v3047, %v2498
  %v3114 = vsel %vm3110, %v3049, %v2500
  %v3116 = vsel %vm3110, %v3051, %v2502
  %v3118 = vsel %vm3110, %v3053, %v2504
  %v3120 = vsel %vm3110, %v3055, %v2506
  %v3122 = vsel %vm3110, %v3057, %v2508
  %v3124 = vsel %vm3110, %v3059, %v2510
  %v3126 = vsel %vm3110, %v3061, %v2512
  %v3128 = vsel %vm3110, %v3063, %v2514
  %v3130 = vsel %vm3110, %v3065, %v2516
  %v3132 = vsel %vm3110, %v3067, %v2518
  %v3134 = vsel %vm3110, %v3069, %v2520
  %v3136 = vsel %vm3110, %v3071, %v2522
  %v3138 = vsel %vm3110, %v3073, %v2524
  %v3140 = vsel %vm3110, %v3075, %v2526
  %v3142 = vsel %vm3110, %v3077, %v2528
  %v3144 = vsel %vm3110, %v3079, %v2530
  %v3146 = vsel %vm3110, %v3081, %v2532
  %v3148 = vsel %vm3110, %v3083, %v2534
  %v3150 = vsel %vm3110, %v3085, %v2536
  %v3152 = vsel %vm3110, %v3087, %v2538
  %v3154 = vsel %vm3110, %v3089, %v2540
  %v3156 = vsel %vm3110, %v3091, %v2542
  %v3158 = vsel %vm3110, %v3093, %v2544
  %v3160 = vsel %vm3110, %v3095, %v2546
  %v3162 = vsel %vm3110, %v3097, %v2548
  %v3164 = vsel %vm3110, %v3099, %v2550
  %v3166 = vsel %vm3110, %v3101, %v2552
  %v3168 = vsel %vm3110, %v3103, %v2554
  %v3170 = vsel %vm3110, %v3105, %v2556
  %v3172 = vsel %vm3110, %v3107, %v2558
  %v3174 = vsel %vm3110, %v3109, %v2560
  %vm3175 = vcmask 56320
  %v3177 = vsel %vm3175, %v3112, %v2594
  %v3179 = vsel %vm3175, %v3114, %v2596
  %v3181 = vsel %vm3175, %v3116, %v2598
  %v3183 = vsel %vm3175, %v3118, %v2600
  %v3185 = vsel %vm3175, %v3120, %v2602
  %v3187 = vsel %vm3175, %v3122, %v2604
  %v3189 = vsel %vm3175, %v3124, %v2606
  %v3191 = vsel %vm3175, %v3126, %v2608
  %v3193 = vsel %vm3175, %v3128, %v2610
  %v3195 = vsel %vm3175, %v3130, %v2612
  %v3197 = vsel %vm3175, %v3132, %v2614
  %v3199 = vsel %vm3175, %v3134, %v2616
  %v3201 = vsel %vm3175, %v3136, %v2618
  %v3203 = vsel %vm3175, %v3138, %v2620
  %v3205 = vsel %vm3175, %v3140, %v2622
  %v3207 = vsel %vm3175, %v3142, %v2624
  %v3209 = vsel %vm3175, %v3144, %v2626
  %v3211 = vsel %vm3175, %v3146, %v2628
  %v3213 = vsel %vm3175, %v3148, %v2630
  %v3215 = vsel %vm3175, %v3150, %v2632
  %v3217 = vsel %vm3175, %v3152, %v2634
  %v3219 = vsel %vm3175, %v3154, %v2636
  %v3221 = vsel %vm3175, %v3156, %v2638
  %v3223 = vsel %vm3175, %v3158, %v2640
  %v3225 = vsel %vm3175, %v3160, %v2642
  %v3227 = vsel %vm3175, %v3162, %v2644
  %v3229 = vsel %vm3175, %v3164, %v2646
  %v3231 = vsel %vm3175, %v3166, %v2648
  %v3233 = vsel %vm3175, %v3168, %v2650
  %v3235 = vsel %vm3175, %v3170, %v2652
  %v3237 = vsel %vm3175, %v3172, %v2654
  %v3239 = vsel %vm3175, %v3174, %v2656
  %vm3240 = vcmask 64512
  %v3242 = vsel %vm3240, %v3177, %v2690
  %v3244 = vsel %vm3240, %v3179, %v2692
  %v3246 = vsel %vm3240, %v3181, %v2694
  %v3248 = vsel %vm3240, %v3183, %v2696
  %v3250 = vsel %vm3240, %v3185, %v2698
  %v3252 = vsel %vm3240, %v3187, %v2700
  %v3254 = vsel %vm3240, %v3189, %v2702
  %v3256 = vsel %vm3240, %v3191, %v2704
  %v3258 = vsel %vm3240, %v3193, %v2706
  %v3260 = vsel %vm3240, %v3195, %v2708
  %v3262 = vsel %vm3240, %v3197, %v2710
  %v3264 = vsel %vm3240, %v3199, %v2712
  %v3266 = vsel %vm3240, %v3201, %v2714
  %v3268 = vsel %vm3240, %v3203, %v2716
  %v3270 = vsel %vm3240, %v3205, %v2718
  %v3272 = vsel %vm3240, %v3207, %v2720
  %v3274 = vsel %vm3240, %v3209, %v2722
  %v3276 = vsel %vm3240, %v3211, %v2724
  %v3278 = vsel %vm3240, %v3213, %v2726
  %v3280 = vsel %vm3240, %v3215, %v2728
  %v3282 = vsel %vm3240, %v3217, %v2730
  %v3284 = vsel %vm3240, %v3219, %v2732
  %v3286 = vsel %vm3240, %v3221, %v2734
  %v3288 = vsel %vm3240, %v3223, %v2736
  %v3290 = vsel %vm3240, %v3225, %v2738
  %v3292 = vsel %vm3240, %v3227, %v2740
  %v3294 = vsel %vm3240, %v3229, %v2742
  %v3296 = vsel %vm3240, %v3231, %v2744
  %v3298 = vsel %vm3240, %v3233, %v2746
  %v3300 = vsel %vm3240, %v3235, %v2748
  %v3302 = vsel %vm3240, %v3237, %v2750
  %v3304 = vsel %vm3240, %v3239, %v2752
  %v3305 = vld [vmem:[%s1] sm:$0xf]
  %v3306 = vld [vmem:[%s1 + $0x4] sm:$0x1]
  %v3309 = vunpack.c.l.b16 %v3305
  %v3310 = vunpack.c.l.b16 %v3306
  %v3311 = vpack.c.b16 %v3310, %v3309
  %vm3312 = vcmask 72704
  %v3313 = vsel %vm3312, %v3242, 0
  %v3315 = vsel %vm3312, %v3244, 0
  %v3317 = vsel %vm3312, %v3246, 0
  %v3319 = vsel %vm3312, %v3248, 0
  %v3321 = vsel %vm3312, %v3250, 0
  %v3323 = vsel %vm3312, %v3252, 0
  %v3325 = vsel %vm3312, %v3254, 0
  %v3327 = vsel %vm3312, %v3256, 0
  %v3329 = vsel %vm3312, %v3258, 0
  %v3331 = vsel %vm3312, %v3260, 0
  %v3333 = vsel %vm3312, %v3262, 0
  %v3335 = vsel %vm3312, %v3264, 0
  %v3337 = vsel %vm3312, %v3266, 0
  %v3339 = vsel %vm3312, %v3268, 0
  %v3341 = vsel %vm3312, %v3270, 0
  %v3343 = vsel %vm3312, %v3272, 0
  %v3345 = vsel %vm3312, %v3274, 0
  %v3347 = vsel %vm3312, %v3276, 0
  %v3349 = vsel %vm3312, %v3278, 0
  %v3351 = vsel %vm3312, %v3280, 0
  %v3353 = vsel %vm3312, %v3282, 0
  %v3355 = vsel %vm3312, %v3284, 0
  %v3357 = vsel %vm3312, %v3286, 0
  %v3359 = vsel %vm3312, %v3288, 0
  %v3361 = vsel %vm3312, %v3290, 0
  %v3363 = vsel %vm3312, %v3292, 0
  %v3365 = vsel %vm3312, %v3294, 0
  %v3367 = vsel %vm3312, %v3296, 0
  %v3369 = vsel %vm3312, %v3298, 0
  %v3371 = vsel %vm3312, %v3300, 0
  %v3373 = vsel %vm3312, %v3302, 0
  %v3375 = vsel %vm3312, %v3304, 0
  %vm3377 = vcmask 1043456
  %vm3378 = vcmask 1044480
  %v3379 = vsel %vm3377, 4294967295, 65535
  %v3380 = vsel %vm3378, %v3379, 0
  %v3382 = vand.u32 %v3311, %v3380
  %3384 = vmatprep.subr.bf16.mxu0 0
  %3385 = vmatpush1.bf16.msra.mxu0 0
  %3386 = vmatprep.subr.bf16.mxu0 0
  %3387 = vmatpush1.bf16.msra.mxu0 0
  %3388 = vmatprep.subr.bf16.mxu0 0
  %3389 = vmatpush1.bf16.msra.mxu0 0
  %3390 = vmatprep.subr.bf16.mxu0 0
  %3391 = vmatpush1.bf16.msra.mxu0 0
  %3392 = vmatprep.subr.bf16.mxu0 0
  %3393 = vmatpush1.bf16.msra.mxu0 0
  %3394 = vmatprep.subr.bf16.mxu0 0
  %3395 = vmatpush1.bf16.msra.mxu0 0
  %3396 = vmatprep.subr.bf16.mxu0 0
  %3397 = vmatpush1.bf16.msra.mxu0 0
  %3398 = vmatprep.subr.bf16.mxu0 0
  %3399 = vmatpush1.bf16.msra.mxu0 %v3382
  %3400 = vmatprep.subr.bf16.mxu0 0
  %3401 = vmatpush2.bf16.msra.mxu0 0
  %3402 = vmatprep.subr.bf16.mxu0 0
  %3403 = vmatpush2.bf16.msra.mxu0 0
  %3404 = vmatprep.subr.bf16.mxu0 0
  %3405 = vmatpush2.bf16.msra.mxu0 0
  %3406 = vmatprep.subr.bf16.mxu0 0
  %3407 = vmatpush2.bf16.msra.mxu0 0
  %3408 = vmatprep.subr.bf16.mxu0 0
  %3409 = vmatpush2.bf16.msra.mxu0 0
  %3410 = vmatprep.subr.bf16.mxu0 0
  %3411 = vmatpush2.bf16.msra.mxu0 0
  %3412 = vmatprep.subr.bf16.mxu0 0
  %3413 = vmatpush2.bf16.msra.mxu0 0
  %3414 = vmatprep.subr.bf16.mxu0 0
  %3415 = vmatpush2.bf16.msra.mxu0 0
  %3416 = vmatprep.mubr.bf16.mxu0 0
  %3417 = vmatmul.mubr.bf16.gmra.mxu0 %v3313
  %v3418 = vpop.f32.mrf.mxu0
  %v3419 = vadd.f32 0.0, %v3418
  %v3420 = vpop.f32.mrf.mxu0
  %v3421 = vpop.f32.mrf.mxu0
  %v3422 = vadd.f32 0.0, %v3421
  %v3423 = vpop.f32.mrf.mxu0
  %3424 = vmatprep.mubr.bf16.mxu0 0
  %3425 = vmatmul.mubr.bf16.gmra.mxu0 %v3315
  %v3426 = vpop.f32.mrf.mxu0
  %v3427 = vadd.f32 0.0, %v3426
  %v3428 = vpop.f32.mrf.mxu0
  %v3429 = vpop.f32.mrf.mxu0
  %v3430 = vadd.f32 0.0, %v3429
  %v3431 = vpop.f32.mrf.mxu0
  %3432 = vmatprep.mubr.bf16.mxu0 0
  %3433 = vmatmul.mubr.bf16.gmra.mxu0 %v3317
  %v3434 = vpop.f32.mrf.mxu0
  %v3435 = vadd.f32 0.0, %v3434
  %v3436 = vpop.f32.mrf.mxu0
  %v3437 = vpop.f32.mrf.mxu0
  %v3438 = vadd.f32 0.0, %v3437
  %v3439 = vpop.f32.mrf.mxu0
  %3440 = vmatprep.mubr.bf16.mxu0 0
  %3441 = vmatmul.mubr.bf16.gmra.mxu0 %v3319
  %v3442 = vpop.f32.mrf.mxu0
  %v3443 = vadd.f32 0.0, %v3442
  %v3444 = vpop.f32.mrf.mxu0
  %v3445 = vpop.f32.mrf.mxu0
  %v3446 = vadd.f32 0.0, %v3445
  %v3447 = vpop.f32.mrf.mxu0
  %3448 = vmatprep.mubr.bf16.mxu0 0
  %3449 = vmatmul.mubr.bf16.gmra.mxu0 %v3321
  %v3450 = vpop.f32.mrf.mxu0
  %v3451 = vadd.f32 0.0, %v3450
  %v3452 = vpop.f32.mrf.mxu0
  %v3453 = vpop.f32.mrf.mxu0
  %v3454 = vadd.f32 0.0, %v3453
  %v3455 = vpop.f32.mrf.mxu0
  %3456 = vmatprep.mubr.bf16.mxu0 0
  %3457 = vmatmul.mubr.bf16.gmra.mxu0 %v3323
  %v3458 = vpop.f32.mrf.mxu0
  %v3459 = vadd.f32 0.0, %v3458
  %v3460 = vpop.f32.mrf.mxu0
  %v3461 = vpop.f32.mrf.mxu0
  %v3462 = vadd.f32 0.0, %v3461
  %v3463 = vpop.f32.mrf.mxu0
  %3464 = vmatprep.mubr.bf16.mxu0 0
  %3465 = vmatmul.mubr.bf16.gmra.mxu0 %v3325
  %v3466 = vpop.f32.mrf.mxu0
  %v3467 = vadd.f32 0.0, %v3466
  %v3468 = vpop.f32.mrf.mxu0
  %v3469 = vpop.f32.mrf.mxu0
  %v3470 = vadd.f32 0.0, %v3469
  %v3471 = vpop.f32.mrf.mxu0
  %3472 = vmatprep.mubr.bf16.mxu0 0
  %3473 = vmatmul.mubr.bf16.gmra.mxu0 %v3327
  %v3474 = vpop.f32.mrf.mxu0
  %v3475 = vadd.f32 0.0, %v3474
  %v3476 = vpop.f32.mrf.mxu0
  %v3477 = vpop.f32.mrf.mxu0
  %v3478 = vadd.f32 0.0, %v3477
  %v3479 = vpop.f32.mrf.mxu0
  %3480 = vmatprep.mubr.bf16.mxu0 0
  %3481 = vmatmul.mubr.bf16.gmra.mxu0 %v3329
  %v3482 = vpop.f32.mrf.mxu0
  %v3483 = vadd.f32 0.0, %v3482
  %v3484 = vpop.f32.mrf.mxu0
  %v3485 = vpop.f32.mrf.mxu0
  %v3486 = vadd.f32 0.0, %v3485
  %v3487 = vpop.f32.mrf.mxu0
  %3488 = vmatprep.mubr.bf16.mxu0 0
  %3489 = vmatmul.mubr.bf16.gmra.mxu0 %v3331
  %v3490 = vpop.f32.mrf.mxu0
  %v3491 = vadd.f32 0.0, %v3490
  %v3492 = vpop.f32.mrf.mxu0
  %v3493 = vpop.f32.mrf.mxu0
  %v3494 = vadd.f32 0.0, %v3493
  %v3495 = vpop.f32.mrf.mxu0
  %3496 = vmatprep.mubr.bf16.mxu0 0
  %3497 = vmatmul.mubr.bf16.gmra.mxu0 %v3333
  %v3498 = vpop.f32.mrf.mxu0
  %v3499 = vadd.f32 0.0, %v3498
  %v3500 = vpop.f32.mrf.mxu0
  %v3501 = vpop.f32.mrf.mxu0
  %v3502 = vadd.f32 0.0, %v3501
  %v3503 = vpop.f32.mrf.mxu0
  %3504 = vmatprep.mubr.bf16.mxu0 0
  %3505 = vmatmul.mubr.bf16.gmra.mxu0 %v3335
  %v3506 = vpop.f32.mrf.mxu0
  %v3507 = vadd.f32 0.0, %v3506
  %v3508 = vpop.f32.mrf.mxu0
  %v3509 = vpop.f32.mrf.mxu0
  %v3510 = vadd.f32 0.0, %v3509
  %v3511 = vpop.f32.mrf.mxu0
  %3512 = vmatprep.mubr.bf16.mxu0 0
  %3513 = vmatmul.mubr.bf16.gmra.mxu0 %v3337
  %v3514 = vpop.f32.mrf.mxu0
  %v3515 = vadd.f32 0.0, %v3514
  %v3516 = vpop.f32.mrf.mxu0
  %v3517 = vpop.f32.mrf.mxu0
  %v3518 = vadd.f32 0.0, %v3517
  %v3519 = vpop.f32.mrf.mxu0
  %3520 = vmatprep.mubr.bf16.mxu0 0
  %3521 = vmatmul.mubr.bf16.gmra.mxu0 %v3339
  %v3522 = vpop.f32.mrf.mxu0
  %v3523 = vadd.f32 0.0, %v3522
  %v3524 = vpop.f32.mrf.mxu0
  %v3525 = vpop.f32.mrf.mxu0
  %v3526 = vadd.f32 0.0, %v3525
  %v3527 = vpop.f32.mrf.mxu0
  %3528 = vmatprep.mubr.bf16.mxu0 0
  %3529 = vmatmul.mubr.bf16.gmra.mxu0 %v3341
  %v3530 = vpop.f32.mrf.mxu0
  %v3531 = vadd.f32 0.0, %v3530
  %v3532 = vpop.f32.mrf.mxu0
  %v3533 = vpop.f32.mrf.mxu0
  %v3534 = vadd.f32 0.0, %v3533
  %v3535 = vpop.f32.mrf.mxu0
  %3536 = vmatprep.mubr.bf16.mxu0 0
  %3537 = vmatmul.mubr.bf16.gmra.mxu0 %v3343
  %v3538 = vpop.f32.mrf.mxu0
  %v3539 = vadd.f32 0.0, %v3538
  %v3540 = vpop.f32.mrf.mxu0
  %v3541 = vpop.f32.mrf.mxu0
  %v3542 = vadd.f32 0.0, %v3541
  %v3543 = vpop.f32.mrf.mxu0
  %3544 = vmatprep.mubr.bf16.mxu0 0
  %3545 = vmatmul.mubr.bf16.gmra.mxu0 %v3345
  %v3546 = vpop.f32.mrf.mxu0
  %v3547 = vadd.f32 0.0, %v3546
  %v3548 = vpop.f32.mrf.mxu0
  %v3549 = vpop.f32.mrf.mxu0
  %v3550 = vadd.f32 0.0, %v3549
  %v3551 = vpop.f32.mrf.mxu0
  %3552 = vmatprep.mubr.bf16.mxu0 0
  %3553 = vmatmul.mubr.bf16.gmra.mxu0 %v3347
  %v3554 = vpop.f32.mrf.mxu0
  %v3555 = vadd.f32 0.0, %v3554
  %v3556 = vpop.f32.mrf.mxu0
  %v3557 = vpop.f32.mrf.mxu0
  %v3558 = vadd.f32 0.0, %v3557
  %v3559 = vpop.f32.mrf.mxu0
  %3560 = vmatprep.mubr.bf16.mxu0 0
  %3561 = vmatmul.mubr.bf16.gmra.mxu0 %v3349
  %v3562 = vpop.f32.mrf.mxu0
  %v3563 = vadd.f32 0.0, %v3562
  %v3564 = vpop.f32.mrf.mxu0
  %v3565 = vpop.f32.mrf.mxu0
  %v3566 = vadd.f32 0.0, %v3565
  %v3567 = vpop.f32.mrf.mxu0
  %3568 = vmatprep.mubr.bf16.mxu0 0
  %3569 = vmatmul.mubr.bf16.gmra.mxu0 %v3351
  %v3570 = vpop.f32.mrf.mxu0
  %v3571 = vadd.f32 0.0, %v3570
  %v3572 = vpop.f32.mrf.mxu0
  %v3573 = vpop.f32.mrf.mxu0
  %v3574 = vadd.f32 0.0, %v3573
  %v3575 = vpop.f32.mrf.mxu0
  %3576 = vmatprep.mubr.bf16.mxu0 0
  %3577 = vmatmul.mubr.bf16.gmra.mxu0 %v3353
  %v3578 = vpop.f32.mrf.mxu0
  %v3579 = vadd.f32 0.0, %v3578
  %v3580 = vpop.f32.mrf.mxu0
  %v3581 = vpop.f32.mrf.mxu0
  %v3582 = vadd.f32 0.0, %v3581
  %v3583 = vpop.f32.mrf.mxu0
  %3584 = vmatprep.mubr.bf16.mxu0 0
  %3585 = vmatmul.mubr.bf16.gmra.mxu0 %v3355
  %v3586 = vpop.f32.mrf.mxu0
  %v3587 = vadd.f32 0.0, %v3586
  %v3588 = vpop.f32.mrf.mxu0
  %v3589 = vpop.f32.mrf.mxu0
  %v3590 = vadd.f32 0.0, %v3589
  %v3591 = vpop.f32.mrf.mxu0
  %3592 = vmatprep.mubr.bf16.mxu0 0
  %3593 = vmatmul.mubr.bf16.gmra.mxu0 %v3357
  %v3594 = vpop.f32.mrf.mxu0
  %v3595 = vadd.f32 0.0, %v3594
  %v3596 = vpop.f32.mrf.mxu0
  %v3597 = vpop.f32.mrf.mxu0
  %v3598 = vadd.f32 0.0, %v3597
  %v3599 = vpop.f32.mrf.mxu0
  %3600 = vmatprep.mubr.bf16.mxu0 0
  %3601 = vmatmul.mubr.bf16.gmra.mxu0 %v3359
  %v3602 = vpop.f32.mrf.mxu0
  %v3603 = vadd.f32 0.0, %v3602
  %v3604 = vpop.f32.mrf.mxu0
  %v3605 = vpop.f32.mrf.mxu0
  %v3606 = vadd.f32 0.0, %v3605
  %v3607 = vpop.f32.mrf.mxu0
  %3608 = vmatprep.mubr.bf16.mxu0 0
  %3609 = vmatmul.mubr.bf16.gmra.mxu0 %v3361
  %v3610 = vpop.f32.mrf.mxu0
  %v3611 = vadd.f32 0.0, %v3610
  %v3612 = vpop.f32.mrf.mxu0
  %v3613 = vpop.f32.mrf.mxu0
  %v3614 = vadd.f32 0.0, %v3613
  %v3615 = vpop.f32.mrf.mxu0
  %3616 = vmatprep.mubr.bf16.mxu0 0
  %3617 = vmatmul.mubr.bf16.gmra.mxu0 %v3363
  %v3618 = vpop.f32.mrf.mxu0
  %v3619 = vadd.f32 0.0, %v3618
  %v3620 = vpop.f32.mrf.mxu0
  %v3621 = vpop.f32.mrf.mxu0
  %v3622 = vadd.f32 0.0, %v3621
  %v3623 = vpop.f32.mrf.mxu0
  %3624 = vmatprep.mubr.bf16.mxu0 0
  %3625 = vmatmul.mubr.bf16.gmra.mxu0 %v3365
  %v3626 = vpop.f32.mrf.mxu0
  %v3627 = vadd.f32 0.0, %v3626
  %v3628 = vpop.f32.mrf.mxu0
  %v3629 = vpop.f32.mrf.mxu0
  %v3630 = vadd.f32 0.0, %v3629
  %v3631 = vpop.f32.mrf.mxu0
  %3632 = vmatprep.mubr.bf16.mxu0 0
  %3633 = vmatmul.mubr.bf16.gmra.mxu0 %v3367
  %v3634 = vpop.f32.mrf.mxu0
  %v3635 = vadd.f32 0.0, %v3634
  %v3636 = vpop.f32.mrf.mxu0
  %v3637 = vpop.f32.mrf.mxu0
  %v3638 = vadd.f32 0.0, %v3637
  %v3639 = vpop.f32.mrf.mxu0
  %3640 = vmatprep.mubr.bf16.mxu0 0
  %3641 = vmatmul.mubr.bf16.gmra.mxu0 %v3369
  %v3642 = vpop.f32.mrf.mxu0
  %v3643 = vadd.f32 0.0, %v3642
  %v3644 = vpop.f32.mrf.mxu0
  %v3645 = vpop.f32.mrf.mxu0
  %v3646 = vadd.f32 0.0, %v3645
  %v3647 = vpop.f32.mrf.mxu0
  %3648 = vmatprep.mubr.bf16.mxu0 0
  %3649 = vmatmul.mubr.bf16.gmra.mxu0 %v3371
  %v3650 = vpop.f32.mrf.mxu0
  %v3651 = vadd.f32 0.0, %v3650
  %v3652 = vpop.f32.mrf.mxu0
  %v3653 = vpop.f32.mrf.mxu0
  %v3654 = vadd.f32 0.0, %v3653
  %v3655 = vpop.f32.mrf.mxu0
  %3656 = vmatprep.mubr.bf16.mxu0 0
  %3657 = vmatmul.mubr.bf16.gmra.mxu0 %v3373
  %v3658 = vpop.f32.mrf.mxu0
  %v3659 = vadd.f32 0.0, %v3658
  %v3660 = vpop.f32.mrf.mxu0
  %v3661 = vpop.f32.mrf.mxu0
  %v3662 = vadd.f32 0.0, %v3661
  %v3663 = vpop.f32.mrf.mxu0
  %3664 = vmatprep.mubr.bf16.mxu0 0
  %3665 = vmatmul.mubr.bf16.gmra.mxu0 %v3375
  %v3666 = vpop.f32.mrf.mxu0
  %v3667 = vadd.f32 0.0, %v3666
  %v3668 = vpop.f32.mrf.mxu0
  %v3669 = vpop.f32.mrf.mxu0
  %v3670 = vadd.f32 0.0, %v3669
  %v3671 = vpop.f32.mrf.mxu0
  %3672 = vdwg.mxu0
  %v3673 = vld [vmem:[%s2] sm:$0x1]
  %v3675 = vlaneseq
  %v3676 = vshrl.u32 %v3675, 7
  %v3677 = vsub.s32 0, %v3676
  %v3678 = vrot.slane %v3673, %v3677
  %v3680 = vmul.f32 %v3419, %v3678
  %v3681 = vmul.f32 %v3422, %v3678
  %v3682 = vmul.f32 %v3427, %v3678
  %v3683 = vmul.f32 %v3430, %v3678
  %v3684 = vmul.f32 %v3435, %v3678
  %v3685 = vmul.f32 %v3438, %v3678
  %v3686 = vmul.f32 %v3443, %v3678
  %v3687 = vmul.f32 %v3446, %v3678
  %v3688 = vmul.f32 %v3451, %v3678
  %v3689 = vmul.f32 %v3454, %v3678
  %v3690 = vmul.f32 %v3459, %v3678
  %v3691 = vmul.f32 %v3462, %v3678
  %v3692 = vmul.f32 %v3467, %v3678
  %v3693 = vmul.f32 %v3470, %v3678
  %v3694 = vmul.f32 %v3475, %v3678
  %v3695 = vmul.f32 %v3478, %v3678
  %v3696 = vmul.f32 %v3483, %v3678
  %v3697 = vmul.f32 %v3486, %v3678
  %v3698 = vmul.f32 %v3491, %v3678
  %v3699 = vmul.f32 %v3494, %v3678
  %v3700 = vmul.f32 %v3499, %v3678
  %v3701 = vmul.f32 %v3502, %v3678
  %v3702 = vmul.f32 %v3507, %v3678
  %v3703 = vmul.f32 %v3510, %v3678
  %v3704 = vmul.f32 %v3515, %v3678
  %v3705 = vmul.f32 %v3518, %v3678
  %v3706 = vmul.f32 %v3523, %v3678
  %v3707 = vmul.f32 %v3526, %v3678
  %v3708 = vmul.f32 %v3531, %v3678
  %v3709 = vmul.f32 %v3534, %v3678
  %v3710 = vmul.f32 %v3539, %v3678
  %v3711 = vmul.f32 %v3542, %v3678
  %v3712 = vmul.f32 %v3547, %v3678
  %v3713 = vmul.f32 %v3550, %v3678
  %v3714 = vmul.f32 %v3555, %v3678
  %v3715 = vmul.f32 %v3558, %v3678
  %v3716 = vmul.f32 %v3563, %v3678
  %v3717 = vmul.f32 %v3566, %v3678
  %v3718 = vmul.f32 %v3571, %v3678
  %v3719 = vmul.f32 %v3574, %v3678
  %v3720 = vmul.f32 %v3579, %v3678
  %v3721 = vmul.f32 %v3582, %v3678
  %v3722 = vmul.f32 %v3587, %v3678
  %v3723 = vmul.f32 %v3590, %v3678
  %v3724 = vmul.f32 %v3595, %v3678
  %v3725 = vmul.f32 %v3598, %v3678
  %v3726 = vmul.f32 %v3603, %v3678
  %v3727 = vmul.f32 %v3606, %v3678
  %v3728 = vmul.f32 %v3611, %v3678
  %v3729 = vmul.f32 %v3614, %v3678
  %v3730 = vmul.f32 %v3619, %v3678
  %v3731 = vmul.f32 %v3622, %v3678
  %v3732 = vmul.f32 %v3627, %v3678
  %v3733 = vmul.f32 %v3630, %v3678
  %v3734 = vmul.f32 %v3635, %v3678
  %v3735 = vmul.f32 %v3638, %v3678
  %v3736 = vmul.f32 %v3643, %v3678
  %v3737 = vmul.f32 %v3646, %v3678
  %v3738 = vmul.f32 %v3651, %v3678
  %v3739 = vmul.f32 %v3654, %v3678
  %v3740 = vmul.f32 %v3659, %v3678
  %v3741 = vmul.f32 %v3662, %v3678
  %v3742 = vmul.f32 %v3667, %v3678
  %v3743 = vmul.f32 %v3670, %v3678
  %v3744 = vld [vmem:[%s3] sm:$0x1]
  %v3746 = vlaneseq
  %v3747 = vshrl.u32 %v3746, 7
  %v3748 = vsub.s32 0, %v3747
  %v3749 = vrot.slane %v3744, %v3748
  %v3751 = vadd.f32 %v3680, %v3749
  %v3752 = vadd.f32 %v3681, %v3749
  %v3753 = vadd.f32 %v3682, %v3749
  %v3754 = vadd.f32 %v3683, %v3749
  %v3755 = vadd.f32 %v3684, %v3749
  %v3756 = vadd.f32 %v3685, %v3749
  %v3757 = vadd.f32 %v3686, %v3749
  %v3758 = vadd.f32 %v3687, %v3749
  %v3759 = vadd.f32 %v3688, %v3749
  %v3760 = vadd.f32 %v3689, %v3749
  %v3761 = vadd.f32 %v3690, %v3749
  %v3762 = vadd.f32 %v3691, %v3749
  %v3763 = vadd.f32 %v3692, %v3749
  %v3764 = vadd.f32 %v3693, %v3749
  %v3765 = vadd.f32 %v3694, %v3749
  %v3766 = vadd.f32 %v3695, %v3749
  %v3767 = vadd.f32 %v3696, %v3749
  %v3768 = vadd.f32 %v3697, %v3749
  %v3769 = vadd.f32 %v3698, %v3749
  %v3770 = vadd.f32 %v3699, %v3749
  %v3771 = vadd.f32 %v3700, %v3749
  %v3772 = vadd.f32 %v3701, %v3749
  %v3773 = vadd.f32 %v3702, %v3749
  %v3774 = vadd.f32 %v3703, %v3749
  %v3775 = vadd.f32 %v3704, %v3749
  %v3776 = vadd.f32 %v3705, %v3749
  %v3777 = vadd.f32 %v3706, %v3749
  %v3778 = vadd.f32 %v3707, %v3749
  %v3779 = vadd.f32 %v3708, %v3749
  %v3780 = vadd.f32 %v3709, %v3749
  %v3781 = vadd.f32 %v3710, %v3749
  %v3782 = vadd.f32 %v3711, %v3749
  %v3783 = vadd.f32 %v3712, %v3749
  %v3784 = vadd.f32 %v3713, %v3749
  %v3785 = vadd.f32 %v3714, %v3749
  %v3786 = vadd.f32 %v3715, %v3749
  %v3787 = vadd.f32 %v3716, %v3749
  %v3788 = vadd.f32 %v3717, %v3749
  %v3789 = vadd.f32 %v3718, %v3749
  %v3790 = vadd.f32 %v3719, %v3749
  %v3791 = vadd.f32 %v3720, %v3749
  %v3792 = vadd.f32 %v3721, %v3749
  %v3793 = vadd.f32 %v3722, %v3749
  %v3794 = vadd.f32 %v3723, %v3749
  %v3795 = vadd.f32 %v3724, %v3749
  %v3796 = vadd.f32 %v3725, %v3749
  %v3797 = vadd.f32 %v3726, %v3749
  %v3798 = vadd.f32 %v3727, %v3749
  %v3799 = vadd.f32 %v3728, %v3749
  %v3800 = vadd.f32 %v3729, %v3749
  %v3801 = vadd.f32 %v3730, %v3749
  %v3802 = vadd.f32 %v3731, %v3749
  %v3803 = vadd.f32 %v3732, %v3749
  %v3804 = vadd.f32 %v3733, %v3749
  %v3805 = vadd.f32 %v3734, %v3749
  %v3806 = vadd.f32 %v3735, %v3749
  %v3807 = vadd.f32 %v3736, %v3749
  %v3808 = vadd.f32 %v3737, %v3749
  %v3809 = vadd.f32 %v3738, %v3749
  %v3810 = vadd.f32 %v3739, %v3749
  %v3811 = vadd.f32 %v3740, %v3749
  %v3812 = vadd.f32 %v3741, %v3749
  %v3813 = vadd.f32 %v3742, %v3749
  %v3814 = vadd.f32 %v3743, %v3749
  %v3815 = vmax.f32 %v3751, 0.0
  %v3816 = vmax.f32 %v3752, 0.0
  %v3817 = vmax.f32 %v3753, 0.0
  %v3818 = vmax.f32 %v3754, 0.0
  %v3819 = vmax.f32 %v3755, 0.0
  %v3820 = vmax.f32 %v3756, 0.0
  %v3821 = vmax.f32 %v3757, 0.0
  %v3822 = vmax.f32 %v3758, 0.0
  %v3823 = vmax.f32 %v3759, 0.0
  %v3824 = vmax.f32 %v3760, 0.0
  %v3825 = vmax.f32 %v3761, 0.0
  %v3826 = vmax.f32 %v3762, 0.0
  %v3827 = vmax.f32 %v3763, 0.0
  %v3828 = vmax.f32 %v3764, 0.0
  %v3829 = vmax.f32 %v3765, 0.0
  %v3830 = vmax.f32 %v3766, 0.0
  %v3831 = vmax.f32 %v3767, 0.0
  %v3832 = vmax.f32 %v3768, 0.0
  %v3833 = vmax.f32 %v3769, 0.0
  %v3834 = vmax.f32 %v3770, 0.0
  %v3835 = vmax.f32 %v3771, 0.0
  %v3836 = vmax.f32 %v3772, 0.0
  %v3837 = vmax.f32 %v3773, 0.0
  %v3838 = vmax.f32 %v3774, 0.0
  %v3839 = vmax.f32 %v3775, 0.0
  %v3840 = vmax.f32 %v3776, 0.0
  %v3841 = vmax.f32 %v3777, 0.0
  %v3842 = vmax.f32 %v3778, 0.0
  %v3843 = vmax.f32 %v3779, 0.0
  %v3844 = vmax.f32 %v3780, 0.0
  %v3845 = vmax.f32 %v3781, 0.0
  %v3846 = vmax.f32 %v3782, 0.0
  %v3847 = vmax.f32 %v3783, 0.0
  %v3848 = vmax.f32 %v3784, 0.0
  %v3849 = vmax.f32 %v3785, 0.0
  %v3850 = vmax.f32 %v3786, 0.0
  %v3851 = vmax.f32 %v3787, 0.0
  %v3852 = vmax.f32 %v3788, 0.0
  %v3853 = vmax.f32 %v3789, 0.0
  %v3854 = vmax.f32 %v3790, 0.0
  %v3855 = vmax.f32 %v3791, 0.0
  %v3856 = vmax.f32 %v3792, 0.0
  %v3857 = vmax.f32 %v3793, 0.0
  %v3858 = vmax.f32 %v3794, 0.0
  %v3859 = vmax.f32 %v3795, 0.0
  %v3860 = vmax.f32 %v3796, 0.0
  %v3861 = vmax.f32 %v3797, 0.0
  %v3862 = vmax.f32 %v3798, 0.0
  %v3863 = vmax.f32 %v3799, 0.0
  %v3864 = vmax.f32 %v3800, 0.0
  %v3865 = vmax.f32 %v3801, 0.0
  %v3866 = vmax.f32 %v3802, 0.0
  %v3867 = vmax.f32 %v3803, 0.0
  %v3868 = vmax.f32 %v3804, 0.0
  %v3869 = vmax.f32 %v3805, 0.0
  %v3870 = vmax.f32 %v3806, 0.0
  %v3871 = vmax.f32 %v3807, 0.0
  %v3872 = vmax.f32 %v3808, 0.0
  %v3873 = vmax.f32 %v3809, 0.0
  %v3874 = vmax.f32 %v3810, 0.0
  %v3875 = vmax.f32 %v3811, 0.0
  %v3876 = vmax.f32 %v3812, 0.0
  %v3877 = vmax.f32 %v3813, 0.0
  %v3878 = vmax.f32 %v3814, 0.0
  %v3879 = vrot.slane %v3815, 1
  %v3880 = vrot.slane %v3816, 1
  %v3881 = vrot.slane %v3817, 1
  %v3882 = vrot.slane %v3818, 1
  %v3883 = vrot.slane %v3819, 1
  %v3884 = vrot.slane %v3820, 1
  %v3885 = vrot.slane %v3821, 1
  %v3886 = vrot.slane %v3822, 1
  %v3887 = vrot.slane %v3823, 1
  %v3888 = vrot.slane %v3824, 1
  %v3889 = vrot.slane %v3825, 1
  %v3890 = vrot.slane %v3826, 1
  %v3891 = vrot.slane %v3827, 1
  %v3892 = vrot.slane %v3828, 1
  %v3893 = vrot.slane %v3829, 1
  %v3894 = vrot.slane %v3830, 1
  %v3895 = vrot.slane %v3831, 1
  %v3896 = vrot.slane %v3832, 1
  %v3897 = vrot.slane %v3833, 1
  %v3898 = vrot.slane %v3834, 1
  %v3899 = vrot.slane %v3835, 1
  %v3900 = vrot.slane %v3836, 1
  %v3901 = vrot.slane %v3837, 1
  %v3902 = vrot.slane %v3838, 1
  %v3903 = vrot.slane %v3839, 1
  %v3904 = vrot.slane %v3840, 1
  %v3905 = vrot.slane %v3841, 1
  %v3906 = vrot.slane %v3842, 1
  %v3907 = vrot.slane %v3843, 1
  %v3908 = vrot.slane %v3844, 1
  %v3909 = vrot.slane %v3845, 1
  %v3910 = vrot.slane %v3846, 1
  %v3911 = vrot.slane %v3847, 1
  %v3912 = vrot.slane %v3848, 1
  %v3913 = vrot.slane %v3849, 1
  %v3914 = vrot.slane %v3850, 1
  %v3915 = vrot.slane %v3851, 1
  %v3916 = vrot.slane %v3852, 1
  %v3917 = vrot.slane %v3853, 1
  %v3918 = vrot.slane %v3854, 1
  %v3919 = vrot.slane %v3855, 1
  %v3920 = vrot.slane %v3856, 1
  %v3921 = vrot.slane %v3857, 1
  %v3922 = vrot.slane %v3858, 1
  %v3923 = vrot.slane %v3859, 1
  %v3924 = vrot.slane %v3860, 1
  %v3925 = vrot.slane %v3861, 1
  %v3926 = vrot.slane %v3862, 1
  %v3927 = vrot.slane %v3863, 1
  %v3928 = vrot.slane %v3864, 1
  %v3929 = vrot.slane %v3865, 1
  %v3930 = vrot.slane %v3866, 1
  %v3931 = vrot.slane %v3867, 1
  %v3932 = vrot.slane %v3868, 1
  %v3933 = vrot.slane %v3869, 1
  %v3934 = vrot.slane %v3870, 1
  %v3935 = vrot.slane %v3871, 1
  %v3936 = vrot.slane %v3872, 1
  %v3937 = vrot.slane %v3873, 1
  %v3938 = vrot.slane %v3874, 1
  %v3939 = vrot.slane %v3875, 1
  %v3940 = vrot.slane %v3876, 1
  %v3941 = vrot.slane %v3877, 1
  %v3942 = vrot.slane %v3878, 1
  %v3943 = vsel %vm1120, %v3941, %v3942
  %v3944 = vsel %vm1120, %v3940, %v3941
  %v3945 = vsel %vm1120, %v3939, %v3940
  %v3946 = vsel %vm1120, %v3938, %v3939
  %v3947 = vsel %vm1120, %v3937, %v3938
  %v3948 = vsel %vm1120, %v3936, %v3937
  %v3949 = vsel %vm1120, %v3935, %v3936
  %v3950 = vsel %vm1120, %v3934, %v3935
  %v3951 = vsel %vm1120, %v3933, %v3934
  %v3952 = vsel %vm1120, %v3932, %v3933
  %v3953 = vsel %vm1120, %v3931, %v3932
  %v3954 = vsel %vm1120, %v3930, %v3931
  %v3955 = vsel %vm1120, %v3929, %v3930
  %v3956 = vsel %vm1120, %v3928, %v3929
  %v3957 = vsel %vm1120, %v3927, %v3928
  %v3958 = vsel %vm1120, %v3926, %v3927
  %v3959 = vsel %vm1120, %v3925, %v3926
  %v3960 = vsel %vm1120, %v3924, %v3925
  %v3961 = vsel %vm1120, %v3923, %v3924
  %v3962 = vsel %vm1120, %v3922, %v3923
  %v3963 = vsel %vm1120, %v3921, %v3922
  %v3964 = vsel %vm1120, %v3920, %v3921
  %v3965 = vsel %vm1120, %v3919, %v3920
  %v3966 = vsel %vm1120, %v3918, %v3919
  %v3967 = vsel %vm1120, %v3917, %v3918
  %v3968 = vsel %vm1120, %v3916, %v3917
  %v3969 = vsel %vm1120, %v3915, %v3916
  %v3970 = vsel %vm1120, %v3914, %v3915
  %v3971 = vsel %vm1120, %v3913, %v3914
  %v3972 = vsel %vm1120, %v3912, %v3913
  %v3973 = vsel %vm1120, %v3911, %v3912
  %v3974 = vsel %vm1120, %v3910, %v3911
  %v3975 = vsel %vm1120, %v3909, %v3910
  %v3976 = vsel %vm1120, %v3908, %v3909
  %v3977 = vsel %vm1120, %v3907, %v3908
  %v3978 = vsel %vm1120, %v3906, %v3907
  %v3979 = vsel %vm1120, %v3905, %v3906
  %v3980 = vsel %vm1120, %v3904, %v3905
  %v3981 = vsel %vm1120, %v3903, %v3904
  %v3982 = vsel %vm1120, %v3902, %v3903
  %v3983 = vsel %vm1120, %v3901, %v3902
  %v3984 = vsel %vm1120, %v3900, %v3901
  %v3985 = vsel %vm1120, %v3899, %v3900
  %v3986 = vsel %vm1120, %v3898, %v3899
  %v3987 = vsel %vm1120, %v3897, %v3898
  %v3988 = vsel %vm1120, %v3896, %v3897
  %v3989 = vsel %vm1120, %v3895, %v3896
  %v3990 = vsel %vm1120, %v3894, %v3895
  %v3991 = vsel %vm1120, %v3893, %v3894
  %v3992 = vsel %vm1120, %v3892, %v3893
  %v3993 = vsel %vm1120, %v3891, %v3892
  %v3994 = vsel %vm1120, %v3890, %v3891
  %v3995 = vsel %vm1120, %v3889, %v3890
  %v3996 = vsel %vm1120, %v3888, %v3889
  %v3997 = vsel %vm1120, %v3887, %v3888
  %v3998 = vsel %vm1120, %v3886, %v3887
  %v3999 = vsel %vm1120, %v3885, %v3886
  %v4000 = vsel %vm1120, %v3884, %v3885
  %v4001 = vsel %vm1120, %v3883, %v3884
  %v4002 = vsel %vm1120, %v3882, %v3883
  %v4003 = vsel %vm1120, %v3881, %v3882
  %v4004 = vsel %vm1120, %v3880, %v3881
  %v4005 = vsel %vm1120, %v3879, %v3880
  %v4006 = vsel %vm1120, %v3942, %v3879
  %v4007 = vmax.f32 %v3815, %v4005
  %v4008 = vmax.f32 %v3816, %v4004
  %v4009 = vmax.f32 %v3817, %v4003
  %v4010 = vmax.f32 %v3818, %v4002
  %v4011 = vmax.f32 %v3819, %v4001
  %v4012 = vmax.f32 %v3820, %v4000
  %v4013 = vmax.f32 %v3821, %v3999
  %v4014 = vmax.f32 %v3822, %v3998
  %v4015 = vmax.f32 %v3823, %v3997
  %v4016 = vmax.f32 %v3824, %v3996
  %v4017 = vmax.f32 %v3825, %v3995
  %v4018 = vmax.f32 %v3826, %v3994
  %v4019 = vmax.f32 %v3827, %v3993
  %v4020 = vmax.f32 %v3828, %v3992
  %v4021 = vmax.f32 %v3829, %v3991
  %v4022 = vmax.f32 %v3830, %v3990
  %v4023 = vmax.f32 %v3831, %v3989
  %v4024 = vmax.f32 %v3832, %v3988
  %v4025 = vmax.f32 %v3833, %v3987
  %v4026 = vmax.f32 %v3834, %v3986
  %v4027 = vmax.f32 %v3835, %v3985
  %v4028 = vmax.f32 %v3836, %v3984
  %v4029 = vmax.f32 %v3837, %v3983
  %v4030 = vmax.f32 %v3838, %v3982
  %v4031 = vmax.f32 %v3839, %v3981
  %v4032 = vmax.f32 %v3840, %v3980
  %v4033 = vmax.f32 %v3841, %v3979
  %v4034 = vmax.f32 %v3842, %v3978
  %v4035 = vmax.f32 %v3843, %v3977
  %v4036 = vmax.f32 %v3844, %v3976
  %v4037 = vmax.f32 %v3845, %v3975
  %v4038 = vmax.f32 %v3846, %v3974
  %v4039 = vmax.f32 %v3847, %v3973
  %v4040 = vmax.f32 %v3848, %v3972
  %v4041 = vmax.f32 %v3849, %v3971
  %v4042 = vmax.f32 %v3850, %v3970
  %v4043 = vmax.f32 %v3851, %v3969
  %v4044 = vmax.f32 %v3852, %v3968
  %v4045 = vmax.f32 %v3853, %v3967
  %v4046 = vmax.f32 %v3854, %v3966
  %v4047 = vmax.f32 %v3855, %v3965
  %v4048 = vmax.f32 %v3856, %v3964
  %v4049 = vmax.f32 %v3857, %v3963
  %v4050 = vmax.f32 %v3858, %v3962
  %v4051 = vmax.f32 %v3859, %v3961
  %v4052 = vmax.f32 %v3860, %v3960
  %v4053 = vmax.f32 %v3861, %v3959
  %v4054 = vmax.f32 %v3862, %v3958
  %v4055 = vmax.f32 %v3863, %v3957
  %v4056 = vmax.f32 %v3864, %v3956
  %v4057 = vmax.f32 %v3865, %v3955
  %v4058 = vmax.f32 %v3866, %v3954
  %v4059 = vmax.f32 %v3867, %v3953
  %v4060 = vmax.f32 %v3868, %v3952
  %v4061 = vmax.f32 %v3869, %v3951
  %v4062 = vmax.f32 %v3870, %v3950
  %v4063 = vmax.f32 %v3871, %v3949
  %v4064 = vmax.f32 %v3872, %v3948
  %v4065 = vmax.f32 %v3873, %v3947
  %v4066 = vmax.f32 %v3874, %v3946
  %v4067 = vmax.f32 %v3875, %v3945
  %v4068 = vmax.f32 %v3876, %v3944
  %v4069 = vmax.f32 %v3877, %v3943
  %v4070 = vmax.f32 %v3878, %v4006
  %v4071 = vmax.f32 %v4007, %v4009
  %v4072 = vmax.f32 %v4008, %v4010
  %v4073 = vmax.f32 %v4009, %v4011
  %v4074 = vmax.f32 %v4010, %v4012
  %v4075 = vmax.f32 %v4011, %v4013
  %v4076 = vmax.f32 %v4012, %v4014
  %v4077 = vmax.f32 %v4013, %v4015
  %v4078 = vmax.f32 %v4014, %v4016
  %v4079 = vmax.f32 %v4015, %v4017
  %v4080 = vmax.f32 %v4016, %v4018
  %v4081 = vmax.f32 %v4017, %v4019
  %v4082 = vmax.f32 %v4018, %v4020
  %v4083 = vmax.f32 %v4019, %v4021
  %v4084 = vmax.f32 %v4020, %v4022
  %v4085 = vmax.f32 %v4021, %v4023
  %v4086 = vmax.f32 %v4022, %v4024
  %v4087 = vmax.f32 %v4023, %v4025
  %v4088 = vmax.f32 %v4024, %v4026
  %v4089 = vmax.f32 %v4025, %v4027
  %v4090 = vmax.f32 %v4026, %v4028
  %v4091 = vmax.f32 %v4027, %v4029
  %v4092 = vmax.f32 %v4028, %v4030
  %v4093 = vmax.f32 %v4029, %v4031
  %v4094 = vmax.f32 %v4030, %v4032
  %v4095 = vmax.f32 %v4031, %v4033
  %v4096 = vmax.f32 %v4032, %v4034
  %v4097 = vmax.f32 %v4033, %v4035
  %v4098 = vmax.f32 %v4034, %v4036
  %v4099 = vmax.f32 %v4035, %v4037
  %v4100 = vmax.f32 %v4036, %v4038
  %v4101 = vmax.f32 %v4037, %v4039
  %v4102 = vmax.f32 %v4038, %v4040
  %v4103 = vmax.f32 %v4039, %v4041
  %v4104 = vmax.f32 %v4040, %v4042
  %v4105 = vmax.f32 %v4041, %v4043
  %v4106 = vmax.f32 %v4042, %v4044
  %v4107 = vmax.f32 %v4043, %v4045
  %v4108 = vmax.f32 %v4044, %v4046
  %v4109 = vmax.f32 %v4045, %v4047
  %v4110 = vmax.f32 %v4046, %v4048
  %v4111 = vmax.f32 %v4047, %v4049
  %v4112 = vmax.f32 %v4048, %v4050
  %v4113 = vmax.f32 %v4049, %v4051
  %v4114 = vmax.f32 %v4050, %v4052
  %v4115 = vmax.f32 %v4051, %v4053
  %v4116 = vmax.f32 %v4052, %v4054
  %v4117 = vmax.f32 %v4053, %v4055
  %v4118 = vmax.f32 %v4054, %v4056
  %v4119 = vmax.f32 %v4055, %v4057
  %v4120 = vmax.f32 %v4056, %v4058
  %v4121 = vmax.f32 %v4057, %v4059
  %v4122 = vmax.f32 %v4058, %v4060
  %v4123 = vmax.f32 %v4059, %v4061
  %v4124 = vmax.f32 %v4060, %v4062
  %v4125 = vmax.f32 %v4061, %v4063
  %v4126 = vmax.f32 %v4062, %v4064
  %v4127 = vmax.f32 %v4063, %v4065
  %v4128 = vmax.f32 %v4064, %v4066
  %v4129 = vmax.f32 %v4065, %v4067
  %v4130 = vmax.f32 %v4066, %v4068
  %v4131 = vmax.f32 %v4067, %v4069
  %v4132 = vmax.f32 %v4068, %v4070
  %v4133 = vmax.f32 %v4069, %v4007
  %v4134 = vmax.f32 %v4070, %v4008
  %v4135 = vpack.c.bf16 %v4072, %v4071
  %v4136 = vpack.c.bf16 %v4074, %v4073
  %v4137 = vpack.c.bf16 %v4076, %v4075
  %v4138 = vpack.c.bf16 %v4078, %v4077
  %v4139 = vpack.c.bf16 %v4080, %v4079
  %v4140 = vpack.c.bf16 %v4082, %v4081
  %v4141 = vpack.c.bf16 %v4084, %v4083
  %v4142 = vpack.c.bf16 %v4086, %v4085
  %v4143 = vpack.c.bf16 %v4088, %v4087
  %v4144 = vpack.c.bf16 %v4090, %v4089
  %v4145 = vpack.c.bf16 %v4092, %v4091
  %v4146 = vpack.c.bf16 %v4094, %v4093
  %v4147 = vpack.c.bf16 %v4096, %v4095
  %v4148 = vpack.c.bf16 %v4098, %v4097
  %v4149 = vpack.c.bf16 %v4100, %v4099
  %v4150 = vpack.c.bf16 %v4102, %v4101
  %v4151 = vpack.c.bf16 %v4104, %v4103
  %v4152 = vpack.c.bf16 %v4106, %v4105
  %v4153 = vpack.c.bf16 %v4108, %v4107
  %v4154 = vpack.c.bf16 %v4110, %v4109
  %v4155 = vpack.c.bf16 %v4112, %v4111
  %v4156 = vpack.c.bf16 %v4114, %v4113
  %v4157 = vpack.c.bf16 %v4116, %v4115
  %v4158 = vpack.c.bf16 %v4118, %v4117
  %v4159 = vpack.c.bf16 %v4120, %v4119
  %v4160 = vpack.c.bf16 %v4122, %v4121
  %v4161 = vpack.c.bf16 %v4124, %v4123
  %v4162 = vpack.c.bf16 %v4126, %v4125
  %v4163 = vpack.c.bf16 %v4128, %v4127
  %v4164 = vpack.c.bf16 %v4130, %v4129
  %v4165 = vpack.c.bf16 %v4132, %v4131
  %v4166 = vpack.c.bf16 %v4134, %v4133
  %v4167 = vld [vmem:[%s10] sm:$0xff]
  %v4168 = vld [vmem:[%s10 + $0x8] sm:$0xff]
  %v4169 = vld [vmem:[%s10 + $0x10] sm:$0xff]
  %v4170 = vld [vmem:[%s10 + $0x18] sm:$0xff]
  %v4171 = vld [vmem:[%s10 + $0x20] sm:$0xff]
  %v4172 = vld [vmem:[%s10 + $0x28] sm:$0xff]
  %v4173 = vld [vmem:[%s10 + $0x30] sm:$0xff]
  %v4174 = vld [vmem:[%s10 + $0x38] sm:$0xff]
  %v4183 = vunpack.c.l.b16 %v4167
  %v4184 = vunpack.c.h.b16 %v4167
  %v4185 = vunpack.c.l.b16 %v4168
  %v4186 = vunpack.c.h.b16 %v4168
  %v4187 = vunpack.c.l.b16 %v4169
  %v4188 = vunpack.c.h.b16 %v4169
  %v4189 = vunpack.c.l.b16 %v4170
  %v4190 = vunpack.c.h.b16 %v4170
  %v4191 = vunpack.c.l.b16 %v4171
  %v4192 = vunpack.c.h.b16 %v4171
  %v4193 = vunpack.c.l.b16 %v4172
  %v4194 = vunpack.c.h.b16 %v4172
  %v4195 = vunpack.c.l.b16 %v4173
  %v4196 = vunpack.c.h.b16 %v4173
  %v4197 = vunpack.c.l.b16 %v4174
  %v4198 = vunpack.c.h.b16 %v4174
  %v4199 = vpack.c.b16 %v4185, %v4183
  %v4200 = vpack.c.b16 %v4186, %v4184
  %v4201 = vpack.c.b16 %v4189, %v4187
  %v4202 = vpack.c.b16 %v4190, %v4188
  %v4203 = vpack.c.b16 %v4193, %v4191
  %v4204 = vpack.c.b16 %v4194, %v4192
  %v4205 = vpack.c.b16 %v4197, %v4195
  %v4206 = vpack.c.b16 %v4198, %v4196
  %4215 = vmatprep.subr.bf16.mxu0 0
  %4216 = vmatpush1.bf16.msra.mxu0 %v4142
  %4217 = vmatprep.subr.bf16.mxu0 0
  %4218 = vmatpush1.bf16.msra.mxu0 %v4141
  %4219 = vmatprep.subr.bf16.mxu0 0
  %4220 = vmatpush1.bf16.msra.mxu0 %v4140
  %4221 = vmatprep.subr.bf16.mxu0 0
  %4222 = vmatpush1.bf16.msra.mxu0 %v4139
  %4223 = vmatprep.subr.bf16.mxu0 0
  %4224 = vmatpush1.bf16.msra.mxu0 %v4138
  %4225 = vmatprep.subr.bf16.mxu0 0
  %4226 = vmatpush1.bf16.msra.mxu0 %v4137
  %4227 = vmatprep.subr.bf16.mxu0 0
  %4228 = vmatpush1.bf16.msra.mxu0 %v4136
  %4229 = vmatprep.subr.bf16.mxu0 0
  %4230 = vmatpush1.bf16.msra.mxu0 %v4135
  %4231 = vmatprep.subr.bf16.mxu0 0
  %4232 = vmatpush2.bf16.msra.mxu0 %v4150
  %4233 = vmatprep.subr.bf16.mxu0 0
  %4234 = vmatpush2.bf16.msra.mxu0 %v4149
  %4235 = vmatprep.subr.bf16.mxu0 0
  %4236 = vmatpush2.bf16.msra.mxu0 %v4148
  %4237 = vmatprep.subr.bf16.mxu0 0
  %4238 = vmatpush2.bf16.msra.mxu0 %v4147
  %4239 = vmatprep.subr.bf16.mxu0 0
  %4240 = vmatpush2.bf16.msra.mxu0 %v4146
  %4241 = vmatprep.subr.bf16.mxu0 0
  %4242 = vmatpush2.bf16.msra.mxu0 %v4145
  %4243 = vmatprep.subr.bf16.mxu0 0
  %4244 = vmatpush2.bf16.msra.mxu0 %v4144
  %4245 = vmatprep.subr.bf16.mxu0 0
  %4246 = vmatpush2.bf16.msra.mxu0 %v4143
  %4247 = vmatprep.mubr.bf16.mxu0 %v4200
  %4248 = vmatmul.mubr.bf16.gmra.mxu0 %v4199
  %v4249 = vpop.f32.mrf.mxu0
  %v4250 = vadd.f32 0.0, %v4249
  %v4251 = vpop.f32.mrf.mxu0
  %v4252 = vpop.f32.mrf.mxu0
  %v4253 = vadd.f32 0.0, %v4252
  %v4254 = vpop.f32.mrf.mxu0
  %4255 = vmatprep.mubr.bf16.mxu0 %v4202
  %4256 = vmatmul.mubr.bf16.gmra.mxu0 %v4201
  %v4257 = vpop.f32.mrf.mxu0
  %v4258 = vadd.f32 0.0, %v4257
  %v4259 = vpop.f32.mrf.mxu0
  %v4260 = vpop.f32.mrf.mxu0
  %v4261 = vadd.f32 0.0, %v4260
  %v4262 = vpop.f32.mrf.mxu0
  %4263 = vmatprep.mubr.bf16.mxu0 %v4204
  %4264 = vmatmul.mubr.bf16.gmra.mxu0 %v4203
  %v4265 = vpop.f32.mrf.mxu0
  %v4266 = vadd.f32 0.0, %v4265
  %v4267 = vpop.f32.mrf.mxu0
  %v4268 = vpop.f32.mrf.mxu0
  %v4269 = vadd.f32 0.0, %v4268
  %v4270 = vpop.f32.mrf.mxu0
  %4271 = vmatprep.mubr.bf16.mxu0 %v4206
  %4272 = vmatmul.mubr.bf16.gmra.mxu0 %v4205
  %v4273 = vpop.f32.mrf.mxu0
  %v4274 = vadd.f32 0.0, %v4273
  %v4275 = vpop.f32.mrf.mxu0
  %v4276 = vpop.f32.mrf.mxu0
  %v4277 = vadd.f32 0.0, %v4276
  %v4278 = vpop.f32.mrf.mxu0
  %4279 = vdwg.mxu0
  %4280 = vmatprep.subr.bf16.mxu0 0
  %4281 = vmatpush1.bf16.msra.mxu0 %v4158
  %4282 = vmatprep.subr.bf16.mxu0 0
  %4283 = vmatpush1.bf16.msra.mxu0 %v4157
  %4284 = vmatprep.subr.bf16.mxu0 0
  %4285 = vmatpush1.bf16.msra.mxu0 %v4156
  %4286 = vmatprep.subr.bf16.mxu0 0
  %4287 = vmatpush1.bf16.msra.mxu0 %v4155
  %4288 = vmatprep.subr.bf16.mxu0 0
  %4289 = vmatpush1.bf16.msra.mxu0 %v4154
  %4290 = vmatprep.subr.bf16.mxu0 0
  %4291 = vmatpush1.bf16.msra.mxu0 %v4153
  %4292 = vmatprep.subr.bf16.mxu0 0
  %4293 = vmatpush1.bf16.msra.mxu0 %v4152
  %4294 = vmatprep.subr.bf16.mxu0 0
  %4295 = vmatpush1.bf16.msra.mxu0 %v4151
  %4296 = vmatprep.subr.bf16.mxu0 0
  %4297 = vmatpush2.bf16.msra.mxu0 %v4166
  %4298 = vmatprep.subr.bf16.mxu0 0
  %4299 = vmatpush2.bf16.msra.mxu0 %v4165
  %4300 = vmatprep.subr.bf16.mxu0 0
  %4301 = vmatpush2.bf16.msra.mxu0 %v4164
  %4302 = vmatprep.subr.bf16.mxu0 0
  %4303 = vmatpush2.bf16.msra.mxu0 %v4163
  %4304 = vmatprep.subr.bf16.mxu0 0
  %4305 = vmatpush2.bf16.msra.mxu0 %v4162
  %4306 = vmatprep.subr.bf16.mxu0 0
  %4307 = vmatpush2.bf16.msra.mxu0 %v4161
  %4308 = vmatprep.subr.bf16.mxu0 0
  %4309 = vmatpush2.bf16.msra.mxu0 %v4160
  %4310 = vmatprep.subr.bf16.mxu0 0
  %4311 = vmatpush2.bf16.msra.mxu0 %v4159
  %4312 = vmatprep.mubr.bf16.mxu0 %v4200
  %4313 = vmatmul.mubr.bf16.gmra.mxu0 %v4199
  %v4314 = vpop.f32.mrf.mxu0
  %v4315 = vadd.f32 0.0, %v4314
  %v4316 = vpop.f32.mrf.mxu0
  %v4317 = vpop.f32.mrf.mxu0
  %v4318 = vadd.f32 0.0, %v4317
  %v4319 = vpop.f32.mrf.mxu0
  %4320 = vmatprep.mubr.bf16.mxu0 %v4202
  %4321 = vmatmul.mubr.bf16.gmra.mxu0 %v4201
  %v4322 = vpop.f32.mrf.mxu0
  %v4323 = vadd.f32 0.0, %v4322
  %v4324 = vpop.f32.mrf.mxu0
  %v4325 = vpop.f32.mrf.mxu0
  %v4326 = vadd.f32 0.0, %v4325
  %v4327 = vpop.f32.mrf.mxu0
  %4328 = vmatprep.mubr.bf16.mxu0 %v4204
  %4329 = vmatmul.mubr.bf16.gmra.mxu0 %v4203
  %v4330 = vpop.f32.mrf.mxu0
  %v4331 = vadd.f32 0.0, %v4330
  %v4332 = vpop.f32.mrf.mxu0
  %v4333 = vpop.f32.mrf.mxu0
  %v4334 = vadd.f32 0.0, %v4333
  %v4335 = vpop.f32.mrf.mxu0
  %4336 = vmatprep.mubr.bf16.mxu0 %v4206
  %4337 = vmatmul.mubr.bf16.gmra.mxu0 %v4205
  %v4338 = vpop.f32.mrf.mxu0
  %v4339 = vadd.f32 0.0, %v4338
  %v4340 = vpop.f32.mrf.mxu0
  %v4341 = vpop.f32.mrf.mxu0
  %v4342 = vadd.f32 0.0, %v4341
  %v4343 = vpop.f32.mrf.mxu0
  %4344 = vdwg.mxu0
  %v4345 = vand.u32 %v223, 63
  %v4346 = vand.u32 %v224, 63
  %v4347 = vand.u32 %v225, 63
  %v4348 = vand.u32 %v226, 63
  %v4349 = vand.u32 %v227, 63
  %v4350 = vand.u32 %v228, 63
  %v4351 = vand.u32 %v229, 63
  %v4352 = vand.u32 %v230, 63
  %v4353 = vand.u32 %v231, 63
  %v4354 = vand.u32 %v232, 63
  %v4355 = vand.u32 %v233, 63
  %v4356 = vand.u32 %v234, 63
  %v4357 = vand.u32 %v235, 63
  %v4358 = vand.u32 %v236, 63
  %v4359 = vand.u32 %v237, 63
  %v4360 = vand.u32 %v238, 63
  %v4361 = vand.u32 %v4345, 7
  %v4362 = vand.u32 %v4346, 7
  %v4363 = vand.u32 %v4347, 7
  %v4364 = vand.u32 %v4348, 7
  %v4365 = vand.u32 %v4349, 7
  %v4366 = vand.u32 %v4350, 7
  %v4367 = vand.u32 %v4351, 7
  %v4368 = vand.u32 %v4352, 7
  %v4369 = vand.u32 %v4353, 7
  %v4370 = vand.u32 %v4354, 7
  %v4371 = vand.u32 %v4355, 7
  %v4372 = vand.u32 %v4356, 7
  %v4373 = vand.u32 %v4357, 7
  %v4374 = vand.u32 %v4358, 7
  %v4375 = vand.u32 %v4359, 7
  %v4376 = vand.u32 %v4360, 7
  %vm4377 = vcmp.ge.s32.totalorder %v4345, 8
  %vm4378 = vcmp.ge.s32.totalorder %v4346, 8
  %vm4379 = vcmp.ge.s32.totalorder %v4347, 8
  %vm4380 = vcmp.ge.s32.totalorder %v4348, 8
  %vm4381 = vcmp.ge.s32.totalorder %v4349, 8
  %vm4382 = vcmp.ge.s32.totalorder %v4350, 8
  %vm4383 = vcmp.ge.s32.totalorder %v4351, 8
  %vm4384 = vcmp.ge.s32.totalorder %v4352, 8
  %vm4385 = vcmp.ge.s32.totalorder %v4353, 8
  %vm4386 = vcmp.ge.s32.totalorder %v4354, 8
  %vm4387 = vcmp.ge.s32.totalorder %v4355, 8
  %vm4388 = vcmp.ge.s32.totalorder %v4356, 8
  %vm4389 = vcmp.ge.s32.totalorder %v4357, 8
  %vm4390 = vcmp.ge.s32.totalorder %v4358, 8
  %vm4391 = vcmp.ge.s32.totalorder %v4359, 8
  %vm4392 = vcmp.ge.s32.totalorder %v4360, 8
  %vm4393 = vcmp.lt.s32.totalorder %v4345, 56
  %vm4394 = vcmp.lt.s32.totalorder %v4346, 56
  %vm4395 = vcmp.lt.s32.totalorder %v4347, 56
  %vm4396 = vcmp.lt.s32.totalorder %v4348, 56
  %vm4397 = vcmp.lt.s32.totalorder %v4349, 56
  %vm4398 = vcmp.lt.s32.totalorder %v4350, 56
  %vm4399 = vcmp.lt.s32.totalorder %v4351, 56
  %vm4400 = vcmp.lt.s32.totalorder %v4352, 56
  %vm4401 = vcmp.lt.s32.totalorder %v4353, 56
  %vm4402 = vcmp.lt.s32.totalorder %v4354, 56
  %vm4403 = vcmp.lt.s32.totalorder %v4355, 56
  %vm4404 = vcmp.lt.s32.totalorder %v4356, 56
  %vm4405 = vcmp.lt.s32.totalorder %v4357, 56
  %vm4406 = vcmp.lt.s32.totalorder %v4358, 56
  %vm4407 = vcmp.lt.s32.totalorder %v4359, 56
  %vm4408 = vcmp.lt.s32.totalorder %v4360, 56
  %vm4409 = vcmp.ge.s32.totalorder %v4361, 1
  %vm4410 = vcmp.ge.s32.totalorder %v4362, 1
  %vm4411 = vcmp.ge.s32.totalorder %v4363, 1
  %vm4412 = vcmp.ge.s32.totalorder %v4364, 1
  %vm4413 = vcmp.ge.s32.totalorder %v4365, 1
  %vm4414 = vcmp.ge.s32.totalorder %v4366, 1
  %vm4415 = vcmp.ge.s32.totalorder %v4367, 1
  %vm4416 = vcmp.ge.s32.totalorder %v4368, 1
  %vm4417 = vcmp.ge.s32.totalorder %v4369, 1
  %vm4418 = vcmp.ge.s32.totalorder %v4370, 1
  %vm4419 = vcmp.ge.s32.totalorder %v4371, 1
  %vm4420 = vcmp.ge.s32.totalorder %v4372, 1
  %vm4421 = vcmp.ge.s32.totalorder %v4373, 1
  %vm4422 = vcmp.ge.s32.totalorder %v4374, 1
  %vm4423 = vcmp.ge.s32.totalorder %v4375, 1
  %vm4424 = vcmp.ge.s32.totalorder %v4376, 1
  %vm4425 = vcmp.lt.s32.totalorder %v4361, 7
  %vm4426 = vcmp.lt.s32.totalorder %v4362, 7
  %vm4427 = vcmp.lt.s32.totalorder %v4363, 7
  %vm4428 = vcmp.lt.s32.totalorder %v4364, 7
  %vm4429 = vcmp.lt.s32.totalorder %v4365, 7
  %vm4430 = vcmp.lt.s32.totalorder %v4366, 7
  %vm4431 = vcmp.lt.s32.totalorder %v4367, 7
  %vm4432 = vcmp.lt.s32.totalorder %v4368, 7
  %vm4433 = vcmp.lt.s32.totalorder %v4369, 7
  %vm4434 = vcmp.lt.s32.totalorder %v4370, 7
  %vm4435 = vcmp.lt.s32.totalorder %v4371, 7
  %vm4436 = vcmp.lt.s32.totalorder %v4372, 7
  %vm4437 = vcmp.lt.s32.totalorder %v4373, 7
  %vm4438 = vcmp.lt.s32.totalorder %v4374, 7
  %vm4439 = vcmp.lt.s32.totalorder %v4375, 7
  %vm4440 = vcmp.lt.s32.totalorder %v4376, 7
  %v4441 = vrot.slane %v4250, 7
  %v4442 = vrot.slane %v4253, 7
  %v4443 = vrot.slane %v4258, 7
  %v4444 = vrot.slane %v4261, 7
  %v4445 = vrot.slane %v4266, 7
  %v4446 = vrot.slane %v4269, 7
  %v4447 = vrot.slane %v4274, 7
  %v4448 = vrot.slane %v4277, 7
  %v4449 = vrot.slane %v4315, 7
  %v4450 = vrot.slane %v4318, 7
  %v4451 = vrot.slane %v4323, 7
  %v4452 = vrot.slane %v4326, 7
  %v4453 = vrot.slane %v4331, 7
  %v4454 = vrot.slane %v4334, 7
  %v4455 = vrot.slane %v4339, 7
  %v4456 = vrot.slane %v4342, 7
  %v4457 = vsel %vm735, %v4455, %v4456
  %v4458 = vsel %vm735, %v4454, %v4455
  %v4459 = vsel %vm735, %v4453, %v4454
  %v4460 = vsel %vm735, %v4452, %v4453
  %v4461 = vsel %vm735, %v4451, %v4452
  %v4462 = vsel %vm735, %v4450, %v4451
  %v4463 = vsel %vm735, %v4449, %v4450
  %v4464 = vsel %vm735, %v4448, %v4449
  %v4465 = vsel %vm735, %v4447, %v4448
  %v4466 = vsel %vm735, %v4446, %v4447
  %v4467 = vsel %vm735, %v4445, %v4446
  %v4468 = vsel %vm735, %v4444, %v4445
  %v4469 = vsel %vm735, %v4443, %v4444
  %v4470 = vsel %vm735, %v4442, %v4443
  %v4471 = vsel %vm735, %v4441, %v4442
  %v4472 = vsel %vm735, %v4456, %v4441
  %vm4473 = vmand %vm4377, %vm4409
  %vm4474 = vmand %vm4378, %vm4410
  %vm4475 = vmand %vm4379, %vm4411
  %vm4476 = vmand %vm4380, %vm4412
  %vm4477 = vmand %vm4381, %vm4413
  %vm4478 = vmand %vm4382, %vm4414
  %vm4479 = vmand %vm4383, %vm4415
  %vm4480 = vmand %vm4384, %vm4416
  %vm4481 = vmand %vm4385, %vm4417
  %vm4482 = vmand %vm4386, %vm4418
  %vm4483 = vmand %vm4387, %vm4419
  %vm4484 = vmand %vm4388, %vm4420
  %vm4485 = vmand %vm4389, %vm4421
  %vm4486 = vmand %vm4390, %vm4422
  %vm4487 = vmand %vm4391, %vm4423
  %vm4488 = vmand %vm4392, %vm4424
  %v4489 = vsel %vm4473, %v4457, 0.0
  %v4490 = vsel %vm4474, %v4472, 0.0
  %v4491 = vsel %vm4475, %v4471, 0.0
  %v4492 = vsel %vm4476, %v4470, 0.0
  %v4493 = vsel %vm4477, %v4469, 0.0
  %v4494 = vsel %vm4478, %v4468, 0.0
  %v4495 = vsel %vm4479, %v4467, 0.0
  %v4496 = vsel %vm4480, %v4466, 0.0
  %v4497 = vsel %vm4481, %v4465, 0.0
  %v4498 = vsel %vm4482, %v4464, 0.0
  %v4499 = vsel %vm4483, %v4463, 0.0
  %v4500 = vsel %vm4484, %v4462, 0.0
  %v4501 = vsel %vm4485, %v4461, 0.0
  %v4502 = vsel %vm4486, %v4460, 0.0
  %v4503 = vsel %vm4487, %v4459, 0.0
  %v4504 = vsel %vm4488, %v4458, 0.0
  %v4505 = vpack.c.bf16 %v4490, %v4489
  %v4506 = vpack.c.bf16 %v4492, %v4491
  %v4507 = vpack.c.bf16 %v4494, %v4493
  %v4508 = vpack.c.bf16 %v4496, %v4495
  %v4509 = vpack.c.bf16 %v4498, %v4497
  %v4510 = vpack.c.bf16 %v4500, %v4499
  %v4511 = vpack.c.bf16 %v4502, %v4501
  %v4512 = vpack.c.bf16 %v4504, %v4503
  %v4513 = vsel %vm4377, %v4342, 0.0
  %v4514 = vsel %vm4378, %v4250, 0.0
  %v4515 = vsel %vm4379, %v4253, 0.0
  %v4516 = vsel %vm4380, %v4258, 0.0
  %v4517 = vsel %vm4381, %v4261, 0.0
  %v4518 = vsel %vm4382, %v4266, 0.0
  %v4519 = vsel %vm4383, %v4269, 0.0
  %v4520 = vsel %vm4384, %v4274, 0.0
  %v4521 = vsel %vm4385, %v4277, 0.0
  %v4522 = vsel %vm4386, %v4315, 0.0
  %v4523 = vsel %vm4387, %v4318, 0.0
  %v4524 = vsel %vm4388, %v4323, 0.0
  %v4525 = vsel %vm4389, %v4326, 0.0
  %v4526 = vsel %vm4390, %v4331, 0.0
  %v4527 = vsel %vm4391, %v4334, 0.0
  %v4528 = vsel %vm4392, %v4339, 0.0
  %v4529 = vpack.c.bf16 %v4514, %v4513
  %v4530 = vpack.c.bf16 %v4516, %v4515
  %v4531 = vpack.c.bf16 %v4518, %v4517
  %v4532 = vpack.c.bf16 %v4520, %v4519
  %v4533 = vpack.c.bf16 %v4522, %v4521
  %v4534 = vpack.c.bf16 %v4524, %v4523
  %v4535 = vpack.c.bf16 %v4526, %v4525
  %v4536 = vpack.c.bf16 %v4528, %v4527
  %v4537 = vrot.slane %v4250, 1
  %v4538 = vrot.slane %v4253, 1
  %v4539 = vrot.slane %v4258, 1
  %v4540 = vrot.slane %v4261, 1
  %v4541 = vrot.slane %v4266, 1
  %v4542 = vrot.slane %v4269, 1
  %v4543 = vrot.slane %v4274, 1
  %v4544 = vrot.slane %v4277, 1
  %v4545 = vrot.slane %v4315, 1
  %v4546 = vrot.slane %v4318, 1
  %v4547 = vrot.slane %v4323, 1
  %v4548 = vrot.slane %v4326, 1
  %v4549 = vrot.slane %v4331, 1
  %v4550 = vrot.slane %v4334, 1
  %v4551 = vrot.slane %v4339, 1
  %v4552 = vrot.slane %v4342, 1
  %v4553 = vsel %vm1120, %v4551, %v4552
  %v4554 = vsel %vm1120, %v4550, %v4551
  %v4555 = vsel %vm1120, %v4549, %v4550
  %v4556 = vsel %vm1120, %v4548, %v4549
  %v4557 = vsel %vm1120, %v4547, %v4548
  %v4558 = vsel %vm1120, %v4546, %v4547
  %v4559 = vsel %vm1120, %v4545, %v4546
  %v4560 = vsel %vm1120, %v4544, %v4545
  %v4561 = vsel %vm1120, %v4543, %v4544
  %v4562 = vsel %vm1120, %v4542, %v4543
  %v4563 = vsel %vm1120, %v4541, %v4542
  %v4564 = vsel %vm1120, %v4540, %v4541
  %v4565 = vsel %vm1120, %v4539, %v4540
  %v4566 = vsel %vm1120, %v4538, %v4539
  %v4567 = vsel %vm1120, %v4537, %v4538
  %v4568 = vsel %vm1120, %v4552, %v4537
  %vm4569 = vmand %vm4377, %vm4425
  %vm4570 = vmand %vm4378, %vm4426
  %vm4571 = vmand %vm4379, %vm4427
  %vm4572 = vmand %vm4380, %vm4428
  %vm4573 = vmand %vm4381, %vm4429
  %vm4574 = vmand %vm4382, %vm4430
  %vm4575 = vmand %vm4383, %vm4431
  %vm4576 = vmand %vm4384, %vm4432
  %vm4577 = vmand %vm4385, %vm4433
  %vm4578 = vmand %vm4386, %vm4434
  %vm4579 = vmand %vm4387, %vm4435
  %vm4580 = vmand %vm4388, %vm4436
  %vm4581 = vmand %vm4389, %vm4437
  %vm4582 = vmand %vm4390, %vm4438
  %vm4583 = vmand %vm4391, %vm4439
  %vm4584 = vmand %vm4392, %vm4440
  %v4585 = vsel %vm4569, %v4568, 0.0
  %v4586 = vsel %vm4570, %v4567, 0.0
  %v4587 = vsel %vm4571, %v4566, 0.0
  %v4588 = vsel %vm4572, %v4565, 0.0
  %v4589 = vsel %vm4573, %v4564, 0.0
  %v4590 = vsel %vm4574, %v4563, 0.0
  %v4591 = vsel %vm4575, %v4562, 0.0
  %v4592 = vsel %vm4576, %v4561, 0.0
  %v4593 = vsel %vm4577, %v4560, 0.0
  %v4594 = vsel %vm4578, %v4559, 0.0
  %v4595 = vsel %vm4579, %v4558, 0.0
  %v4596 = vsel %vm4580, %v4557, 0.0
  %v4597 = vsel %vm4581, %v4556, 0.0
  %v4598 = vsel %vm4582, %v4555, 0.0
  %v4599 = vsel %vm4583, %v4554, 0.0
  %v4600 = vsel %vm4584, %v4553, 0.0
  %v4601 = vpack.c.bf16 %v4586, %v4585
  %v4602 = vpack.c.bf16 %v4588, %v4587
  %v4603 = vpack.c.bf16 %v4590, %v4589
  %v4604 = vpack.c.bf16 %v4592, %v4591
  %v4605 = vpack.c.bf16 %v4594, %v4593
  %v4606 = vpack.c.bf16 %v4596, %v4595
  %v4607 = vpack.c.bf16 %v4598, %v4597
  %v4608 = vpack.c.bf16 %v4600, %v4599
  %v4609 = vsel %vm4409, %v4472, 0.0
  %v4610 = vsel %vm4410, %v4471, 0.0
  %v4611 = vsel %vm4411, %v4470, 0.0
  %v4612 = vsel %vm4412, %v4469, 0.0
  %v4613 = vsel %vm4413, %v4468, 0.0
  %v4614 = vsel %vm4414, %v4467, 0.0
  %v4615 = vsel %vm4415, %v4466, 0.0
  %v4616 = vsel %vm4416, %v4465, 0.0
  %v4617 = vsel %vm4417, %v4464, 0.0
  %v4618 = vsel %vm4418, %v4463, 0.0
  %v4619 = vsel %vm4419, %v4462, 0.0
  %v4620 = vsel %vm4420, %v4461, 0.0
  %v4621 = vsel %vm4421, %v4460, 0.0
  %v4622 = vsel %vm4422, %v4459, 0.0
  %v4623 = vsel %vm4423, %v4458, 0.0
  %v4624 = vsel %vm4424, %v4457, 0.0
  %v4625 = vpack.c.bf16 %v4610, %v4609
  %v4626 = vpack.c.bf16 %v4612, %v4611
  %v4627 = vpack.c.bf16 %v4614, %v4613
  %v4628 = vpack.c.bf16 %v4616, %v4615
  %v4629 = vpack.c.bf16 %v4618, %v4617
  %v4630 = vpack.c.bf16 %v4620, %v4619
  %v4631 = vpack.c.bf16 %v4622, %v4621
  %v4632 = vpack.c.bf16 %v4624, %v4623
  %v4633 = vpack.c.bf16 %v4253, %v4250
  %v4634 = vpack.c.bf16 %v4261, %v4258
  %v4635 = vpack.c.bf16 %v4269, %v4266
  %v4636 = vpack.c.bf16 %v4277, %v4274
  %v4637 = vpack.c.bf16 %v4318, %v4315
  %v4638 = vpack.c.bf16 %v4326, %v4323
  %v4639 = vpack.c.bf16 %v4334, %v4331
  %v4640 = vpack.c.bf16 %v4342, %v4339
  %v4641 = vsel %vm4425, %v4567, 0.0
  %v4642 = vsel %vm4426, %v4566, 0.0
  %v4643 = vsel %vm4427, %v4565, 0.0
  %v4644 = vsel %vm4428, %v4564, 0.0
  %v4645 = vsel %vm4429, %v4563, 0.0
  %v4646 = vsel %vm4430, %v4562, 0.0
  %v4647 = vsel %vm4431, %v4561, 0.0
  %v4648 = vsel %vm4432, %v4560, 0.0
  %v4649 = vsel %vm4433, %v4559, 0.0
  %v4650 = vsel %vm4434, %v4558, 0.0
  %v4651 = vsel %vm4435, %v4557, 0.0
  %v4652 = vsel %vm4436, %v4556, 0.0
  %v4653 = vsel %vm4437, %v4555, 0.0
  %v4654 = vsel %vm4438, %v4554, 0.0
  %v4655 = vsel %vm4439, %v4553, 0.0
  %v4656 = vsel %vm4440, %v4568, 0.0
  %v4657 = vpack.c.bf16 %v4642, %v4641
  %v4658 = vpack.c.bf16 %v4644, %v4643
  %v4659 = vpack.c.bf16 %v4646, %v4645
  %v4660 = vpack.c.bf16 %v4648, %v4647
  %v4661 = vpack.c.bf16 %v4650, %v4649
  %v4662 = vpack.c.bf16 %v4652, %v4651
  %v4663 = vpack.c.bf16 %v4654, %v4653
  %v4664 = vpack.c.bf16 %v4656, %v4655
  %vm4665 = vmand %vm4393, %vm4409
  %vm4666 = vmand %vm4394, %vm4410
  %vm4667 = vmand %vm4395, %vm4411
  %vm4668 = vmand %vm4396, %vm4412
  %vm4669 = vmand %vm4397, %vm4413
  %vm4670 = vmand %vm4398, %vm4414
  %vm4671 = vmand %vm4399, %vm4415
  %vm4672 = vmand %vm4400, %vm4416
  %vm4673 = vmand %vm4401, %vm4417
  %vm4674 = vmand %vm4402, %vm4418
  %vm4675 = vmand %vm4403, %vm4419
  %vm4676 = vmand %vm4404, %vm4420
  %vm4677 = vmand %vm4405, %vm4421
  %vm4678 = vmand %vm4406, %vm4422
  %vm4679 = vmand %vm4407, %vm4423
  %vm4680 = vmand %vm4408, %vm4424
  %v4681 = vsel %vm4665, %v4471, 0.0
  %v4682 = vsel %vm4666, %v4470, 0.0
  %v4683 = vsel %vm4667, %v4469, 0.0
  %v4684 = vsel %vm4668, %v4468, 0.0
  %v4685 = vsel %vm4669, %v4467, 0.0
  %v4686 = vsel %vm4670, %v4466, 0.0
  %v4687 = vsel %vm4671, %v4465, 0.0
  %v4688 = vsel %vm4672, %v4464, 0.0
  %v4689 = vsel %vm4673, %v4463, 0.0
  %v4690 = vsel %vm4674, %v4462, 0.0
  %v4691 = vsel %vm4675, %v4461, 0.0
  %v4692 = vsel %vm4676, %v4460, 0.0
  %v4693 = vsel %vm4677, %v4459, 0.0
  %v4694 = vsel %vm4678, %v4458, 0.0
  %v4695 = vsel %vm4679, %v4457, 0.0
  %v4696 = vsel %vm4680, %v4472, 0.0
  %v4697 = vpack.c.bf16 %v4682, %v4681
  %v4698 = vpack.c.bf16 %v4684, %v4683
  %v4699 = vpack.c.bf16 %v4686, %v4685
  %v4700 = vpack.c.bf16 %v4688, %v4687
  %v4701 = vpack.c.bf16 %v4690, %v4689
  %v4702 = vpack.c.bf16 %v4692, %v4691
  %v4703 = vpack.c.bf16 %v4694, %v4693
  %v4704 = vpack.c.bf16 %v4696, %v4695
  %v4705 = vsel %vm4393, %v4253, 0.0
  %v4706 = vsel %vm4394, %v4258, 0.0
  %v4707 = vsel %vm4395, %v4261, 0.0
  %v4708 = vsel %vm4396, %v4266, 0.0
  %v4709 = vsel %vm4397, %v4269, 0.0
  %v4710 = vsel %vm4398, %v4274, 0.0
  %v4711 = vsel %vm4399, %v4277, 0.0
  %v4712 = vsel %vm4400, %v4315, 0.0
  %v4713 = vsel %vm4401, %v4318, 0.0
  %v4714 = vsel %vm4402, %v4323, 0.0
  %v4715 = vsel %vm4403, %v4326, 0.0
  %v4716 = vsel %vm4404, %v4331, 0.0
  %v4717 = vsel %vm4405, %v4334, 0.0
  %v4718 = vsel %vm4406, %v4339, 0.0
  %v4719 = vsel %vm4407, %v4342, 0.0
  %v4720 = vsel %vm4408, %v4250, 0.0
  %v4721 = vpack.c.bf16 %v4706, %v4705
  %v4722 = vpack.c.bf16 %v4708, %v4707
  %v4723 = vpack.c.bf16 %v4710, %v4709
  %v4724 = vpack.c.bf16 %v4712, %v4711
  %v4725 = vpack.c.bf16 %v4714, %v4713
  %v4726 = vpack.c.bf16 %v4716, %v4715
  %v4727 = vpack.c.bf16 %v4718, %v4717
  %v4728 = vpack.c.bf16 %v4720, %v4719
  %vm4729 = vmand %vm4393, %vm4425
  %vm4730 = vmand %vm4394, %vm4426
  %vm4731 = vmand %vm4395, %vm4427
  %vm4732 = vmand %vm4396, %vm4428
  %vm4733 = vmand %vm4397, %vm4429
  %vm4734 = vmand %vm4398, %vm4430
  %vm4735 = vmand %vm4399, %vm4431
  %vm4736 = vmand %vm4400, %vm4432
  %vm4737 = vmand %vm4401, %vm4433
  %vm4738 = vmand %vm4402, %vm4434
  %vm4739 = vmand %vm4403, %vm4435
  %vm4740 = vmand %vm4404, %vm4436
  %vm4741 = vmand %vm4405, %vm4437
  %vm4742 = vmand %vm4406, %vm4438
  %vm4743 = vmand %vm4407, %vm4439
  %vm4744 = vmand %vm4408, %vm4440
  %v4745 = vsel %vm4729, %v4566, 0.0
  %v4746 = vsel %vm4730, %v4565, 0.0
  %v4747 = vsel %vm4731, %v4564, 0.0
  %v4748 = vsel %vm4732, %v4563, 0.0
  %v4749 = vsel %vm4733, %v4562, 0.0
  %v4750 = vsel %vm4734, %v4561, 0.0
  %v4751 = vsel %vm4735, %v4560, 0.0
  %v4752 = vsel %vm4736, %v4559, 0.0
  %v4753 = vsel %vm4737, %v4558, 0.0
  %v4754 = vsel %vm4738, %v4557, 0.0
  %v4755 = vsel %vm4739, %v4556, 0.0
  %v4756 = vsel %vm4740, %v4555, 0.0
  %v4757 = vsel %vm4741, %v4554, 0.0
  %v4758 = vsel %vm4742, %v4553, 0.0
  %v4759 = vsel %vm4743, %v4568, 0.0
  %v4760 = vsel %vm4744, %v4567, 0.0
  %v4761 = vpack.c.bf16 %v4746, %v4745
  %v4762 = vpack.c.bf16 %v4748, %v4747
  %v4763 = vpack.c.bf16 %v4750, %v4749
  %v4764 = vpack.c.bf16 %v4752, %v4751
  %v4765 = vpack.c.bf16 %v4754, %v4753
  %v4766 = vpack.c.bf16 %v4756, %v4755
  %v4767 = vpack.c.bf16 %v4758, %v4757
  %v4768 = vpack.c.bf16 %v4760, %v4759
  %4777 = vrot.lane.b32.xlu0 %v4529, 32
  %v4778 = vpop.permute.xlu0 %4777
  %4779 = vrot.lane.b32.xlu0 %v4530, 32
  %v4780 = vpop.permute.xlu0 %4779
  %4781 = vrot.lane.b32.xlu0 %v4531, 32
  %v4782 = vpop.permute.xlu0 %4781
  %4783 = vrot.lane.b32.xlu0 %v4532, 32
  %v4784 = vpop.permute.xlu0 %4783
  %4785 = vrot.lane.b32.xlu0 %v4533, 32
  %v4786 = vpop.permute.xlu0 %4785
  %4787 = vrot.lane.b32.xlu0 %v4534, 32
  %v4788 = vpop.permute.xlu0 %4787
  %4789 = vrot.lane.b32.xlu0 %v4535, 32
  %v4790 = vpop.permute.xlu0 %4789
  %4791 = vrot.lane.b32.xlu0 %v4536, 32
  %v4792 = vpop.permute.xlu0 %4791
  %4801 = vrot.lane.b32.xlu0 %v4601, 64
  %v4802 = vpop.permute.xlu0 %4801
  %4803 = vrot.lane.b32.xlu0 %v4602, 64
  %v4804 = vpop.permute.xlu0 %4803
  %4805 = vrot.lane.b32.xlu0 %v4603, 64
  %v4806 = vpop.permute.xlu0 %4805
  %4807 = vrot.lane.b32.xlu0 %v4604, 64
  %v4808 = vpop.permute.xlu0 %4807
  %4809 = vrot.lane.b32.xlu0 %v4605, 64
  %v4810 = vpop.permute.xlu0 %4809
  %4811 = vrot.lane.b32.xlu0 %v4606, 64
  %v4812 = vpop.permute.xlu0 %4811
  %4813 = vrot.lane.b32.xlu0 %v4607, 64
  %v4814 = vpop.permute.xlu0 %4813
  %4815 = vrot.lane.b32.xlu0 %v4608, 64
  %v4816 = vpop.permute.xlu0 %4815
  %4825 = vrot.lane.b32.xlu0 %v4625, 96
  %v4826 = vpop.permute.xlu0 %4825
  %4827 = vrot.lane.b32.xlu0 %v4626, 96
  %v4828 = vpop.permute.xlu0 %4827
  %4829 = vrot.lane.b32.xlu0 %v4627, 96
  %v4830 = vpop.permute.xlu0 %4829
  %4831 = vrot.lane.b32.xlu0 %v4628, 96
  %v4832 = vpop.permute.xlu0 %4831
  %4833 = vrot.lane.b32.xlu0 %v4629, 96
  %v4834 = vpop.permute.xlu0 %4833
  %4835 = vrot.lane.b32.xlu0 %v4630, 96
  %v4836 = vpop.permute.xlu0 %4835
  %4837 = vrot.lane.b32.xlu0 %v4631, 96
  %v4838 = vpop.permute.xlu0 %4837
  %4839 = vrot.lane.b32.xlu0 %v4632, 96
  %v4840 = vpop.permute.xlu0 %4839
  %4849 = vrot.lane.b32.xlu0 %v4657, 32
  %v4850 = vpop.permute.xlu0 %4849
  %4851 = vrot.lane.b32.xlu0 %v4658, 32
  %v4852 = vpop.permute.xlu0 %4851
  %4853 = vrot.lane.b32.xlu0 %v4659, 32
  %v4854 = vpop.permute.xlu0 %4853
  %4855 = vrot.lane.b32.xlu0 %v4660, 32
  %v4856 = vpop.permute.xlu0 %4855
  %4857 = vrot.lane.b32.xlu0 %v4661, 32
  %v4858 = vpop.permute.xlu0 %4857
  %4859 = vrot.lane.b32.xlu0 %v4662, 32
  %v4860 = vpop.permute.xlu0 %4859
  %4861 = vrot.lane.b32.xlu0 %v4663, 32
  %v4862 = vpop.permute.xlu0 %4861
  %4863 = vrot.lane.b32.xlu0 %v4664, 32
  %v4864 = vpop.permute.xlu0 %4863
  %4873 = vrot.lane.b32.xlu0 %v4697, 64
  %v4874 = vpop.permute.xlu0 %4873
  %4875 = vrot.lane.b32.xlu0 %v4698, 64
  %v4876 = vpop.permute.xlu0 %4875
  %4877 = vrot.lane.b32.xlu0 %v4699, 64
  %v4878 = vpop.permute.xlu0 %4877
  %4879 = vrot.lane.b32.xlu0 %v4700, 64
  %v4880 = vpop.permute.xlu0 %4879
  %4881 = vrot.lane.b32.xlu0 %v4701, 64
  %v4882 = vpop.permute.xlu0 %4881
  %4883 = vrot.lane.b32.xlu0 %v4702, 64
  %v4884 = vpop.permute.xlu0 %4883
  %4885 = vrot.lane.b32.xlu0 %v4703, 64
  %v4886 = vpop.permute.xlu0 %4885
  %4887 = vrot.lane.b32.xlu0 %v4704, 64
  %v4888 = vpop.permute.xlu0 %4887
  %4897 = vrot.lane.b32.xlu0 %v4721, 96
  %v4898 = vpop.permute.xlu0 %4897
  %4899 = vrot.lane.b32.xlu0 %v4722, 96
  %v4900 = vpop.permute.xlu0 %4899
  %4901 = vrot.lane.b32.xlu0 %v4723, 96
  %v4902 = vpop.permute.xlu0 %4901
  %4903 = vrot.lane.b32.xlu0 %v4724, 96
  %v4904 = vpop.permute.xlu0 %4903
  %4905 = vrot.lane.b32.xlu0 %v4725, 96
  %v4906 = vpop.permute.xlu0 %4905
  %4907 = vrot.lane.b32.xlu0 %v4726, 96
  %v4908 = vpop.permute.xlu0 %4907
  %4909 = vrot.lane.b32.xlu0 %v4727, 96
  %v4910 = vpop.permute.xlu0 %4909
  %4911 = vrot.lane.b32.xlu0 %v4728, 96
  %v4912 = vpop.permute.xlu0 %4911
  %vm4913 = vcmask 261120
  %v4916 = vsel %vm4913, %v4505, %v4778
  %v4919 = vsel %vm4913, %v4506, %v4780
  %v4922 = vsel %vm4913, %v4507, %v4782
  %v4925 = vsel %vm4913, %v4508, %v4784
  %v4928 = vsel %vm4913, %v4509, %v4786
  %v4931 = vsel %vm4913, %v4510, %v4788
  %v4934 = vsel %vm4913, %v4511, %v4790
  %v4937 = vsel %vm4913, %v4512, %v4792
  %vm4938 = vcmask 523264
  %v4940 = vsel %vm4938, %v4916, %v4802
  %v4942 = vsel %vm4938, %v4919, %v4804
  %v4944 = vsel %vm4938, %v4922, %v4806
  %v4946 = vsel %vm4938, %v4925, %v4808
  %v4948 = vsel %vm4938, %v4928, %v4810
  %v4950 = vsel %vm4938, %v4931, %v4812
  %v4952 = vsel %vm4938, %v4934, %v4814
  %v4954 = vsel %vm4938, %v4937, %v4816
  %vm4955 = vcmask 785408
  %v4957 = vsel %vm4955, %v4940, %v4826
  %v4960 = vsel %vm4955, %v4942, %v4828
  %v4963 = vsel %vm4955, %v4944, %v4830
  %v4966 = vsel %vm4955, %v4946, %v4832
  %v4969 = vsel %vm4955, %v4948, %v4834
  %v4972 = vsel %vm4955, %v4950, %v4836
  %v4975 = vsel %vm4955, %v4952, %v4838
  %v4978 = vsel %vm4955, %v4954, %v4840
  %v4982 = vsel %vm4913, %v4633, %v4850
  %v4985 = vsel %vm4913, %v4634, %v4852
  %v4988 = vsel %vm4913, %v4635, %v4854
  %v4991 = vsel %vm4913, %v4636, %v4856
  %v4994 = vsel %vm4913, %v4637, %v4858
  %v4997 = vsel %vm4913, %v4638, %v4860
  %v5000 = vsel %vm4913, %v4639, %v4862
  %v5003 = vsel %vm4913, %v4640, %v4864
  %v5005 = vsel %vm4938, %v4982, %v4874
  %v5007 = vsel %vm4938, %v4985, %v4876
  %v5009 = vsel %vm4938, %v4988, %v4878
  %v5011 = vsel %vm4938, %v4991, %v4880
  %v5013 = vsel %vm4938, %v4994, %v4882
  %v5015 = vsel %vm4938, %v4997, %v4884
  %v5017 = vsel %vm4938, %v5000, %v4886
  %v5019 = vsel %vm4938, %v5003, %v4888
  %v5021 = vsel %vm4955, %v5005, %v4898
  %v5024 = vsel %vm4955, %v5007, %v4900
  %v5027 = vsel %vm4955, %v5009, %v4902
  %v5030 = vsel %vm4955, %v5011, %v4904
  %v5033 = vsel %vm4955, %v5013, %v4906
  %v5036 = vsel %vm4955, %v5015, %v4908
  %v5039 = vsel %vm4955, %v5017, %v4910
  %v5042 = vsel %vm4955, %v5019, %v4912
  %v5044 = vld [vmem:[%s4] sm:$0xf]
  %v5045 = vld [vmem:[%s4 + $0x4] sm:$0xf]
  %v5046 = vld [vmem:[%s4 + $0x8] sm:$0xf]
  %v5047 = vld [vmem:[%s4 + $0xc] sm:$0xf]
  %v5048 = vld [vmem:[%s4 + $0x10] sm:$0xf]
  %v5049 = vld [vmem:[%s4 + $0x14] sm:$0xf]
  %v5050 = vld [vmem:[%s4 + $0x18] sm:$0xf]
  %v5051 = vld [vmem:[%s4 + $0x1c] sm:$0xf]
  %v5052 = vld [vmem:[%s4 + $0x20] sm:$0xf]
  %v5053 = vld [vmem:[%s4 + $0x24] sm:$0xf]
  %v5054 = vld [vmem:[%s4 + $0x28] sm:$0xf]
  %v5055 = vld [vmem:[%s4 + $0x2c] sm:$0xf]
  %v5056 = vld [vmem:[%s4 + $0x30] sm:$0xf]
  %v5057 = vld [vmem:[%s4 + $0x34] sm:$0xf]
  %v5058 = vld [vmem:[%s4 + $0x38] sm:$0xf]
  %v5059 = vld [vmem:[%s4 + $0x3c] sm:$0xf]
  %v5060 = vld [vmem:[%s4 + $0x40] sm:$0xf]
  %v5061 = vld [vmem:[%s4 + $0x44] sm:$0xf]
  %v5062 = vld [vmem:[%s4 + $0x48] sm:$0xf]
  %v5063 = vld [vmem:[%s4 + $0x4c] sm:$0xf]
  %v5064 = vld [vmem:[%s4 + $0x50] sm:$0xf]
  %v5065 = vld [vmem:[%s4 + $0x54] sm:$0xf]
  %v5066 = vld [vmem:[%s4 + $0x58] sm:$0xf]
  %v5067 = vld [vmem:[%s4 + $0x5c] sm:$0xf]
  %v5068 = vld [vmem:[%s4 + $0x60] sm:$0xf]
  %v5069 = vld [vmem:[%s4 + $0x64] sm:$0xf]
  %v5070 = vld [vmem:[%s4 + $0x68] sm:$0xf]
  %v5071 = vld [vmem:[%s4 + $0x6c] sm:$0xf]
  %v5072 = vld [vmem:[%s4 + $0x70] sm:$0xf]
  %v5073 = vld [vmem:[%s4 + $0x74] sm:$0xf]
  %v5074 = vld [vmem:[%s4 + $0x78] sm:$0xf]
  %v5075 = vld [vmem:[%s4 + $0x7c] sm:$0xf]
  %v5076 = vld [vmem:[%s4 + $0x80] sm:$0xf]
  %v5077 = vld [vmem:[%s4 + $0x84] sm:$0xf]
  %v5078 = vld [vmem:[%s4 + $0x88] sm:$0xf]
  %v5079 = vld [vmem:[%s4 + $0x8c] sm:$0xf]
  %v5116 = vunpack.c.l.b16 %v5044
  %v5117 = vunpack.c.l.b16 %v5045
  %v5118 = vunpack.c.l.b16 %v5046
  %v5119 = vunpack.c.l.b16 %v5047
  %v5120 = vunpack.c.l.b16 %v5048
  %v5121 = vunpack.c.l.b16 %v5049
  %v5122 = vunpack.c.l.b16 %v5050
  %v5123 = vunpack.c.l.b16 %v5051
  %v5124 = vunpack.c.l.b16 %v5052
  %v5125 = vunpack.c.l.b16 %v5053
  %v5126 = vunpack.c.l.b16 %v5054
  %v5127 = vunpack.c.l.b16 %v5055
  %v5128 = vunpack.c.l.b16 %v5056
  %v5129 = vunpack.c.l.b16 %v5057
  %v5130 = vunpack.c.l.b16 %v5058
  %v5131 = vunpack.c.l.b16 %v5059
  %v5132 = vunpack.c.l.b16 %v5060
  %v5133 = vunpack.c.l.b16 %v5061
  %v5134 = vunpack.c.l.b16 %v5062
  %v5135 = vunpack.c.l.b16 %v5063
  %v5136 = vunpack.c.l.b16 %v5064
  %v5137 = vunpack.c.l.b16 %v5065
  %v5138 = vunpack.c.l.b16 %v5066
  %v5139 = vunpack.c.l.b16 %v5067
  %v5140 = vunpack.c.l.b16 %v5068
  %v5141 = vunpack.c.l.b16 %v5069
  %v5142 = vunpack.c.l.b16 %v5070
  %v5143 = vunpack.c.l.b16 %v5071
  %v5144 = vunpack.c.l.b16 %v5072
  %v5145 = vunpack.c.l.b16 %v5073
  %v5146 = vunpack.c.l.b16 %v5074
  %v5147 = vunpack.c.l.b16 %v5075
  %v5148 = vunpack.c.l.b16 %v5076
  %v5149 = vunpack.c.l.b16 %v5077
  %v5150 = vunpack.c.l.b16 %v5078
  %v5151 = vunpack.c.l.b16 %v5079
  %v5152 = vpack.c.b16 %v5117, %v5116
  %v5153 = vpack.c.b16 %v5119, %v5118
  %v5154 = vpack.c.b16 %v5121, %v5120
  %v5155 = vpack.c.b16 %v5123, %v5122
  %v5156 = vpack.c.b16 %v5125, %v5124
  %v5157 = vpack.c.b16 %v5127, %v5126
  %v5158 = vpack.c.b16 %v5129, %v5128
  %v5159 = vpack.c.b16 %v5131, %v5130
  %v5160 = vpack.c.b16 %v5133, %v5132
  %v5161 = vpack.c.b16 %v5135, %v5134
  %v5162 = vpack.c.b16 %v5137, %v5136
  %v5163 = vpack.c.b16 %v5139, %v5138
  %v5164 = vpack.c.b16 %v5141, %v5140
  %v5165 = vpack.c.b16 %v5143, %v5142
  %v5166 = vpack.c.b16 %v5145, %v5144
  %v5167 = vpack.c.b16 %v5147, %v5146
  %v5168 = vpack.c.b16 %v5149, %v5148
  %v5169 = vpack.c.b16 %v5151, %v5150
  %v5189 = vsel %vm4913, %v4761, 0
  %v5192 = vsel %vm4913, %v4762, 0
  %v5195 = vsel %vm4913, %v4763, 0
  %v5198 = vsel %vm4913, %v4764, 0
  %v5201 = vsel %vm4913, %v4765, 0
  %v5204 = vsel %vm4913, %v4766, 0
  %v5207 = vsel %vm4913, %v4767, 0
  %v5210 = vsel %vm4913, %v4768, 0
  %5212 = vmatprep.subr.bf16.mxu0 0
  %5213 = vmatpush1.bf16.msra.mxu0 %v5159
  %5214 = vmatprep.subr.bf16.mxu0 0
  %5215 = vmatpush1.bf16.msra.mxu0 %v5158
  %5216 = vmatprep.subr.bf16.mxu0 0
  %5217 = vmatpush1.bf16.msra.mxu0 %v5157
  %5218 = vmatprep.subr.bf16.mxu0 0
  %5219 = vmatpush1.bf16.msra.mxu0 %v5156
  %5220 = vmatprep.subr.bf16.mxu0 0
  %5221 = vmatpush1.bf16.msra.mxu0 %v5155
  %5222 = vmatprep.subr.bf16.mxu0 0
  %5223 = vmatpush1.bf16.msra.mxu0 %v5154
  %5224 = vmatprep.subr.bf16.mxu0 0
  %5225 = vmatpush1.bf16.msra.mxu0 %v5153
  %5226 = vmatprep.subr.bf16.mxu0 0
  %5227 = vmatpush1.bf16.msra.mxu0 %v5152
  %5228 = vmatprep.subr.bf16.mxu0 0
  %5229 = vmatpush2.bf16.msra.mxu0 %v5167
  %5230 = vmatprep.subr.bf16.mxu0 0
  %5231 = vmatpush2.bf16.msra.mxu0 %v5166
  %5232 = vmatprep.subr.bf16.mxu0 0
  %5233 = vmatpush2.bf16.msra.mxu0 %v5165
  %5234 = vmatprep.subr.bf16.mxu0 0
  %5235 = vmatpush2.bf16.msra.mxu0 %v5164
  %5236 = vmatprep.subr.bf16.mxu0 0
  %5237 = vmatpush2.bf16.msra.mxu0 %v5163
  %5238 = vmatprep.subr.bf16.mxu0 0
  %5239 = vmatpush2.bf16.msra.mxu0 %v5162
  %5240 = vmatprep.subr.bf16.mxu0 0
  %5241 = vmatpush2.bf16.msra.mxu0 %v5161
  %5242 = vmatprep.subr.bf16.mxu0 0
  %5243 = vmatpush2.bf16.msra.mxu0 %v5160
  %5244 = vmatprep.mubr.bf16.mxu0 %v5021
  %5245 = vmatmul.mubr.bf16.gmra.mxu0 %v4957
  %v5246 = vpop.f32.mrf.mxu0
  %v5247 = vadd.f32 0.0, %v5246
  %v5248 = vpop.f32.mrf.mxu0
  %v5249 = vpop.f32.mrf.mxu0
  %v5250 = vadd.f32 0.0, %v5249
  %v5251 = vpop.f32.mrf.mxu0
  %5252 = vmatprep.mubr.bf16.mxu0 %v5024
  %5253 = vmatmul.mubr.bf16.gmra.mxu0 %v4960
  %v5254 = vpop.f32.mrf.mxu0
  %v5255 = vadd.f32 0.0, %v5254
  %v5256 = vpop.f32.mrf.mxu0
  %v5257 = vpop.f32.mrf.mxu0
  %v5258 = vadd.f32 0.0, %v5257
  %v5259 = vpop.f32.mrf.mxu0
  %5260 = vmatprep.mubr.bf16.mxu0 %v5027
  %5261 = vmatmul.mubr.bf16.gmra.mxu0 %v4963
  %v5262 = vpop.f32.mrf.mxu0
  %v5263 = vadd.f32 0.0, %v5262
  %v5264 = vpop.f32.mrf.mxu0
  %v5265 = vpop.f32.mrf.mxu0
  %v5266 = vadd.f32 0.0, %v5265
  %v5267 = vpop.f32.mrf.mxu0
  %5268 = vmatprep.mubr.bf16.mxu0 %v5030
  %5269 = vmatmul.mubr.bf16.gmra.mxu0 %v4966
  %v5270 = vpop.f32.mrf.mxu0
  %v5271 = vadd.f32 0.0, %v5270
  %v5272 = vpop.f32.mrf.mxu0
  %v5273 = vpop.f32.mrf.mxu0
  %v5274 = vadd.f32 0.0, %v5273
  %v5275 = vpop.f32.mrf.mxu0
  %5276 = vmatprep.mubr.bf16.mxu0 %v5033
  %5277 = vmatmul.mubr.bf16.gmra.mxu0 %v4969
  %v5278 = vpop.f32.mrf.mxu0
  %v5279 = vadd.f32 0.0, %v5278
  %v5280 = vpop.f32.mrf.mxu0
  %v5281 = vpop.f32.mrf.mxu0
  %v5282 = vadd.f32 0.0, %v5281
  %v5283 = vpop.f32.mrf.mxu0
  %5284 = vmatprep.mubr.bf16.mxu0 %v5036
  %5285 = vmatmul.mubr.bf16.gmra.mxu0 %v4972
  %v5286 = vpop.f32.mrf.mxu0
  %v5287 = vadd.f32 0.0, %v5286
  %v5288 = vpop.f32.mrf.mxu0
  %v5289 = vpop.f32.mrf.mxu0
  %v5290 = vadd.f32 0.0, %v5289
  %v5291 = vpop.f32.mrf.mxu0
  %5292 = vmatprep.mubr.bf16.mxu0 %v5039
  %5293 = vmatmul.mubr.bf16.gmra.mxu0 %v4975
  %v5294 = vpop.f32.mrf.mxu0
  %v5295 = vadd.f32 0.0, %v5294
  %v5296 = vpop.f32.mrf.mxu0
  %v5297 = vpop.f32.mrf.mxu0
  %v5298 = vadd.f32 0.0, %v5297
  %v5299 = vpop.f32.mrf.mxu0
  %5300 = vmatprep.mubr.bf16.mxu0 %v5042
  %5301 = vmatmul.mubr.bf16.gmra.mxu0 %v4978
  %v5302 = vpop.f32.mrf.mxu0
  %v5303 = vadd.f32 0.0, %v5302
  %v5304 = vpop.f32.mrf.mxu0
  %v5305 = vpop.f32.mrf.mxu0
  %v5306 = vadd.f32 0.0, %v5305
  %v5307 = vpop.f32.mrf.mxu0
  %5308 = vdwg.mxu0
  %5309 = vmatprep.subr.bf16.mxu0 0
  %5310 = vmatpush1.bf16.msra.mxu0 0
  %5311 = vmatprep.subr.bf16.mxu0 0
  %5312 = vmatpush1.bf16.msra.mxu0 0
  %5313 = vmatprep.subr.bf16.mxu0 0
  %5314 = vmatpush1.bf16.msra.mxu0 0
  %5315 = vmatprep.subr.bf16.mxu0 0
  %5316 = vmatpush1.bf16.msra.mxu0 0
  %5317 = vmatprep.subr.bf16.mxu0 0
  %5318 = vmatpush1.bf16.msra.mxu0 0
  %5319 = vmatprep.subr.bf16.mxu0 0
  %5320 = vmatpush1.bf16.msra.mxu0 0
  %5321 = vmatprep.subr.bf16.mxu0 0
  %5322 = vmatpush1.bf16.msra.mxu0 %v5169
  %5323 = vmatprep.subr.bf16.mxu0 0
  %5324 = vmatpush1.bf16.msra.mxu0 %v5168
  %5325 = vmatprep.subr.bf16.mxu0 0
  %5326 = vmatpush2.bf16.msra.mxu0 0
  %5327 = vmatprep.subr.bf16.mxu0 0
  %5328 = vmatpush2.bf16.msra.mxu0 0
  %5329 = vmatprep.subr.bf16.mxu0 0
  %5330 = vmatpush2.bf16.msra.mxu0 0
  %5331 = vmatprep.subr.bf16.mxu0 0
  %5332 = vmatpush2.bf16.msra.mxu0 0
  %5333 = vmatprep.subr.bf16.mxu0 0
  %5334 = vmatpush2.bf16.msra.mxu0 0
  %5335 = vmatprep.subr.bf16.mxu0 0
  %5336 = vmatpush2.bf16.msra.mxu0 0
  %5337 = vmatprep.subr.bf16.mxu0 0
  %5338 = vmatpush2.bf16.msra.mxu0 0
  %5339 = vmatprep.subr.bf16.mxu0 0
  %5340 = vmatpush2.bf16.msra.mxu0 0
  %5341 = vmatprep.mubr.bf16.mxu0 0
  %5342 = vmatmul.mubr.bf16.gmra.mxu0 %v5189
  %v5343 = vpop.f32.mrf.mxu0
  %v5344 = vadd.f32 %v5247, %v5343
  %v5345 = vpop.f32.mrf.mxu0
  %v5346 = vpop.f32.mrf.mxu0
  %v5347 = vadd.f32 %v5250, %v5346
  %v5348 = vpop.f32.mrf.mxu0
  %5349 = vmatprep.mubr.bf16.mxu0 0
  %5350 = vmatmul.mubr.bf16.gmra.mxu0 %v5192
  %v5351 = vpop.f32.mrf.mxu0
  %v5352 = vadd.f32 %v5255, %v5351
  %v5353 = vpop.f32.mrf.mxu0
  %v5354 = vpop.f32.mrf.mxu0
  %v5355 = vadd.f32 %v5258, %v5354
  %v5356 = vpop.f32.mrf.mxu0
  %5357 = vmatprep.mubr.bf16.mxu0 0
  %5358 = vmatmul.mubr.bf16.gmra.mxu0 %v5195
  %v5359 = vpop.f32.mrf.mxu0
  %v5360 = vadd.f32 %v5263, %v5359
  %v5361 = vpop.f32.mrf.mxu0
  %v5362 = vpop.f32.mrf.mxu0
  %v5363 = vadd.f32 %v5266, %v5362
  %v5364 = vpop.f32.mrf.mxu0
  %5365 = vmatprep.mubr.bf16.mxu0 0
  %5366 = vmatmul.mubr.bf16.gmra.mxu0 %v5198
  %v5367 = vpop.f32.mrf.mxu0
  %v5368 = vadd.f32 %v5271, %v5367
  %v5369 = vpop.f32.mrf.mxu0
  %v5370 = vpop.f32.mrf.mxu0
  %v5371 = vadd.f32 %v5274, %v5370
  %v5372 = vpop.f32.mrf.mxu0
  %5373 = vmatprep.mubr.bf16.mxu0 0
  %5374 = vmatmul.mubr.bf16.gmra.mxu0 %v5201
  %v5375 = vpop.f32.mrf.mxu0
  %v5376 = vadd.f32 %v5279, %v5375
  %v5377 = vpop.f32.mrf.mxu0
  %v5378 = vpop.f32.mrf.mxu0
  %v5379 = vadd.f32 %v5282, %v5378
  %v5380 = vpop.f32.mrf.mxu0
  %5381 = vmatprep.mubr.bf16.mxu0 0
  %5382 = vmatmul.mubr.bf16.gmra.mxu0 %v5204
  %v5383 = vpop.f32.mrf.mxu0
  %v5384 = vadd.f32 %v5287, %v5383
  %v5385 = vpop.f32.mrf.mxu0
  %v5386 = vpop.f32.mrf.mxu0
  %v5387 = vadd.f32 %v5290, %v5386
  %v5388 = vpop.f32.mrf.mxu0
  %5389 = vmatprep.mubr.bf16.mxu0 0
  %5390 = vmatmul.mubr.bf16.gmra.mxu0 %v5207
  %v5391 = vpop.f32.mrf.mxu0
  %v5392 = vadd.f32 %v5295, %v5391
  %v5393 = vpop.f32.mrf.mxu0
  %v5394 = vpop.f32.mrf.mxu0
  %v5395 = vadd.f32 %v5298, %v5394
  %v5396 = vpop.f32.mrf.mxu0
  %5397 = vmatprep.mubr.bf16.mxu0 0
  %5398 = vmatmul.mubr.bf16.gmra.mxu0 %v5210
  %v5399 = vpop.f32.mrf.mxu0
  %v5400 = vadd.f32 %v5303, %v5399
  %v5401 = vpop.f32.mrf.mxu0
  %v5402 = vpop.f32.mrf.mxu0
  %v5403 = vadd.f32 %v5306, %v5402
  %v5404 = vpop.f32.mrf.mxu0
  %5405 = vdwg.mxu0
  %v5406 = vld [vmem:[%s5] sm:$0x1]
  %v5408 = vlaneseq
  %v5409 = vshrl.u32 %v5408, 7
  %v5410 = vsub.s32 0, %v5409
  %v5411 = vrot.slane %v5406, %v5410
  %v5413 = vmul.f32 %v5344, %v5411
  %v5414 = vmul.f32 %v5347, %v5411
  %v5415 = vmul.f32 %v5352, %v5411
  %v5416 = vmul.f32 %v5355, %v5411
  %v5417 = vmul.f32 %v5360, %v5411
  %v5418 = vmul.f32 %v5363, %v5411
  %v5419 = vmul.f32 %v5368, %v5411
  %v5420 = vmul.f32 %v5371, %v5411
  %v5421 = vmul.f32 %v5376, %v5411
  %v5422 = vmul.f32 %v5379, %v5411
  %v5423 = vmul.f32 %v5384, %v5411
  %v5424 = vmul.f32 %v5387, %v5411
  %v5425 = vmul.f32 %v5392, %v5411
  %v5426 = vmul.f32 %v5395, %v5411
  %v5427 = vmul.f32 %v5400, %v5411
  %v5428 = vmul.f32 %v5403, %v5411
  %v5429 = vld [vmem:[%s6] sm:$0x1]
  %v5431 = vlaneseq
  %v5432 = vshrl.u32 %v5431, 7
  %v5433 = vsub.s32 0, %v5432
  %v5434 = vrot.slane %v5429, %v5433
  %v5436 = vadd.f32 %v5413, %v5434
  %v5437 = vadd.f32 %v5414, %v5434
  %v5438 = vadd.f32 %v5415, %v5434
  %v5439 = vadd.f32 %v5416, %v5434
  %v5440 = vadd.f32 %v5417, %v5434
  %v5441 = vadd.f32 %v5418, %v5434
  %v5442 = vadd.f32 %v5419, %v5434
  %v5443 = vadd.f32 %v5420, %v5434
  %v5444 = vadd.f32 %v5421, %v5434
  %v5445 = vadd.f32 %v5422, %v5434
  %v5446 = vadd.f32 %v5423, %v5434
  %v5447 = vadd.f32 %v5424, %v5434
  %v5448 = vadd.f32 %v5425, %v5434
  %v5449 = vadd.f32 %v5426, %v5434
  %v5450 = vadd.f32 %v5427, %v5434
  %v5451 = vadd.f32 %v5428, %v5434
  %v5452 = vmax.f32 %v5436, 0.0
  %v5453 = vmax.f32 %v5437, 0.0
  %v5454 = vmax.f32 %v5438, 0.0
  %v5455 = vmax.f32 %v5439, 0.0
  %v5456 = vmax.f32 %v5440, 0.0
  %v5457 = vmax.f32 %v5441, 0.0
  %v5458 = vmax.f32 %v5442, 0.0
  %v5459 = vmax.f32 %v5443, 0.0
  %v5460 = vmax.f32 %v5444, 0.0
  %v5461 = vmax.f32 %v5445, 0.0
  %v5462 = vmax.f32 %v5446, 0.0
  %v5463 = vmax.f32 %v5447, 0.0
  %v5464 = vmax.f32 %v5448, 0.0
  %v5465 = vmax.f32 %v5449, 0.0
  %v5466 = vmax.f32 %v5450, 0.0
  %v5467 = vmax.f32 %v5451, 0.0
  %v5468 = vrot.slane %v5452, 1
  %v5469 = vrot.slane %v5453, 1
  %v5470 = vrot.slane %v5454, 1
  %v5471 = vrot.slane %v5455, 1
  %v5472 = vrot.slane %v5456, 1
  %v5473 = vrot.slane %v5457, 1
  %v5474 = vrot.slane %v5458, 1
  %v5475 = vrot.slane %v5459, 1
  %v5476 = vrot.slane %v5460, 1
  %v5477 = vrot.slane %v5461, 1
  %v5478 = vrot.slane %v5462, 1
  %v5479 = vrot.slane %v5463, 1
  %v5480 = vrot.slane %v5464, 1
  %v5481 = vrot.slane %v5465, 1
  %v5482 = vrot.slane %v5466, 1
  %v5483 = vrot.slane %v5467, 1
  %v5484 = vsel %vm1120, %v5482, %v5483
  %v5485 = vsel %vm1120, %v5481, %v5482
  %v5486 = vsel %vm1120, %v5480, %v5481
  %v5487 = vsel %vm1120, %v5479, %v5480
  %v5488 = vsel %vm1120, %v5478, %v5479
  %v5489 = vsel %vm1120, %v5477, %v5478
  %v5490 = vsel %vm1120, %v5476, %v5477
  %v5491 = vsel %vm1120, %v5475, %v5476
  %v5492 = vsel %vm1120, %v5474, %v5475
  %v5493 = vsel %vm1120, %v5473, %v5474
  %v5494 = vsel %vm1120, %v5472, %v5473
  %v5495 = vsel %vm1120, %v5471, %v5472
  %v5496 = vsel %vm1120, %v5470, %v5471
  %v5497 = vsel %vm1120, %v5469, %v5470
  %v5498 = vsel %vm1120, %v5468, %v5469
  %v5499 = vsel %vm1120, %v5483, %v5468
  %v5500 = vmax.f32 %v5452, %v5498
  %v5501 = vmax.f32 %v5453, %v5497
  %v5502 = vmax.f32 %v5454, %v5496
  %v5503 = vmax.f32 %v5455, %v5495
  %v5504 = vmax.f32 %v5456, %v5494
  %v5505 = vmax.f32 %v5457, %v5493
  %v5506 = vmax.f32 %v5458, %v5492
  %v5507 = vmax.f32 %v5459, %v5491
  %v5508 = vmax.f32 %v5460, %v5490
  %v5509 = vmax.f32 %v5461, %v5489
  %v5510 = vmax.f32 %v5462, %v5488
  %v5511 = vmax.f32 %v5463, %v5487
  %v5512 = vmax.f32 %v5464, %v5486
  %v5513 = vmax.f32 %v5465, %v5485
  %v5514 = vmax.f32 %v5466, %v5484
  %v5515 = vmax.f32 %v5467, %v5499
  %v5516 = vmax.f32 %v5500, %v5501
  %v5517 = vmax.f32 %v5501, %v5502
  %v5518 = vmax.f32 %v5502, %v5503
  %v5519 = vmax.f32 %v5503, %v5504
  %v5520 = vmax.f32 %v5504, %v5505
  %v5521 = vmax.f32 %v5505, %v5506
  %v5522 = vmax.f32 %v5506, %v5507
  %v5523 = vmax.f32 %v5507, %v5508
  %v5524 = vmax.f32 %v5508, %v5509
  %v5525 = vmax.f32 %v5509, %v5510
  %v5526 = vmax.f32 %v5510, %v5511
  %v5527 = vmax.f32 %v5511, %v5512
  %v5528 = vmax.f32 %v5512, %v5513
  %v5529 = vmax.f32 %v5513, %v5514
  %v5530 = vmax.f32 %v5514, %v5515
  %v5531 = vmax.f32 %v5515, %v5500
  %v5532 = vpack.c.bf16 %v5517, %v5516
  %v5533 = vpack.c.bf16 %v5519, %v5518
  %v5534 = vpack.c.bf16 %v5521, %v5520
  %v5535 = vpack.c.bf16 %v5523, %v5522
  %v5536 = vpack.c.bf16 %v5525, %v5524
  %v5537 = vpack.c.bf16 %v5527, %v5526
  %v5538 = vpack.c.bf16 %v5529, %v5528
  %v5539 = vpack.c.bf16 %v5531, %v5530
  %v5540 = vld [vmem:[%s11] sm:$0xf]
  %v5541 = vld [vmem:[%s11 + $0x4] sm:$0xf]
  %v5544 = vunpack.c.l.b16 %v5540
  %v5545 = vunpack.c.l.b16 %v5541
  %v5546 = vpack.c.b16 %v5545, %v5544
  %v5548 = vsel %vm4938, %v5546, 0
  %5550 = vmatprep.subr.bf16.mxu0 0
  %5551 = vmatpush1.bf16.msra.mxu0 0
  %5552 = vmatprep.subr.bf16.mxu0 0
  %5553 = vmatpush1.bf16.msra.mxu0 0
  %5554 = vmatprep.subr.bf16.mxu0 0
  %5555 = vmatpush1.bf16.msra.mxu0 0
  %5556 = vmatprep.subr.bf16.mxu0 0
  %5557 = vmatpush1.bf16.msra.mxu0 0
  %5558 = vmatprep.subr.bf16.mxu0 0
  %5559 = vmatpush1.bf16.msra.mxu0 %v5535
  %5560 = vmatprep.subr.bf16.mxu0 0
  %5561 = vmatpush1.bf16.msra.mxu0 %v5534
  %5562 = vmatprep.subr.bf16.mxu0 0
  %5563 = vmatpush1.bf16.msra.mxu0 %v5533
  %5564 = vmatprep.subr.bf16.mxu0 0
  %5565 = vmatpush1.bf16.msra.mxu0 %v5532
  %5566 = vmatprep.subr.bf16.mxu0 0
  %5567 = vmatpush2.bf16.msra.mxu0 0
  %5568 = vmatprep.subr.bf16.mxu0 0
  %5569 = vmatpush2.bf16.msra.mxu0 0
  %5570 = vmatprep.subr.bf16.mxu0 0
  %5571 = vmatpush2.bf16.msra.mxu0 0
  %5572 = vmatprep.subr.bf16.mxu0 0
  %5573 = vmatpush2.bf16.msra.mxu0 0
  %5574 = vmatprep.subr.bf16.mxu0 0
  %5575 = vmatpush2.bf16.msra.mxu0 0
  %5576 = vmatprep.subr.bf16.mxu0 0
  %5577 = vmatpush2.bf16.msra.mxu0 0
  %5578 = vmatprep.subr.bf16.mxu0 0
  %5579 = vmatpush2.bf16.msra.mxu0 0
  %5580 = vmatprep.subr.bf16.mxu0 0
  %5581 = vmatpush2.bf16.msra.mxu0 0
  %5582 = vmatprep.mubr.bf16.mxu0 0
  %5583 = vmatmul.mubr.bf16.gmra.mxu0 %v5548
  %v5584 = vpop.f32.mrf.mxu0
  %v5585 = vadd.f32 0.0, %v5584
  %v5586 = vpop.f32.mrf.mxu0
  %v5587 = vpop.f32.mrf.mxu0
  %v5588 = vadd.f32 0.0, %v5587
  %v5589 = vpop.f32.mrf.mxu0
  %5590 = vdwg.mxu0
  %5591 = vmatprep.subr.bf16.mxu0 0
  %5592 = vmatpush1.bf16.msra.mxu0 0
  %5593 = vmatprep.subr.bf16.mxu0 0
  %5594 = vmatpush1.bf16.msra.mxu0 0
  %5595 = vmatprep.subr.bf16.mxu0 0
  %5596 = vmatpush1.bf16.msra.mxu0 0
  %5597 = vmatprep.subr.bf16.mxu0 0
  %5598 = vmatpush1.bf16.msra.mxu0 0
  %5599 = vmatprep.subr.bf16.mxu0 0
  %5600 = vmatpush1.bf16.msra.mxu0 %v5539
  %5601 = vmatprep.subr.bf16.mxu0 0
  %5602 = vmatpush1.bf16.msra.mxu0 %v5538
  %5603 = vmatprep.subr.bf16.mxu0 0
  %5604 = vmatpush1.bf16.msra.mxu0 %v5537
  %5605 = vmatprep.subr.bf16.mxu0 0
  %5606 = vmatpush1.bf16.msra.mxu0 %v5536
  %5607 = vmatprep.subr.bf16.mxu0 0
  %5608 = vmatpush2.bf16.msra.mxu0 0
  %5609 = vmatprep.subr.bf16.mxu0 0
  %5610 = vmatpush2.bf16.msra.mxu0 0
  %5611 = vmatprep.subr.bf16.mxu0 0
  %5612 = vmatpush2.bf16.msra.mxu0 0
  %5613 = vmatprep.subr.bf16.mxu0 0
  %5614 = vmatpush2.bf16.msra.mxu0 0
  %5615 = vmatprep.subr.bf16.mxu0 0
  %5616 = vmatpush2.bf16.msra.mxu0 0
  %5617 = vmatprep.subr.bf16.mxu0 0
  %5618 = vmatpush2.bf16.msra.mxu0 0
  %5619 = vmatprep.subr.bf16.mxu0 0
  %5620 = vmatpush2.bf16.msra.mxu0 0
  %5621 = vmatprep.subr.bf16.mxu0 0
  %5622 = vmatpush2.bf16.msra.mxu0 0
  %5623 = vmatprep.mubr.bf16.mxu0 0
  %5624 = vmatmul.mubr.bf16.gmra.mxu0 %v5548
  %v5625 = vpop.f32.mrf.mxu0
  %v5626 = vadd.f32 0.0, %v5625
  %v5627 = vpop.f32.mrf.mxu0
  %v5628 = vpop.f32.mrf.mxu0
  %v5629 = vadd.f32 0.0, %v5628
  %v5630 = vpop.f32.mrf.mxu0
  %5631 = vdwg.mxu0
  %v5632 = vand.u32 %v223, 15
  %v5633 = vand.u32 %v224, 15
  %v5634 = vand.u32 %v225, 15
  %v5635 = vand.u32 %v226, 15
  %v5636 = vand.u32 %v5632, 3
  %v5637 = vand.u32 %v5633, 3
  %v5638 = vand.u32 %v5634, 3
  %v5639 = vand.u32 %v5635, 3
  %vm5640 = vcmp.ge.s32.totalorder %v5632, 4
  %vm5641 = vcmp.ge.s32.totalorder %v5633, 4
  %vm5642 = vcmp.ge.s32.totalorder %v5634, 4
  %vm5643 = vcmp.ge.s32.totalorder %v5635, 4
  %vm5644 = vcmp.lt.s32.totalorder %v5632, 12
  %vm5645 = vcmp.lt.s32.totalorder %v5633, 12
  %vm5646 = vcmp.lt.s32.totalorder %v5634, 12
  %vm5647 = vcmp.lt.s32.totalorder %v5635, 12
  %vm5648 = vcmp.ge.s32.totalorder %v5636, 1
  %vm5649 = vcmp.ge.s32.totalorder %v5637, 1
  %vm5650 = vcmp.ge.s32.totalorder %v5638, 1
  %vm5651 = vcmp.ge.s32.totalorder %v5639, 1
  %vm5652 = vcmp.lt.s32.totalorder %v5636, 3
  %vm5653 = vcmp.lt.s32.totalorder %v5637, 3
  %vm5654 = vcmp.lt.s32.totalorder %v5638, 3
  %vm5655 = vcmp.lt.s32.totalorder %v5639, 3
  %v5656 = vrot.slane %v5585, 3
  %v5657 = vrot.slane %v5588, 3
  %v5658 = vrot.slane %v5626, 3
  %v5659 = vrot.slane %v5629, 3
  %vm5660 = vcmp.lt.s32.totalorder %v223, 5
  %v5661 = vsel %vm5660, %v5658, %v5659
  %v5662 = vsel %vm5660, %v5657, %v5658
  %v5663 = vsel %vm5660, %v5656, %v5657
  %v5664 = vsel %vm5660, %v5659, %v5656
  %vm5665 = vmand %vm5640, %vm5648
  %vm5666 = vmand %vm5641, %vm5649
  %vm5667 = vmand %vm5642, %vm5650
  %vm5668 = vmand %vm5643, %vm5651
  %v5669 = vsel %vm5665, %v5664, 0.0
  %v5670 = vsel %vm5666, %v5663, 0.0
  %v5671 = vsel %vm5667, %v5662, 0.0
  %v5672 = vsel %vm5668, %v5661, 0.0
  %v5673 = vpack.c.bf16 %v5670, %v5669
  %v5674 = vpack.c.bf16 %v5672, %v5671
  %v5675 = vrot.slane %v5585, 4
  %v5676 = vrot.slane %v5588, 4
  %v5677 = vrot.slane %v5626, 4
  %v5678 = vrot.slane %v5629, 4
  %vm5679 = vcmp.lt.s32.totalorder %v223, 4
  %v5680 = vsel %vm5679, %v5677, %v5678
  %v5681 = vsel %vm5679, %v5676, %v5677
  %v5682 = vsel %vm5679, %v5675, %v5676
  %v5683 = vsel %vm5679, %v5678, %v5675
  %v5684 = vsel %vm5640, %v5683, 0.0
  %v5685 = vsel %vm5641, %v5682, 0.0
  %v5686 = vsel %vm5642, %v5681, 0.0
  %v5687 = vsel %vm5643, %v5680, 0.0
  %v5688 = vpack.c.bf16 %v5685, %v5684
  %v5689 = vpack.c.bf16 %v5687, %v5686
  %v5690 = vrot.slane %v5585, 5
  %v5691 = vrot.slane %v5588, 5
  %v5692 = vrot.slane %v5626, 5
  %v5693 = vrot.slane %v5629, 5
  %vm5694 = vcmp.lt.s32.totalorder %v223, 3
  %v5695 = vsel %vm5694, %v5692, %v5693
  %v5696 = vsel %vm5694, %v5691, %v5692
  %v5697 = vsel %vm5694, %v5690, %v5691
  %v5698 = vsel %vm5694, %v5693, %v5690
  %vm5699 = vmand %vm5640, %vm5652
  %vm5700 = vmand %vm5641, %vm5653
  %vm5701 = vmand %vm5642, %vm5654
  %vm5702 = vmand %vm5643, %vm5655
  %v5703 = vsel %vm5699, %v5698, 0.0
  %v5704 = vsel %vm5700, %v5697, 0.0
  %v5705 = vsel %vm5701, %v5696, 0.0
  %v5706 = vsel %vm5702, %v5695, 0.0
  %v5707 = vpack.c.bf16 %v5704, %v5703
  %v5708 = vpack.c.bf16 %v5706, %v5705
  %v5709 = vrot.slane %v5585, 7
  %v5710 = vrot.slane %v5588, 7
  %v5711 = vrot.slane %v5626, 7
  %v5712 = vrot.slane %v5629, 7
  %v5713 = vsel %vm735, %v5711, %v5712
  %v5714 = vsel %vm735, %v5710, %v5711
  %v5715 = vsel %vm735, %v5709, %v5710
  %v5716 = vsel %vm735, %v5712, %v5709
  %v5717 = vsel %vm5648, %v5716, 0.0
  %v5718 = vsel %vm5649, %v5715, 0.0
  %v5719 = vsel %vm5650, %v5714, 0.0
  %v5720 = vsel %vm5651, %v5713, 0.0
  %v5721 = vpack.c.bf16 %v5718, %v5717
  %v5722 = vpack.c.bf16 %v5720, %v5719
  %v5723 = vpack.c.bf16 %v5588, %v5585
  %v5724 = vpack.c.bf16 %v5629, %v5626
  %v5725 = vrot.slane %v5585, 1
  %v5726 = vrot.slane %v5588, 1
  %v5727 = vrot.slane %v5626, 1
  %v5728 = vrot.slane %v5629, 1
  %v5729 = vsel %vm1120, %v5727, %v5728
  %v5730 = vsel %vm1120, %v5726, %v5727
  %v5731 = vsel %vm1120, %v5725, %v5726
  %v5732 = vsel %vm1120, %v5728, %v5725
  %v5733 = vsel %vm5652, %v5731, 0.0
  %v5734 = vsel %vm5653, %v5730, 0.0
  %v5735 = vsel %vm5654, %v5729, 0.0
  %v5736 = vsel %vm5655, %v5732, 0.0
  %v5737 = vpack.c.bf16 %v5734, %v5733
  %v5738 = vpack.c.bf16 %v5736, %v5735
  %vm5739 = vmand %vm5644, %vm5648
  %vm5740 = vmand %vm5645, %vm5649
  %vm5741 = vmand %vm5646, %vm5650
  %vm5742 = vmand %vm5647, %vm5651
  %v5743 = vsel %vm5739, %v5663, 0.0
  %v5744 = vsel %vm5740, %v5662, 0.0
  %v5745 = vsel %vm5741, %v5661, 0.0
  %v5746 = vsel %vm5742, %v5664, 0.0
  %v5747 = vpack.c.bf16 %v5744, %v5743
  %v5748 = vpack.c.bf16 %v5746, %v5745
  %v5749 = vsel %vm5644, %v5682, 0.0
  %v5750 = vsel %vm5645, %v5681, 0.0
  %v5751 = vsel %vm5646, %v5680, 0.0
  %v5752 = vsel %vm5647, %v5683, 0.0
  %v5753 = vpack.c.bf16 %v5750, %v5749
  %v5754 = vpack.c.bf16 %v5752, %v5751
  %vm5755 = vmand %vm5644, %vm5652
  %vm5756 = vmand %vm5645, %vm5653
  %vm5757 = vmand %vm5646, %vm5654
  %vm5758 = vmand %vm5647, %vm5655
  %v5759 = vsel %vm5755, %v5697, 0.0
  %v5760 = vsel %vm5756, %v5696, 0.0
  %v5761 = vsel %vm5757, %v5695, 0.0
  %v5762 = vsel %vm5758, %v5698, 0.0
  %v5763 = vpack.c.bf16 %v5760, %v5759
  %v5764 = vpack.c.bf16 %v5762, %v5761
  %5767 = vrot.lane.b32.xlu0 %v5688, 64
  %v5768 = vpop.permute.xlu0 %5767
  %5769 = vrot.lane.b32.xlu0 %v5689, 64
  %v5770 = vpop.permute.xlu0 %5769
  %5773 = vrot.lane.b32.xlu0 %v5721, 64
  %v5774 = vpop.permute.xlu0 %5773
  %5775 = vrot.lane.b32.xlu0 %v5722, 64
  %v5776 = vpop.permute.xlu0 %5775
  %5779 = vrot.lane.b32.xlu0 %v5737, 64
  %v5780 = vpop.permute.xlu0 %5779
  %5781 = vrot.lane.b32.xlu0 %v5738, 64
  %v5782 = vpop.permute.xlu0 %5781
  %5785 = vrot.lane.b32.xlu0 %v5753, 64
  %v5786 = vpop.permute.xlu0 %5785
  %5787 = vrot.lane.b32.xlu0 %v5754, 64
  %v5788 = vpop.permute.xlu0 %5787
  %v5791 = vsel %vm4938, %v5673, %v5768
  %v5795 = vsel %vm4938, %v5674, %v5770
  %v5799 = vsel %vm4938, %v5707, %v5774
  %v5803 = vsel %vm4938, %v5708, %v5776
  %v5807 = vsel %vm4938, %v5723, %v5780
  %v5811 = vsel %vm4938, %v5724, %v5782
  %v5815 = vsel %vm4938, %v5747, %v5786
  %v5819 = vsel %vm4938, %v5748, %v5788
  %v5821 = vld [vmem:[%s7] sm:$0xf]
  %v5822 = vld [vmem:[%s7 + $0x4] sm:$0xf]
  %v5823 = vld [vmem:[%s7 + $0x8] sm:$0xf]
  %v5824 = vld [vmem:[%s7 + $0xc] sm:$0xf]
  %v5825 = vld [vmem:[%s7 + $0x10] sm:$0xf]
  %v5826 = vld [vmem:[%s7 + $0x14] sm:$0xf]
  %v5827 = vld [vmem:[%s7 + $0x18] sm:$0xf]
  %v5828 = vld [vmem:[%s7 + $0x1c] sm:$0xf]
  %v5829 = vld [vmem:[%s7 + $0x20] sm:$0xf]
  %v5830 = vld [vmem:[%s7 + $0x24] sm:$0xf]
  %v5831 = vld [vmem:[%s7 + $0x28] sm:$0xf]
  %v5832 = vld [vmem:[%s7 + $0x2c] sm:$0xf]
  %v5833 = vld [vmem:[%s7 + $0x30] sm:$0xf]
  %v5834 = vld [vmem:[%s7 + $0x34] sm:$0xf]
  %v5835 = vld [vmem:[%s7 + $0x38] sm:$0xf]
  %v5836 = vld [vmem:[%s7 + $0x3c] sm:$0xf]
  %v5837 = vld [vmem:[%s7 + $0x40] sm:$0xf]
  %v5838 = vld [vmem:[%s7 + $0x44] sm:$0xf]
  %v5839 = vld [vmem:[%s7 + $0x48] sm:$0xf]
  %v5840 = vld [vmem:[%s7 + $0x4c] sm:$0xf]
  %v5841 = vld [vmem:[%s7 + $0x50] sm:$0xf]
  %v5842 = vld [vmem:[%s7 + $0x54] sm:$0xf]
  %v5843 = vld [vmem:[%s7 + $0x58] sm:$0xf]
  %v5844 = vld [vmem:[%s7 + $0x5c] sm:$0xf]
  %v5845 = vld [vmem:[%s7 + $0x60] sm:$0xf]
  %v5846 = vld [vmem:[%s7 + $0x64] sm:$0xf]
  %v5847 = vld [vmem:[%s7 + $0x68] sm:$0xf]
  %v5848 = vld [vmem:[%s7 + $0x6c] sm:$0xf]
  %v5849 = vld [vmem:[%s7 + $0x70] sm:$0xf]
  %v5850 = vld [vmem:[%s7 + $0x74] sm:$0xf]
  %v5851 = vld [vmem:[%s7 + $0x78] sm:$0xf]
  %v5852 = vld [vmem:[%s7 + $0x7c] sm:$0xf]
  %v5853 = vld [vmem:[%s7 + $0x80] sm:$0xf]
  %v5854 = vld [vmem:[%s7 + $0x84] sm:$0xf]
  %v5855 = vld [vmem:[%s7 + $0x88] sm:$0xf]
  %v5856 = vld [vmem:[%s7 + $0x8c] sm:$0xf]
  %v5857 = vld [vmem:[%s7 + $0x90] sm:$0xf]
  %v5858 = vld [vmem:[%s7 + $0x94] sm:$0xf]
  %v5859 = vld [vmem:[%s7 + $0x98] sm:$0xf]
  %v5860 = vld [vmem:[%s7 + $0x9c] sm:$0xf]
  %v5861 = vld [vmem:[%s7 + $0xa0] sm:$0xf]
  %v5862 = vld [vmem:[%s7 + $0xa4] sm:$0xf]
  %v5863 = vld [vmem:[%s7 + $0xa8] sm:$0xf]
  %v5864 = vld [vmem:[%s7 + $0xac] sm:$0xf]
  %v5865 = vld [vmem:[%s7 + $0xb0] sm:$0xf]
  %v5866 = vld [vmem:[%s7 + $0xb4] sm:$0xf]
  %v5867 = vld [vmem:[%s7 + $0xb8] sm:$0xf]
  %v5868 = vld [vmem:[%s7 + $0xbc] sm:$0xf]
  %v5869 = vld [vmem:[%s7 + $0xc0] sm:$0xf]
  %v5870 = vld [vmem:[%s7 + $0xc4] sm:$0xf]
  %v5871 = vld [vmem:[%s7 + $0xc8] sm:$0xf]
  %v5872 = vld [vmem:[%s7 + $0xcc] sm:$0xf]
  %v5873 = vld [vmem:[%s7 + $0xd0] sm:$0xf]
  %v5874 = vld [vmem:[%s7 + $0xd4] sm:$0xf]
  %v5875 = vld [vmem:[%s7 + $0xd8] sm:$0xf]
  %v5876 = vld [vmem:[%s7 + $0xdc] sm:$0xf]
  %v5877 = vld [vmem:[%s7 + $0xe0] sm:$0xf]
  %v5878 = vld [vmem:[%s7 + $0xe4] sm:$0xf]
  %v5879 = vld [vmem:[%s7 + $0xe8] sm:$0xf]
  %v5880 = vld [vmem:[%s7 + $0xec] sm:$0xf]
  %v5881 = vld [vmem:[%s7 + $0xf0] sm:$0xf]
  %v5882 = vld [vmem:[%s7 + $0xf4] sm:$0xf]
  %v5883 = vld [vmem:[%s7 + $0xf8] sm:$0xf]
  %v5884 = vld [vmem:[%s7 + $0xfc] sm:$0xf]
  %v5885 = vld [vmem:[%s7 + $0x100] sm:$0xf]
  %v5886 = vld [vmem:[%s7 + $0x104] sm:$0xf]
  %v5887 = vld [vmem:[%s7 + $0x108] sm:$0xf]
  %v5888 = vld [vmem:[%s7 + $0x10c] sm:$0xf]
  %v5889 = vld [vmem:[%s7 + $0x110] sm:$0xf]
  %v5890 = vld [vmem:[%s7 + $0x114] sm:$0xf]
  %v5891 = vld [vmem:[%s7 + $0x118] sm:$0xf]
  %v5892 = vld [vmem:[%s7 + $0x11c] sm:$0xf]
  %v5965 = vunpack.c.l.b16 %v5821
  %v5966 = vunpack.c.l.b16 %v5822
  %v5967 = vunpack.c.l.b16 %v5823
  %v5968 = vunpack.c.l.b16 %v5824
  %v5969 = vunpack.c.l.b16 %v5825
  %v5970 = vunpack.c.l.b16 %v5826
  %v5971 = vunpack.c.l.b16 %v5827
  %v5972 = vunpack.c.l.b16 %v5828
  %v5973 = vunpack.c.l.b16 %v5829
  %v5974 = vunpack.c.l.b16 %v5830
  %v5975 = vunpack.c.l.b16 %v5831
  %v5976 = vunpack.c.l.b16 %v5832
  %v5977 = vunpack.c.l.b16 %v5833
  %v5978 = vunpack.c.l.b16 %v5834
  %v5979 = vunpack.c.l.b16 %v5835
  %v5980 = vunpack.c.l.b16 %v5836
  %v5981 = vunpack.c.l.b16 %v5837
  %v5982 = vunpack.c.l.b16 %v5838
  %v5983 = vunpack.c.l.b16 %v5839
  %v5984 = vunpack.c.l.b16 %v5840
  %v5985 = vunpack.c.l.b16 %v5841
  %v5986 = vunpack.c.l.b16 %v5842
  %v5987 = vunpack.c.l.b16 %v5843
  %v5988 = vunpack.c.l.b16 %v5844
  %v5989 = vunpack.c.l.b16 %v5845
  %v5990 = vunpack.c.l.b16 %v5846
  %v5991 = vunpack.c.l.b16 %v5847
  %v5992 = vunpack.c.l.b16 %v5848
  %v5993 = vunpack.c.l.b16 %v5849
  %v5994 = vunpack.c.l.b16 %v5850
  %v5995 = vunpack.c.l.b16 %v5851
  %v5996 = vunpack.c.l.b16 %v5852
  %v5997 = vunpack.c.l.b16 %v5853
  %v5998 = vunpack.c.l.b16 %v5854
  %v5999 = vunpack.c.l.b16 %v5855
  %v6000 = vunpack.c.l.b16 %v5856
  %v6001 = vunpack.c.l.b16 %v5857
  %v6002 = vunpack.c.l.b16 %v5858
  %v6003 = vunpack.c.l.b16 %v5859
  %v6004 = vunpack.c.l.b16 %v5860
  %v6005 = vunpack.c.l.b16 %v5861
  %v6006 = vunpack.c.l.b16 %v5862
  %v6007 = vunpack.c.l.b16 %v5863
  %v6008 = vunpack.c.l.b16 %v5864
  %v6009 = vunpack.c.l.b16 %v5865
  %v6010 = vunpack.c.l.b16 %v5866
  %v6011 = vunpack.c.l.b16 %v5867
  %v6012 = vunpack.c.l.b16 %v5868
  %v6013 = vunpack.c.l.b16 %v5869
  %v6014 = vunpack.c.l.b16 %v5870
  %v6015 = vunpack.c.l.b16 %v5871
  %v6016 = vunpack.c.l.b16 %v5872
  %v6017 = vunpack.c.l.b16 %v5873
  %v6018 = vunpack.c.l.b16 %v5874
  %v6019 = vunpack.c.l.b16 %v5875
  %v6020 = vunpack.c.l.b16 %v5876
  %v6021 = vunpack.c.l.b16 %v5877
  %v6022 = vunpack.c.l.b16 %v5878
  %v6023 = vunpack.c.l.b16 %v5879
  %v6024 = vunpack.c.l.b16 %v5880
  %v6025 = vunpack.c.l.b16 %v5881
  %v6026 = vunpack.c.l.b16 %v5882
  %v6027 = vunpack.c.l.b16 %v5883
  %v6028 = vunpack.c.l.b16 %v5884
  %v6029 = vunpack.c.l.b16 %v5885
  %v6030 = vunpack.c.l.b16 %v5886
  %v6031 = vunpack.c.l.b16 %v5887
  %v6032 = vunpack.c.l.b16 %v5888
  %v6033 = vunpack.c.l.b16 %v5889
  %v6034 = vunpack.c.l.b16 %v5890
  %v6035 = vunpack.c.l.b16 %v5891
  %v6036 = vunpack.c.l.b16 %v5892
  %v6037 = vpack.c.b16 %v5966, %v5965
  %v6038 = vpack.c.b16 %v5968, %v5967
  %v6039 = vpack.c.b16 %v5970, %v5969
  %v6040 = vpack.c.b16 %v5972, %v5971
  %v6041 = vpack.c.b16 %v5974, %v5973
  %v6042 = vpack.c.b16 %v5976, %v5975
  %v6043 = vpack.c.b16 %v5978, %v5977
  %v6044 = vpack.c.b16 %v5980, %v5979
  %v6045 = vpack.c.b16 %v5982, %v5981
  %v6046 = vpack.c.b16 %v5984, %v5983
  %v6047 = vpack.c.b16 %v5986, %v5985
  %v6048 = vpack.c.b16 %v5988, %v5987
  %v6049 = vpack.c.b16 %v5990, %v5989
  %v6050 = vpack.c.b16 %v5992, %v5991
  %v6051 = vpack.c.b16 %v5994, %v5993
  %v6052 = vpack.c.b16 %v5996, %v5995
  %v6053 = vpack.c.b16 %v5998, %v5997
  %v6054 = vpack.c.b16 %v6000, %v5999
  %v6055 = vpack.c.b16 %v6002, %v6001
  %v6056 = vpack.c.b16 %v6004, %v6003
  %v6057 = vpack.c.b16 %v6006, %v6005
  %v6058 = vpack.c.b16 %v6008, %v6007
  %v6059 = vpack.c.b16 %v6010, %v6009
  %v6060 = vpack.c.b16 %v6012, %v6011
  %v6061 = vpack.c.b16 %v6014, %v6013
  %v6062 = vpack.c.b16 %v6016, %v6015
  %v6063 = vpack.c.b16 %v6018, %v6017
  %v6064 = vpack.c.b16 %v6020, %v6019
  %v6065 = vpack.c.b16 %v6022, %v6021
  %v6066 = vpack.c.b16 %v6024, %v6023
  %v6067 = vpack.c.b16 %v6026, %v6025
  %v6068 = vpack.c.b16 %v6028, %v6027
  %v6069 = vpack.c.b16 %v6030, %v6029
  %v6070 = vpack.c.b16 %v6032, %v6031
  %v6071 = vpack.c.b16 %v6034, %v6033
  %v6072 = vpack.c.b16 %v6036, %v6035
  %v6110 = vsel %vm4938, %v5763, 0
  %v6113 = vsel %vm4938, %v5764, 0
  %6115 = vmatprep.subr.bf16.mxu0 0
  %6116 = vmatpush1.bf16.msra.mxu0 %v6044
  %6117 = vmatprep.subr.bf16.mxu0 0
  %6118 = vmatpush1.bf16.msra.mxu0 %v6043
  %6119 = vmatprep.subr.bf16.mxu0 0
  %6120 = vmatpush1.bf16.msra.mxu0 %v6042
  %6121 = vmatprep.subr.bf16.mxu0 0
  %6122 = vmatpush1.bf16.msra.mxu0 %v6041
  %6123 = vmatprep.subr.bf16.mxu0 0
  %6124 = vmatpush1.bf16.msra.mxu0 %v6040
  %6125 = vmatprep.subr.bf16.mxu0 0
  %6126 = vmatpush1.bf16.msra.mxu0 %v6039
  %6127 = vmatprep.subr.bf16.mxu0 0
  %6128 = vmatpush1.bf16.msra.mxu0 %v6038
  %6129 = vmatprep.subr.bf16.mxu0 0
  %6130 = vmatpush1.bf16.msra.mxu0 %v6037
  %6131 = vmatprep.subr.bf16.mxu0 0
  %6132 = vmatpush2.bf16.msra.mxu0 %v6052
  %6133 = vmatprep.subr.bf16.mxu0 0
  %6134 = vmatpush2.bf16.msra.mxu0 %v6051
  %6135 = vmatprep.subr.bf16.mxu0 0
  %6136 = vmatpush2.bf16.msra.mxu0 %v6050
  %6137 = vmatprep.subr.bf16.mxu0 0
  %6138 = vmatpush2.bf16.msra.mxu0 %v6049
  %6139 = vmatprep.subr.bf16.mxu0 0
  %6140 = vmatpush2.bf16.msra.mxu0 %v6048
  %6141 = vmatprep.subr.bf16.mxu0 0
  %6142 = vmatpush2.bf16.msra.mxu0 %v6047
  %6143 = vmatprep.subr.bf16.mxu0 0
  %6144 = vmatpush2.bf16.msra.mxu0 %v6046
  %6145 = vmatprep.subr.bf16.mxu0 0
  %6146 = vmatpush2.bf16.msra.mxu0 %v6045
  %6147 = vmatprep.mubr.bf16.mxu0 %v5799
  %6148 = vmatmul.mubr.bf16.gmra.mxu0 %v5791
  %v6149 = vpop.f32.mrf.mxu0
  %v6150 = vadd.f32 0.0, %v6149
  %v6151 = vpop.f32.mrf.mxu0
  %v6152 = vpop.f32.mrf.mxu0
  %v6153 = vadd.f32 0.0, %v6152
  %v6154 = vpop.f32.mrf.mxu0
  %6155 = vmatprep.mubr.bf16.mxu0 %v5803
  %6156 = vmatmul.mubr.bf16.gmra.mxu0 %v5795
  %v6157 = vpop.f32.mrf.mxu0
  %v6158 = vadd.f32 0.0, %v6157
  %v6159 = vpop.f32.mrf.mxu0
  %v6160 = vpop.f32.mrf.mxu0
  %v6161 = vadd.f32 0.0, %v6160
  %v6162 = vpop.f32.mrf.mxu0
  %6163 = vdwg.mxu0
  %6164 = vmatprep.subr.bf16.mxu0 0
  %6165 = vmatpush1.bf16.msra.mxu0 %v6060
  %6166 = vmatprep.subr.bf16.mxu0 0
  %6167 = vmatpush1.bf16.msra.mxu0 %v6059
  %6168 = vmatprep.subr.bf16.mxu0 0
  %6169 = vmatpush1.bf16.msra.mxu0 %v6058
  %6170 = vmatprep.subr.bf16.mxu0 0
  %6171 = vmatpush1.bf16.msra.mxu0 %v6057
  %6172 = vmatprep.subr.bf16.mxu0 0
  %6173 = vmatpush1.bf16.msra.mxu0 %v6056
  %6174 = vmatprep.subr.bf16.mxu0 0
  %6175 = vmatpush1.bf16.msra.mxu0 %v6055
  %6176 = vmatprep.subr.bf16.mxu0 0
  %6177 = vmatpush1.bf16.msra.mxu0 %v6054
  %6178 = vmatprep.subr.bf16.mxu0 0
  %6179 = vmatpush1.bf16.msra.mxu0 %v6053
  %6180 = vmatprep.subr.bf16.mxu0 0
  %6181 = vmatpush2.bf16.msra.mxu0 %v6068
  %6182 = vmatprep.subr.bf16.mxu0 0
  %6183 = vmatpush2.bf16.msra.mxu0 %v6067
  %6184 = vmatprep.subr.bf16.mxu0 0
  %6185 = vmatpush2.bf16.msra.mxu0 %v6066
  %6186 = vmatprep.subr.bf16.mxu0 0
  %6187 = vmatpush2.bf16.msra.mxu0 %v6065
  %6188 = vmatprep.subr.bf16.mxu0 0
  %6189 = vmatpush2.bf16.msra.mxu0 %v6064
  %6190 = vmatprep.subr.bf16.mxu0 0
  %6191 = vmatpush2.bf16.msra.mxu0 %v6063
  %6192 = vmatprep.subr.bf16.mxu0 0
  %6193 = vmatpush2.bf16.msra.mxu0 %v6062
  %6194 = vmatprep.subr.bf16.mxu0 0
  %6195 = vmatpush2.bf16.msra.mxu0 %v6061
  %6196 = vmatprep.mubr.bf16.mxu0 %v5815
  %6197 = vmatmul.mubr.bf16.gmra.mxu0 %v5807
  %v6198 = vpop.f32.mrf.mxu0
  %v6199 = vadd.f32 %v6150, %v6198
  %v6200 = vpop.f32.mrf.mxu0
  %v6201 = vpop.f32.mrf.mxu0
  %v6202 = vadd.f32 %v6153, %v6201
  %v6203 = vpop.f32.mrf.mxu0
  %6204 = vmatprep.mubr.bf16.mxu0 %v5819
  %6205 = vmatmul.mubr.bf16.gmra.mxu0 %v5811
  %v6206 = vpop.f32.mrf.mxu0
  %v6207 = vadd.f32 %v6158, %v6206
  %v6208 = vpop.f32.mrf.mxu0
  %v6209 = vpop.f32.mrf.mxu0
  %v6210 = vadd.f32 %v6161, %v6209
  %v6211 = vpop.f32.mrf.mxu0
  %6212 = vdwg.mxu0
  %6213 = vmatprep.subr.bf16.mxu0 0
  %6214 = vmatpush1.bf16.msra.mxu0 0
  %6215 = vmatprep.subr.bf16.mxu0 0
  %6216 = vmatpush1.bf16.msra.mxu0 0
  %6217 = vmatprep.subr.bf16.mxu0 0
  %6218 = vmatpush1.bf16.msra.mxu0 0
  %6219 = vmatprep.subr.bf16.mxu0 0
  %6220 = vmatpush1.bf16.msra.mxu0 0
  %6221 = vmatprep.subr.bf16.mxu0 0
  %6222 = vmatpush1.bf16.msra.mxu0 %v6072
  %6223 = vmatprep.subr.bf16.mxu0 0
  %6224 = vmatpush1.bf16.msra.mxu0 %v6071
  %6225 = vmatprep.subr.bf16.mxu0 0
  %6226 = vmatpush1.bf16.msra.mxu0 %v6070
  %6227 = vmatprep.subr.bf16.mxu0 0
  %6228 = vmatpush1.bf16.msra.mxu0 %v6069
  %6229 = vmatprep.subr.bf16.mxu0 0
  %6230 = vmatpush2.bf16.msra.mxu0 0
  %6231 = vmatprep.subr.bf16.mxu0 0
  %6232 = vmatpush2.bf16.msra.mxu0 0
  %6233 = vmatprep.subr.bf16.mxu0 0
  %6234 = vmatpush2.bf16.msra.mxu0 0
  %6235 = vmatprep.subr.bf16.mxu0 0
  %6236 = vmatpush2.bf16.msra.mxu0 0
  %6237 = vmatprep.subr.bf16.mxu0 0
  %6238 = vmatpush2.bf16.msra.mxu0 0
  %6239 = vmatprep.subr.bf16.mxu0 0
  %6240 = vmatpush2.bf16.msra.mxu0 0
  %6241 = vmatprep.subr.bf16.mxu0 0
  %6242 = vmatpush2.bf16.msra.mxu0 0
  %6243 = vmatprep.subr.bf16.mxu0 0
  %6244 = vmatpush2.bf16.msra.mxu0 0
  %6245 = vmatprep.mubr.bf16.mxu0 0
  %6246 = vmatmul.mubr.bf16.gmra.mxu0 %v6110
  %v6247 = vpop.f32.mrf.mxu0
  %v6248 = vadd.f32 %v6199, %v6247
  %v6249 = vpop.f32.mrf.mxu0
  %v6250 = vpop.f32.mrf.mxu0
  %v6251 = vadd.f32 %v6202, %v6250
  %v6252 = vpop.f32.mrf.mxu0
  %6253 = vmatprep.mubr.bf16.mxu0 0
  %6254 = vmatmul.mubr.bf16.gmra.mxu0 %v6113
  %v6255 = vpop.f32.mrf.mxu0
  %v6256 = vadd.f32 %v6207, %v6255
  %v6257 = vpop.f32.mrf.mxu0
  %v6258 = vpop.f32.mrf.mxu0
  %v6259 = vadd.f32 %v6210, %v6258
  %v6260 = vpop.f32.mrf.mxu0
  %6261 = vdwg.mxu0
  %v6262 = vld [vmem:[%s8] sm:$0x1]
  %v6264 = vlaneseq
  %v6265 = vshrl.u32 %v6264, 7
  %v6266 = vsub.s32 0, %v6265
  %v6267 = vrot.slane %v6262, %v6266
  %v6269 = vmul.f32 %v6248, %v6267
  %v6270 = vmul.f32 %v6251, %v6267
  %v6271 = vmul.f32 %v6256, %v6267
  %v6272 = vmul.f32 %v6259, %v6267
  %v6273 = vld [vmem:[%s9] sm:$0x1]
  %v6275 = vlaneseq
  %v6276 = vshrl.u32 %v6275, 7
  %v6277 = vsub.s32 0, %v6276
  %v6278 = vrot.slane %v6273, %v6277
  %v6280 = vadd.f32 %v6269, %v6278
  %v6281 = vadd.f32 %v6270, %v6278
  %v6282 = vadd.f32 %v6271, %v6278
  %v6283 = vadd.f32 %v6272, %v6278
  %v6284 = vmax.f32 %v6280, 0.0
  %v6285 = vmax.f32 %v6281, 0.0
  %v6286 = vmax.f32 %v6282, 0.0
  %v6287 = vmax.f32 %v6283, 0.0
  %v6288 = vrot.slane %v6284, 1
  %v6289 = vrot.slane %v6285, 1
  %v6290 = vrot.slane %v6286, 1
  %v6291 = vrot.slane %v6287, 1
  %v6292 = vsel %vm1120, %v6290, %v6291
  %v6293 = vsel %vm1120, %v6289, %v6290
  %v6294 = vsel %vm1120, %v6288, %v6289
  %v6295 = vsel %vm1120, %v6291, %v6288
  %v6296 = vmax.f32 %v6284, %v6294
  %v6297 = vmax.f32 %v6285, %v6293
  %v6298 = vmax.f32 %v6286, %v6292
  %v6299 = vmax.f32 %v6287, %v6295
  %v6300 = vrot.slane %v6296, 4
  %v6301 = vrot.slane %v6297, 4
  %v6302 = vrot.slane %v6298, 4
  %v6303 = vrot.slane %v6299, 4
  %v6304 = vsel %vm5679, %v6302, %v6303
  %v6305 = vsel %vm5679, %v6301, %v6302
  %v6306 = vsel %vm5679, %v6300, %v6301
  %v6307 = vsel %vm5679, %v6303, %v6300
  %v6308 = vmax.f32 %v6296, %v6306
  %v6309 = vmax.f32 %v6297, %v6305
  %v6310 = vmax.f32 %v6298, %v6304
  %v6311 = vmax.f32 %v6299, %v6307
  %v6312 = vld [vmem:[%s12] sm:$0x1]
  %v6313 = vpack.c.bf16 %v6309, %v6308
  %v6314 = vpack.c.bf16 %v6311, %v6310
  %v6316 = vsel %vm4913, %v6312, 0
  %6318 = vmatprep.subr.bf16.mxu0 0
  %6319 = vmatpush1.bf16.msra.mxu0 0
  %6320 = vmatprep.subr.bf16.mxu0 0
  %6321 = vmatpush1.bf16.msra.mxu0 0
  %6322 = vmatprep.subr.bf16.mxu0 0
  %6323 = vmatpush1.bf16.msra.mxu0 0
  %6324 = vmatprep.subr.bf16.mxu0 0
  %6325 = vmatpush1.bf16.msra.mxu0 0
  %6326 = vmatprep.subr.bf16.mxu0 0
  %6327 = vmatpush1.bf16.msra.mxu0 0
  %6328 = vmatprep.subr.bf16.mxu0 0
  %6329 = vmatpush1.bf16.msra.mxu0 0
  %6330 = vmatprep.subr.bf16.mxu0 0
  %6331 = vmatpush1.bf16.msra.mxu0 %v6314
  %6332 = vmatprep.subr.bf16.mxu0 0
  %6333 = vmatpush1.bf16.msra.mxu0 %v6313
  %6334 = vmatprep.subr.bf16.mxu0 0
  %6335 = vmatpush2.bf16.msra.mxu0 0
  %6336 = vmatprep.subr.bf16.mxu0 0
  %6337 = vmatpush2.bf16.msra.mxu0 0
  %6338 = vmatprep.subr.bf16.mxu0 0
  %6339 = vmatpush2.bf16.msra.mxu0 0
  %6340 = vmatprep.subr.bf16.mxu0 0
  %6341 = vmatpush2.bf16.msra.mxu0 0
  %6342 = vmatprep.subr.bf16.mxu0 0
  %6343 = vmatpush2.bf16.msra.mxu0 0
  %6344 = vmatprep.subr.bf16.mxu0 0
  %6345 = vmatpush2.bf16.msra.mxu0 0
  %6346 = vmatprep.subr.bf16.mxu0 0
  %6347 = vmatpush2.bf16.msra.mxu0 0
  %6348 = vmatprep.subr.bf16.mxu0 0
  %6349 = vmatpush2.bf16.msra.mxu0 0
  %6350 = vmatprep.mubr.bf16.mxu0 0
  %6351 = vmatmul.mubr.bf16.gmra.mxu0 %v6316
  %v6352 = vpop.f32.mrf.mxu0
  %v6353 = vadd.f32 0.0, %v6352
  %v6354 = vpop.f32.mrf.mxu0
  %v6355 = vpop.f32.mrf.mxu0
  %v6356 = vpop.f32.mrf.mxu0
  %6357 = vdwg.mxu0
  %v6358 = vpack.c.bf16 %v6353, %v6353
  %v6359 = vld [vmem:[%s13] sm:$0xf]
  %v6360 = vld [vmem:[%s13 + $0x4] sm:$0xf]
  %v6361 = vld [vmem:[%s13 + $0x8] sm:$0xf]
  %v6362 = vld [vmem:[%s13 + $0xc] sm:$0xf]
  %v6363 = vld [vmem:[%s13 + $0x10] sm:$0xf]
  %v6364 = vld [vmem:[%s13 + $0x14] sm:$0xf]
  %v6365 = vld [vmem:[%s13 + $0x18] sm:$0xf]
  %v6366 = vld [vmem:[%s13 + $0x1c] sm:$0xf]
  %v6367 = vld [vmem:[%s13 + $0x20] sm:$0xf]
  %v6368 = vld [vmem:[%s13 + $0x24] sm:$0xf]
  %v6369 = vld [vmem:[%s13 + $0x28] sm:$0xf]
  %v6370 = vld [vmem:[%s13 + $0x2c] sm:$0xf]
  %v6371 = vld [vmem:[%s13 + $0x30] sm:$0xf]
  %v6372 = vld [vmem:[%s13 + $0x34] sm:$0xf]
  %v6373 = vld [vmem:[%s13 + $0x38] sm:$0xf]
  %v6374 = vld [vmem:[%s13 + $0x3c] sm:$0xf]
  %v6391 = vunpack.c.l.b16 %v6359
  %v6392 = vunpack.c.l.b16 %v6360
  %v6393 = vunpack.c.l.b16 %v6361
  %v6394 = vunpack.c.l.b16 %v6362
  %v6395 = vunpack.c.l.b16 %v6363
  %v6396 = vunpack.c.l.b16 %v6364
  %v6397 = vunpack.c.l.b16 %v6365
  %v6398 = vunpack.c.l.b16 %v6366
  %v6399 = vunpack.c.l.b16 %v6367
  %v6400 = vunpack.c.l.b16 %v6368
  %v6401 = vunpack.c.l.b16 %v6369
  %v6402 = vunpack.c.l.b16 %v6370
  %v6403 = vunpack.c.l.b16 %v6371
  %v6404 = vunpack.c.l.b16 %v6372
  %v6405 = vunpack.c.l.b16 %v6373
  %v6406 = vunpack.c.l.b16 %v6374
  %v6407 = vpack.c.b16 %v6392, %v6391
  %v6408 = vpack.c.b16 %v6394, %v6393
  %v6409 = vpack.c.b16 %v6396, %v6395
  %v6410 = vpack.c.b16 %v6398, %v6397
  %v6411 = vpack.c.b16 %v6400, %v6399
  %v6412 = vpack.c.b16 %v6402, %v6401
  %v6413 = vpack.c.b16 %v6404, %v6403
  %v6414 = vpack.c.b16 %v6406, %v6405
  %6423 = vmatprep.subr.bf16.mxu0 0
  %6424 = vmatpush1.bf16.msra.mxu0 %v6414
  %6425 = vmatprep.subr.bf16.mxu0 0
  %6426 = vmatpush1.bf16.msra.mxu0 %v6413
  %6427 = vmatprep.subr.bf16.mxu0 0
  %6428 = vmatpush1.bf16.msra.mxu0 %v6412
  %6429 = vmatprep.subr.bf16.mxu0 0
  %6430 = vmatpush1.bf16.msra.mxu0 %v6411
  %6431 = vmatprep.subr.bf16.mxu0 0
  %6432 = vmatpush1.bf16.msra.mxu0 %v6410
  %6433 = vmatprep.subr.bf16.mxu0 0
  %6434 = vmatpush1.bf16.msra.mxu0 %v6409
  %6435 = vmatprep.subr.bf16.mxu0 0
  %6436 = vmatpush1.bf16.msra.mxu0 %v6408
  %6437 = vmatprep.subr.bf16.mxu0 0
  %6438 = vmatpush1.bf16.msra.mxu0 %v6407
  %6439 = vmatprep.subr.bf16.mxu0 0
  %6440 = vmatpush2.bf16.msra.mxu0 0
  %6441 = vmatprep.subr.bf16.mxu0 0
  %6442 = vmatpush2.bf16.msra.mxu0 0
  %6443 = vmatprep.subr.bf16.mxu0 0
  %6444 = vmatpush2.bf16.msra.mxu0 0
  %6445 = vmatprep.subr.bf16.mxu0 0
  %6446 = vmatpush2.bf16.msra.mxu0 0
  %6447 = vmatprep.subr.bf16.mxu0 0
  %6448 = vmatpush2.bf16.msra.mxu0 0
  %6449 = vmatprep.subr.bf16.mxu0 0
  %6450 = vmatpush2.bf16.msra.mxu0 0
  %6451 = vmatprep.subr.bf16.mxu0 0
  %6452 = vmatpush2.bf16.msra.mxu0 0
  %6453 = vmatprep.subr.bf16.mxu0 0
  %6454 = vmatpush2.bf16.msra.mxu0 0
  %6455 = vmatprep.mubr.bf16.mxu0 0
  %6456 = vmatmul.mubr.bf16.gmra.mxu0 %v6358
  %v6457 = vpop.f32.mrf.mxu0
  %v6458 = vadd.f32 0.0, %v6457
  %v6459 = vpop.f32.mrf.mxu0
  %v6460 = vpop.f32.mrf.mxu0
  %v6461 = vpop.f32.mrf.mxu0
  %6462 = vdwg.mxu0
  %v6463 = vld [vmem:[%s14] sm:$0x1]
  %v6465 = vlaneseq
  %v6466 = vshrl.u32 %v6465, 7
  %v6467 = vsub.s32 0, %v6466
  %v6468 = vrot.slane %v6463, %v6467
  %v6470 = vmul.f32 %v6458, %v6468
  %v6471 = vld [vmem:[%s15] sm:$0x1]
  %v6473 = vlaneseq
  %v6474 = vshrl.u32 %v6473, 7
  %v6475 = vsub.s32 0, %v6474
  %v6476 = vrot.slane %v6471, %v6475
  %v6478 = vadd.f32 %v6470, %v6476
  %v6479 = vmax.f32 %v6478, 0.0
  %v6480 = vld [vmem:[%s16] sm:$0x1]
  %v6482 = vlaneseq
  %v6483 = vshrl.u32 %v6482, 7
  %v6484 = vsub.s32 0, %v6483
  %v6485 = vrot.slane %v6480, %v6484
  %v6487 = vmul.f32 %v6479, %v6485
  %vm6488 = vcmask 517120
  %v6489 = vsel %vm6488, %v6487, 0.0
  %6490 = vadd.xlane.f32.xlu0 %v6489
  %v6491 = vpop.xlane.xlu0 %6490
  %v6492 = vld [vmem:[#allocation2] sm:$0x1]
  %v6494 = vlaneseq
  %v6495 = vshrl.u32 %v6494, 7
  %v6496 = vsub.s32 0, %v6495
  %v6497 = vrot.slane %v6492, %v6496
  %v6499 = vadd.f32 %v6491, %v6497
  %v6500 = vsub.f32 0.0, %v6499
  %v6501 = vmul.f32 %v6500, 1.442695
  %v6502 = vpow.pop %v6501
  %v6503 = vadd.f32 %v6502, 1.0
  %v6504 = vrcp.pop %v6503
  %v6505 = vmul.f32 1.0, %v6504
  %vm6506 = vcmask 1024
  %6507 = vst.msk [vmem:[%s18] sm:$0x3] %vm6506, %v6505
  // Predicated region
  $region74: #{forward.1} parent=0 // pred_check
    _
  $region75: #{forward.1} parent=0 // pred_check_branch
    %6509 = sbr.rel (0) target = $region77
  $region76: #{forward.1} parent=0 // pred_region
    _
  $region77: #{forward.1} parent=0 // pred_fallthru
    _
  // Predicated region
  $region78: #{forward.1} parent=0 // pred_check
    _
  $region79: #{forward.1} parent=0 // pred_check_branch
    %6511 = sbr.rel (0) target = $region81
  $region80: #{forward.1} parent=0 // pred_region
    _
  $region81: #{forward.1} parent=0 // pred_fallthru
    _

</llo_original>
